<compile_context>
chip_gen: v7x
topology: tpu7x:2x2x1
jax: 0.10.0
libtpu: 0.0.40
codegen_flags: <defaults>
</compile_context>

<pallas_src>
import math
import functools

import jax
import jax.numpy as jnp
from jax.experimental import pallas as pl
from jax.experimental.pallas import tpu as pltpu


def _flash_kernel(qi_ref, ki_ref, q_ref, k_ref, v_ref, o_ref,
                  m_sc, l_sc, acc_sc, *, scale, tq, tk):
    t = pl.program_id(1)
    qi = qi_ref[t]
    ki = ki_ref[t]
    kv_per_q = tq // tk

    # First kv tile of this q row: reset the online-softmax state.
    @pl.when(ki == 0)
    def _():
        m_sc[...] = jnp.full_like(m_sc, -jnp.inf)
        l_sc[...] = jnp.zeros_like(l_sc)
        acc_sc[...] = jnp.zeros_like(acc_sc)

    def step(apply_mask):
        # Keep inputs in their native (bf16) dtype for the MXU; accumulate f32.
        q = q_ref[0] * scale                              # (tq, D)
        k = k_ref[0]                                      # (tk, D)
        v = v_ref[0]                                      # (tk, D)

        s = jnp.dot(q, k.T, preferred_element_type=jnp.float32)  # (tq, tk) f32
        if apply_mask:
            q_pos = qi * tq + jax.lax.broadcasted_iota(jnp.int32, (tq, tk), 0)
            k_pos = ki * tk + jax.lax.broadcasted_iota(jnp.int32, (tq, tk), 1)
            s = jnp.where(q_pos >= k_pos, s, -jnp.inf)

        m_prev = m_sc[...]                                # (tq, 1) f32
        m_new = jnp.maximum(m_prev, s.max(axis=-1, keepdims=True))
        alpha = jnp.exp(m_prev - m_new)
        p = jnp.exp(s - m_new)

        l_sc[...] = alpha * l_sc[...] + p.sum(axis=-1, keepdims=True)
        acc_sc[...] = alpha * acc_sc[...] + jnp.dot(
            p.astype(v.dtype), v, preferred_element_type=jnp.float32)
        m_sc[...] = m_new

    # Only tiles touching the causal diagonal need the iota mask; tiles
    # strictly below it run the cheap unmasked path. (Upper-triangular tiles
    # never appear in the schedule at all.)
    needs_mask = ki >= qi * kv_per_q

    @pl.when(needs_mask)
    def _():
        step(apply_mask=True)

    @pl.when(jnp.logical_not(needs_mask))
    def _():
        step(apply_mask=False)

    # Last kv tile of this q row: normalize and emit.
    @pl.when(ki == (qi + 1) * kv_per_q - 1)
    def _():
        inv_l = pl.reciprocal(l_sc[...], approx=True)
        o_ref[0] = (acc_sc[...] * inv_l).astype(o_ref.dtype)


def zigzag_attn(q, k, v, *, tq=256, tk=256):
    """Causal flash attention. q, k, v: (B, S, H, D) -> (B, S, H, D)."""
    B, S, H, D = q.shape
    assert k.shape == (B, S, H, D) and v.shape == (B, S, H, D)
    tq = min(tq, S)
    tk = min(tk, tq)
    assert S % tq == 0 and S % tk == 0 and tq % tk == 0
    nq = S // tq
    kv_per_q = tq // tk
    scale = 1.0 / math.sqrt(D)

    # Flattened lower-triangular (qi, ki) schedule: only causal kv tiles are
    # ever fetched/iterated (~2x fewer grid steps and KV DMAs vs a full grid).
    qi_list, ki_list = [], []
    for qi in range(nq):
        for ki in range((qi + 1) * kv_per_q):
            qi_list.append(qi)
            ki_list.append(ki)
    qi_map = jnp.asarray(qi_list, dtype=jnp.int32)
    ki_map = jnp.asarray(ki_list, dtype=jnp.int32)
    T = len(qi_list)

    # Layout plumbing to (B*H, S, D). TODO(synk): could be folded into the
    # BlockSpecs (4-D blocks on (B,S,H,D)) to avoid the extra HBM copies, at
    # the cost of a size-1 sublane block; kept explicit for robust layout.
    def to_bh(x):
        return jnp.transpose(x, (0, 2, 1, 3)).reshape(B * H, S, D)

    qt, kt, vt = to_bh(q), to_bh(k), to_bh(v)

    kernel = functools.partial(_flash_kernel, scale=scale, tq=tq, tk=tk)

    out = pl.pallas_call(
        kernel,
        out_shape=jax.ShapeDtypeStruct((B * H, S, D), q.dtype),
        grid_spec=pltpu.PrefetchScalarGridSpec(
            num_scalar_prefetch=2,
            grid=(B * H, T),
            in_specs=[
                pl.BlockSpec((1, tq, D), lambda bh, t, qm, km: (bh, qm[t], 0)),
                pl.BlockSpec((1, tk, D), lambda bh, t, qm, km: (bh, km[t], 0)),
                pl.BlockSpec((1, tk, D), lambda bh, t, qm, km: (bh, km[t], 0)),
            ],
            out_specs=pl.BlockSpec(
                (1, tq, D), lambda bh, t, qm, km: (bh, qm[t], 0)),
            scratch_shapes=[
                pltpu.VMEM((tq, 1), jnp.float32),   # running max m_i
                pltpu.VMEM((tq, 1), jnp.float32),   # running denom l_i
                pltpu.VMEM((tq, D), jnp.float32),   # output accumulator
            ],
        ),
        compiler_params=pltpu.CompilerParams(
            dimension_semantics=("parallel", "arbitrary")),
    )(qi_map, ki_map, qt, kt, vt)

    return jnp.transpose(out.reshape(B, H, S, D), (0, 2, 1, 3))


def _reference_attn(q, k, v):
    B, S, H, D = q.shape
    scale = 1.0 / math.sqrt(D)
    qf = jnp.transpose(q, (0, 2, 1, 3)).astype(jnp.float32)
    kf = jnp.transpose(k, (0, 2, 1, 3)).astype(jnp.float32)
    vf = jnp.transpose(v, (0, 2, 1, 3)).astype(jnp.float32)
    s = jnp.einsum("bhqd,bhkd->bhqk", qf, kf) * scale
    mask = jnp.tril(jnp.ones((S, S), dtype=bool))
    s = jnp.where(mask, s, -jnp.inf)
    p = jax.nn.softmax(s, axis=-1)
    o = jnp.einsum("bhqk,bhkd->bhqd", p, vf)
    return jnp.transpose(o, (0, 2, 1, 3)).astype(q.dtype)


if __name__ == "__main__":
    B, S, H, D = 2, 512, 4, 64   # S=512 exercises the triangular schedule
    key = jax.random.PRNGKey(0)
    kq, kk, kv = jax.random.split(key, 3)
    q = jax.random.normal(kq, (B, S, H, D), dtype=jnp.bfloat16)
    k = jax.random.normal(kk, (B, S, H, D), dtype=jnp.bfloat16)
    v = jax.random.normal(kv, (B, S, H, D), dtype=jnp.bfloat16)

    out = zigzag_attn(q, k, v)
    jax.block_until_ready(out)

    ref = _reference_attn(q, k, v)
    err = jnp.max(jnp.abs(out.astype(jnp.float32) - ref.astype(jnp.float32)))
    assert out.shape == (B, S, H, D) and out.dtype == q.dtype
    assert float(err) < 5e-2, f"max abs err {float(err)}"

    print("KERNEL_OK")
</pallas_src>

<mosaic_0001>
module attributes {stable_mosaic.version = 11 : i64} {
  func.func @_flash_kernel(%arg0: i32, %arg1: i32, %arg2: memref<3xi32, #tpu.memory_space<smem>>, %arg3: memref<3xi32, #tpu.memory_space<smem>>, %arg4: memref<1x256x64xbf16, #tpu.memory_space<vmem>>, %arg5: memref<1x256x64xbf16, #tpu.memory_space<vmem>>, %arg6: memref<1x256x64xbf16, #tpu.memory_space<vmem>>, %arg7: memref<1x256x64xbf16, #tpu.memory_space<vmem>>, %arg8: memref<256x1xf32, #tpu.memory_space<vmem>>, %arg9: memref<256x1xf32, #tpu.memory_space<vmem>>, %arg10: memref<256x64xf32, #tpu.memory_space<vmem>>) attributes {dimension_semantics = [#tpu.dimension_semantics<parallel>, #tpu.dimension_semantics<arbitrary>], iteration_bounds = array<i64: 8, 3>, scalar_prefetch = 2 : i64, scratch_operands = 3 : i64, tpu.core_type = #tpu.core_type<tc>, window_params = [{transform_indices = @transform_0, window_bounds = array<i64: 1, 256, 64>}, {transform_indices = @transform_1, window_bounds = array<i64: 1, 256, 64>}, {transform_indices = @transform_2, window_bounds = array<i64: 1, 256, 64>}, {transform_indices = @transform_3, window_bounds = array<i64: 1, 256, 64>}]} {
    %0 = arith.index_cast %arg1 : i32 to index
    %1 = memref.load %arg2[%0] : memref<3xi32, #tpu.memory_space<smem>>
    %2 = arith.index_cast %arg1 : i32 to index
    %3 = memref.load %arg3[%2] : memref<3xi32, #tpu.memory_space<smem>>
    %c0_i32 = arith.constant 0 : i32
    %4 = arith.cmpi eq, %3, %c0_i32 : i32
    %5 = arith.extui %4 : i1 to i32
    %c0_i32_0 = arith.constant 0 : i32
    %6 = arith.cmpi ne, %5, %c0_i32_0 : i32
    scf.if %6 {
      %cst = arith.constant 0xFF800000 : f32
      %20 = vector.broadcast %cst : f32 to vector<256x1xf32>
      %c0 = arith.constant 0 : index
      %c0_7 = arith.constant 0 : index
      %21 = vector.load %arg8[%c0, %c0_7] : memref<256x1xf32, #tpu.memory_space<vmem>>, vector<256x1xf32>
      tpu.vector_store %arg8[%c0, %c0_7], %20 {strides = array<i32>} : memref<256x1xf32, #tpu.memory_space<vmem>>, vector<256x1xf32>,
      %cst_8 = arith.constant 0.000000e+00 : f32
      %22 = vector.broadcast %cst_8 : f32 to vector<256x1xf32>
      %c0_9 = arith.constant 0 : index
      %c0_10 = arith.constant 0 : index
      %23 = vector.load %arg9[%c0_9, %c0_10] : memref<256x1xf32, #tpu.memory_space<vmem>>, vector<256x1xf32>
      tpu.vector_store %arg9[%c0_9, %c0_10], %22 {strides = array<i32>} : memref<256x1xf32, #tpu.memory_space<vmem>>, vector<256x1xf32>,
      %cst_11 = arith.constant 0.000000e+00 : f32
      %24 = vector.broadcast %cst_11 : f32 to vector<256x64xf32>
      %c0_12 = arith.constant 0 : index
      %c0_13 = arith.constant 0 : index
      %25 = vector.load %arg10[%c0_12, %c0_13] : memref<256x64xf32, #tpu.memory_space<vmem>>, vector<256x64xf32>
      tpu.vector_store %arg10[%c0_12, %c0_13], %24 {strides = array<i32>} : memref<256x64xf32, #tpu.memory_space<vmem>>, vector<256x64xf32>,
    } else {
    }
    %c1_i32 = arith.constant 1 : i32
    %7 = arith.muli %1, %c1_i32 : i32
    %8 = arith.cmpi sge, %3, %7 : i32
    %9 = arith.extui %8 : i1 to i32
    %c0_i32_1 = arith.constant 0 : i32
    %10 = arith.cmpi ne, %9, %c0_i32_1 : i32
    scf.if %10 {
      %c0 = arith.constant 0 : index
      %c0_7 = arith.constant 0 : index
      %c0_8 = arith.constant 0 : index
      %20 = vector.load %arg4[%c0, %c0_7, %c0_8] : memref<1x256x64xbf16, #tpu.memory_space<vmem>>, vector<1x256x64xbf16>
      %21 = vector.shape_cast %20 : vector<1x256x64xbf16> to vector<256x64xbf16>
      %cst = arith.constant 1.250000e-01 : bf16
      %22 = vector.broadcast %cst : bf16 to vector<256x64xbf16>
      %23 = arith.mulf %21, %22 : vector<256x64xbf16>
      %c0_9 = arith.constant 0 : index
      %c0_10 = arith.constant 0 : index
      %c0_11 = arith.constant 0 : index
      %24 = vector.load %arg5[%c0_9, %c0_10, %c0_11] : memref<1x256x64xbf16, #tpu.memory_space<vmem>>, vector<1x256x64xbf16>
      %25 = vector.shape_cast %24 : vector<1x256x64xbf16> to vector<256x64xbf16>
      %c0_12 = arith.constant 0 : index
      %c0_13 = arith.constant 0 : index
      %c0_14 = arith.constant 0 : index
      %26 = vector.load %arg6[%c0_12, %c0_13, %c0_14] : memref<1x256x64xbf16, #tpu.memory_space<vmem>>, vector<1x256x64xbf16>
      %27 = vector.shape_cast %26 : vector<1x256x64xbf16> to vector<256x64xbf16>
      %28 = tpu.transpose %25, [1, 0] : vector<256x64xbf16> -> vector<64x256xbf16>
      %cst_15 = arith.constant dense<0.000000e+00> : vector<256x256xf32>
      %29 = tpu.matmul %23, %28, %cst_15 {dimension_numbers = #tpu.dot_dimension_numbers<[1], [0], [0], [1], [0, 0, 1, 1], [], []>} : vector<256x64xbf16>, vector<64x256xbf16>, vector<256x256xf32> -> vector<256x256xf32>
      %c256_i32 = arith.constant 256 : i32
      %30 = arith.muli %1, %c256_i32 : i32
      %31 = tpu.iota {dimensions = array<i32: 0>} : vector<256x256xi32>
      %32 = vector.broadcast %30 : i32 to vector<256x256xi32>
      %33 = arith.addi %32, %31 : vector<256x256xi32>
      %c256_i32_16 = arith.constant 256 : i32
      %34 = arith.muli %3, %c256_i32_16 : i32
      %35 = tpu.iota {dimensions = array<i32: 1>} : vector<256x256xi32>
      %36 = vector.broadcast %34 : i32 to vector<256x256xi32>
      %37 = arith.addi %36, %35 : vector<256x256xi32>
      %38 = arith.cmpi sge, %33, %37 : vector<256x256xi32>
      %cst_17 = arith.constant 0xFF800000 : f32
      %39 = vector.broadcast %cst_17 : f32 to vector<256x256xf32>
      %40 = arith.select %38, %29, %39 : vector<256x256xi1>, vector<256x256xf32>
      %c0_18 = arith.constant 0 : index
      %c0_19 = arith.constant 0 : index
      %41 = vector.load %arg8[%c0_18, %c0_19] : memref<256x1xf32, #tpu.memory_space<vmem>>, vector<256x1xf32>
      %cst_20 = arith.constant dense<0xFF800000> : vector<256xf32>
      %42 = vector.multi_reduction <maximumf>, %40, %cst_20 [1] : vector<256x256xf32> to vector<256xf32>
      %43 = vector.shape_cast %42 : vector<256xf32> to vector<256x1xf32>
      %44 = arith.maximumf %41, %43 : vector<256x1xf32>
      %45 = arith.subf %41, %44 : vector<256x1xf32>
      %46 = math.exp %45 : vector<256x1xf32>
      %47 = vector.broadcast %44 : vector<256x1xf32> to vector<256x256xf32>
      %48 = arith.subf %40, %47 : vector<256x256xf32>
      %49 = math.exp %48 : vector<256x256xf32>
      %c0_21 = arith.constant 0 : index
      %c0_22 = arith.constant 0 : index
      %50 = vector.load %arg9[%c0_21, %c0_22] : memref<256x1xf32, #tpu.memory_space<vmem>>, vector<256x1xf32>
      %51 = arith.mulf %46, %50 : vector<256x1xf32>
      %cst_23 = arith.constant dense<0.000000e+00> : vector<256xf32>
      %52 = vector.multi_reduction <add>, %49, %cst_23 [1] : vector<256x256xf32> to vector<256xf32>
      %53 = vector.shape_cast %52 : vector<256xf32> to vector<256x1xf32>
      %54 = arith.addf %51, %53 : vector<256x1xf32>
      %c0_24 = arith.constant 0 : index
      %c0_25 = arith.constant 0 : index
      %55 = vector.load %arg9[%c0_24, %c0_25] : memref<256x1xf32, #tpu.memory_space<vmem>>, vector<256x1xf32>
      tpu.vector_store %arg9[%c0_24, %c0_25], %54 {strides = array<i32>} : memref<256x1xf32, #tpu.memory_space<vmem>>, vector<256x1xf32>,
      %c0_26 = arith.constant 0 : index
      %c0_27 = arith.constant 0 : index
      %56 = vector.load %arg10[%c0_26, %c0_27] : memref<256x64xf32, #tpu.memory_space<vmem>>, vector<256x64xf32>
      %57 = vector.broadcast %46 : vector<256x1xf32> to vector<256x64xf32>
      %58 = arith.mulf %57, %56 : vector<256x64xf32>
      %59 = arith.truncf %49 : vector<256x256xf32> to vector<256x256xbf16>
      %cst_28 = arith.constant dense<0.000000e+00> : vector<256x64xf32>
      %60 = tpu.matmul %59, %27, %cst_28 {dimension_numbers = #tpu.dot_dimension_numbers<[1], [0], [0], [1], [0, 0, 1, 1], [], []>} : vector<256x256xbf16>, vector<256x64xbf16>, vector<256x64xf32> -> vector<256x64xf32>
      %61 = arith.addf %58, %60 : vector<256x64xf32>
      %c0_29 = arith.constant 0 : index
      %c0_30 = arith.constant 0 : index
      %62 = vector.load %arg10[%c0_29, %c0_30] : memref<256x64xf32, #tpu.memory_space<vmem>>, vector<256x64xf32>
      tpu.vector_store %arg10[%c0_29, %c0_30], %61 {strides = array<i32>} : memref<256x64xf32, #tpu.memory_space<vmem>>, vector<256x64xf32>,
      %c0_31 = arith.constant 0 : index
      %c0_32 = arith.constant 0 : index
      %63 = vector.load %arg8[%c0_31, %c0_32] : memref<256x1xf32, #tpu.memory_space<vmem>>, vector<256x1xf32>
      tpu.vector_store %arg8[%c0_31, %c0_32], %44 {strides = array<i32>} : memref<256x1xf32, #tpu.memory_space<vmem>>, vector<256x1xf32>,
    } else {
    }
    %true = arith.constant true
    %11 = arith.xori %8, %true : i1
    %12 = arith.extui %11 : i1 to i32
    %c0_i32_2 = arith.constant 0 : i32
    %13 = arith.cmpi ne, %12, %c0_i32_2 : i32
    scf.if %13 {
      %c0 = arith.constant 0 : index
      %c0_7 = arith.constant 0 : index
      %c0_8 = arith.constant 0 : index
      %20 = vector.load %arg4[%c0, %c0_7, %c0_8] : memref<1x256x64xbf16, #tpu.memory_space<vmem>>, vector<1x256x64xbf16>
      %21 = vector.shape_cast %20 : vector<1x256x64xbf16> to vector<256x64xbf16>
      %cst = arith.constant 1.250000e-01 : bf16
      %22 = vector.broadcast %cst : bf16 to vector<256x64xbf16>
      %23 = arith.mulf %21, %22 : vector<256x64xbf16>
      %c0_9 = arith.constant 0 : index
      %c0_10 = arith.constant 0 : index
      %c0_11 = arith.constant 0 : index
      %24 = vector.load %arg5[%c0_9, %c0_10, %c0_11] : memref<1x256x64xbf16, #tpu.memory_space<vmem>>, vector<1x256x64xbf16>
      %25 = vector.shape_cast %24 : vector<1x256x64xbf16> to vector<256x64xbf16>
      %c0_12 = arith.constant 0 : index
      %c0_13 = arith.constant 0 : index
      %c0_14 = arith.constant 0 : index
      %26 = vector.load %arg6[%c0_12, %c0_13, %c0_14] : memref<1x256x64xbf16, #tpu.memory_space<vmem>>, vector<1x256x64xbf16>
      %27 = vector.shape_cast %26 : vector<1x256x64xbf16> to vector<256x64xbf16>
      %28 = tpu.transpose %25, [1, 0] : vector<256x64xbf16> -> vector<64x256xbf16>
      %cst_15 = arith.constant dense<0.000000e+00> : vector<256x256xf32>
      %29 = tpu.matmul %23, %28, %cst_15 {dimension_numbers = #tpu.dot_dimension_numbers<[1], [0], [0], [1], [0, 0, 1, 1], [], []>} : vector<256x64xbf16>, vector<64x256xbf16>, vector<256x256xf32> -> vector<256x256xf32>
      %c0_16 = arith.constant 0 : index
      %c0_17 = arith.constant 0 : index
      %30 = vector.load %arg8[%c0_16, %c0_17] : memref<256x1xf32, #tpu.memory_space<vmem>>, vector<256x1xf32>
      %cst_18 = arith.constant dense<0xFF800000> : vector<256xf32>
      %31 = vector.multi_reduction <maximumf>, %29, %cst_18 [1] : vector<256x256xf32> to vector<256xf32>
      %32 = vector.shape_cast %31 : vector<256xf32> to vector<256x1xf32>
      %33 = arith.maximumf %30, %32 : vector<256x1xf32>
      %34 = arith.subf %30, %33 : vector<256x1xf32>
      %35 = math.exp %34 : vector<256x1xf32>
      %36 = vector.broadcast %33 : vector<256x1xf32> to vector<256x256xf32>
      %37 = arith.subf %29, %36 : vector<256x256xf32>
      %38 = math.exp %37 : vector<256x256xf32>
      %c0_19 = arith.constant 0 : index
      %c0_20 = arith.constant 0 : index
      %39 = vector.load %arg9[%c0_19, %c0_20] : memref<256x1xf32, #tpu.memory_space<vmem>>, vector<256x1xf32>
      %40 = arith.mulf %35, %39 : vector<256x1xf32>
      %cst_21 = arith.constant dense<0.000000e+00> : vector<256xf32>
      %41 = vector.multi_reduction <add>, %38, %cst_21 [1] : vector<256x256xf32> to vector<256xf32>
      %42 = vector.shape_cast %41 : vector<256xf32> to vector<256x1xf32>
      %43 = arith.addf %40, %42 : vector<256x1xf32>
      %c0_22 = arith.constant 0 : index
      %c0_23 = arith.constant 0 : index
      %44 = vector.load %arg9[%c0_22, %c0_23] : memref<256x1xf32, #tpu.memory_space<vmem>>, vector<256x1xf32>
      tpu.vector_store %arg9[%c0_22, %c0_23], %43 {strides = array<i32>} : memref<256x1xf32, #tpu.memory_space<vmem>>, vector<256x1xf32>,
      %c0_24 = arith.constant 0 : index
      %c0_25 = arith.constant 0 : index
      %45 = vector.load %arg10[%c0_24, %c0_25] : memref<256x64xf32, #tpu.memory_space<vmem>>, vector<256x64xf32>
      %46 = vector.broadcast %35 : vector<256x1xf32> to vector<256x64xf32>
      %47 = arith.mulf %46, %45 : vector<256x64xf32>
      %48 = arith.truncf %38 : vector<256x256xf32> to vector<256x256xbf16>
      %cst_26 = arith.constant dense<0.000000e+00> : vector<256x64xf32>
      %49 = tpu.matmul %48, %27, %cst_26 {dimension_numbers = #tpu.dot_dimension_numbers<[1], [0], [0], [1], [0, 0, 1, 1], [], []>} : vector<256x256xbf16>, vector<256x64xbf16>, vector<256x64xf32> -> vector<256x64xf32>
      %50 = arith.addf %47, %49 : vector<256x64xf32>
      %c0_27 = arith.constant 0 : index
      %c0_28 = arith.constant 0 : index
      %51 = vector.load %arg10[%c0_27, %c0_28] : memref<256x64xf32, #tpu.memory_space<vmem>>, vector<256x64xf32>
      tpu.vector_store %arg10[%c0_27, %c0_28], %50 {strides = array<i32>} : memref<256x64xf32, #tpu.memory_space<vmem>>, vector<256x64xf32>,
      %c0_29 = arith.constant 0 : index
      %c0_30 = arith.constant 0 : index
      %52 = vector.load %arg8[%c0_29, %c0_30] : memref<256x1xf32, #tpu.memory_space<vmem>>, vector<256x1xf32>
      tpu.vector_store %arg8[%c0_29, %c0_30], %33 {strides = array<i32>} : memref<256x1xf32, #tpu.memory_space<vmem>>, vector<256x1xf32>,
    } else {
    }
    %c1_i32_3 = arith.constant 1 : i32
    %14 = arith.addi %1, %c1_i32_3 : i32
    %c1_i32_4 = arith.constant 1 : i32
    %15 = arith.muli %14, %c1_i32_4 : i32
    %c1_i32_5 = arith.constant 1 : i32
    %16 = arith.subi %15, %c1_i32_5 : i32
    %17 = arith.cmpi eq, %3, %16 : i32
    %18 = arith.extui %17 : i1 to i32
    %c0_i32_6 = arith.constant 0 : i32
    %19 = arith.cmpi ne, %18, %c0_i32_6 : i32
    scf.if %19 {
      %c0 = arith.constant 0 : index
      %c0_7 = arith.constant 0 : index
      %20 = vector.load %arg9[%c0, %c0_7] : memref<256x1xf32, #tpu.memory_space<vmem>>, vector<256x1xf32>
      %21 = tpu.reciprocal %20 {approx = true} : vector<256x1xf32> -> vector<256x1xf32>
      %c0_8 = arith.constant 0 : index
      %c0_9 = arith.constant 0 : index
      %22 = vector.load %arg10[%c0_8, %c0_9] : memref<256x64xf32, #tpu.memory_space<vmem>>, vector<256x64xf32>
      %23 = vector.broadcast %21 : vector<256x1xf32> to vector<256x64xf32>
      %24 = arith.mulf %22, %23 : vector<256x64xf32>
      %25 = arith.truncf %24 : vector<256x64xf32> to vector<256x64xbf16>
      %c0_10 = arith.constant 0 : index
      %c0_11 = arith.constant 0 : index
      %c0_12 = arith.constant 0 : index
      %26 = vector.load %arg7[%c0_10, %c0_11, %c0_12] : memref<1x256x64xbf16, #tpu.memory_space<vmem>>, vector<1x256x64xbf16>
      %27 = vector.shape_cast %26 : vector<1x256x64xbf16> to vector<256x64xbf16>
      %28 = vector.shape_cast %25 : vector<256x64xbf16> to vector<1x256x64xbf16>
      tpu.vector_store %arg7[%c0_10, %c0_11, %c0_12], %28 {strides = array<i32>} : memref<1x256x64xbf16, #tpu.memory_space<vmem>>, vector<1x256x64xbf16>,
    } else {
    }
    return
  }
  func.func @transform_0(%arg0: i32, %arg1: i32, %arg2: memref<3xi32, #tpu.memory_space<smem>>, %arg3: memref<3xi32, #tpu.memory_space<smem>>) -> (i32, i32, i32) {
    %0 = arith.index_cast %arg1 : i32 to index
    %1 = memref.load %arg2[%0] : memref<3xi32, #tpu.memory_space<smem>>
    %c0_i32 = arith.constant 0 : i32
    %c0_i32_0 = arith.constant 0 : i32
    return %arg0, %1, %c0_i32 : i32, i32, i32
  }
  func.func @transform_1(%arg0: i32, %arg1: i32, %arg2: memref<3xi32, #tpu.memory_space<smem>>, %arg3: memref<3xi32, #tpu.memory_space<smem>>) -> (i32, i32, i32) {
    %0 = arith.index_cast %arg1 : i32 to index
    %1 = memref.load %arg3[%0] : memref<3xi32, #tpu.memory_space<smem>>
    %c0_i32 = arith.constant 0 : i32
    %c0_i32_0 = arith.constant 0 : i32
    return %arg0, %1, %c0_i32 : i32, i32, i32
  }
  func.func @transform_2(%arg0: i32, %arg1: i32, %arg2: memref<3xi32, #tpu.memory_space<smem>>, %arg3: memref<3xi32, #tpu.memory_space<smem>>) -> (i32, i32, i32) {
    %0 = arith.index_cast %arg1 : i32 to index
    %1 = memref.load %arg3[%0] : memref<3xi32, #tpu.memory_space<smem>>
    %c0_i32 = arith.constant 0 : i32
    %c0_i32_0 = arith.constant 0 : i32
    return %arg0, %1, %c0_i32 : i32, i32, i32
  }
  func.func @transform_3(%arg0: i32, %arg1: i32, %arg2: memref<3xi32, #tpu.memory_space<smem>>, %arg3: memref<3xi32, #tpu.memory_space<smem>>) -> (i32, i32, i32) {
    %0 = arith.index_cast %arg1 : i32 to index
    %1 = memref.load %arg2[%0] : memref<3xi32, #tpu.memory_space<smem>>
    %c0_i32 = arith.constant 0 : i32
    %c0_i32_0 = arith.constant 0 : i32
    return %arg0, %1, %c0_i32 : i32, i32, i32
  }
}

</mosaic_0001>

<llo_original>
// kernel: tpu_custom_call.1
$region0: #{tpu_custom_call.1}
  #allocation0 [shape = 'u32[]', space=smem, size = 0x4, offset = 0x4, fixed_abs, tag = 'smem constant byte address 0x4 - core index']
  #allocation1 [shape = 'u32[144,128]{1,0:T(1,128)}', space=vmem, size = 0x12000, scoped, tag = 'internal scratch']
  #allocation2 [shape = 'f32[256,1]{1,0:T(8,128)}', space=vmem, size = 0x20000, scoped, tag = 'scratch operand']
  #allocation3 [shape = 'f32[256,1]{1,0:T(8,128)}', space=vmem, size = 0x20000, scoped, tag = 'scratch operand']
  #allocation4 [shape = 'f32[256,64]{1,0:T(8,128)}', space=vmem, size = 0x20000, scoped, tag = 'scratch operand']
  #allocation5 [shape = 's32[1]{0}', space=sflag, size = 0x4, scoped, tag = 'scoped memory for tpu_custom_call.1']
  #allocation6 [shape = 'u8[512]{0}', space=smem, size = 0x200, scoped, tag = 'prefetched SMEM operand 0']
  #allocation7 [shape = 'u8[512]{0}', space=smem, size = 0x200, scoped, tag = 'prefetched SMEM operand 1']
  %s0 = inlined_call_operand.vmem [shape: s32[3], index: 0, kind: input, shape index: {}]
  %s1 = inlined_call_operand.vmem [shape: s32[3], index: 1, kind: input, shape index: {}]
  %s2 = inlined_call_operand.vmem [shape: bf16[8,512,64], index: 2, kind: input, shape index: {}]
  %s3 = inlined_call_operand.vmem [shape: bf16[8,512,64], index: 3, kind: input, shape index: {}]
  %s4 = inlined_call_operand.vmem [shape: bf16[8,512,64], index: 4, kind: input, shape index: {}]
  %s5 = inlined_call_operand.vmem [shape: bf16[8,512,64], index: 5, kind: output, shape index: {}]
  %s6 = sld [smem:[#allocation0]]
  $region61: #{tpu_custom_call.1} parent=0
    _
  %s8 = ssub.s32 1, %s6
  %s9 = scalar_select 0, %s8, %s6
  %s10 = sshll.u32 %s0, 4
  %s11 = int_to_ptr.vmem [resolvable:$true] %s10
  %13 = dma.vmem_to_smem %s11, 16, [#allocation6], [#allocation5]
  %s14 = sshll.u32 %s1, 4
  %s15 = int_to_ptr.vmem [resolvable:$true] %s14
  %17 = dma.vmem_to_smem %s15, 16, [#allocation7], [#allocation5]
  %18 = dma.done [#allocation5], 32
  %19 = sfence
  loop: start=0, step=1, limit=26
  $region2: #{tpu_custom_call.1} parent=0 // loop_pre_header
    _
  $region3: #{tpu_custom_call.1} parent=0 // loop_header
    %s21 = sphi 0, %s25
    %p22 = scmp.ge.s32.totalorder %s21, 26
    %s28 = sphi 0, %s40
    %s29 = sphi 0, %s36
    %s30 = sphi 0, %s28
    %s31 = sphi 0, %s29
    %s32 = sphi 0, %s30
    %s33 = sphi 0, %s31
    %s47 = sphi 0, %s49
    %s50 = sphi 0, %s47
    %s51 = sphi 0, %s50
    %s67 = sphi 0, %s51
    %s77 = sphi 0, %s79
    %s80 = sphi 0, %s77
    %s81 = sphi 0, %s80
    %s97 = sphi 0, %s81
    %s107 = sphi 0, %s109
    %s110 = sphi 0, %s107
    %s111 = sphi 0, %s110
    %s127 = sphi 0, %s111
    %s137 = sphi 0, %s139
    %s140 = sphi 0, %s137
    %s141 = sphi 0, %s140
    %s157 = sphi 0, %s141
  $region4: #{tpu_custom_call.1} parent=0 // loop_header_branch
    %24 = sbr.rel (%p22) target = $region8
  $region5: #{tpu_custom_call.1} parent=0 // loop_body
    %s26 = ssub.s32 %s21, 1
    %s27 = ssub.s32 %s21, 2
    %s34 = sadd.s32 1, %s29
    %p35 = scmp.ge.s32.totalorder %s34, 3
    %s36 = scalar_select %p35, 0, %s34
    %s37 = sadd.s32 1, %s28
    %s38 = scalar_select %p35, %s37, %s28
    %p39 = scmp.ge.s32.totalorder %s38, 8
    %s40 = scalar_select %p39, 0, %s38
    %s41 = sld [smem:[#allocation6 + %s29]]
    %s42 = sld [smem:[#allocation6 + %s36]]
    %s43 = ssub.s32 %s28, %s40
    %s44 = ssub.s32 %s41, %s42
    %s45 = sor.u32 %s43, %s44
    %p46 = scmp.eq.s32.totalorder %s45, 0
    %s48 = sadd.s32 %s47, 1
    %s49 = scalar_select %p46, %s47, %s48
    %p52 = pneg %p46
    %p53 = scmp.eq.s32.totalorder %s21, 23
    %p54 = por %p52, %p53
    %p55 = scmp.ne.s32.totalorder %s47, %s50
    %p56 = scmp.eq.s32.totalorder %s21, 0
    %p57 = por %p55, %p56
    %p58 = scmp.ne.s32.totalorder %s47, %s50
    %p59 = scmp.eq.s32.totalorder %s26, 23
    %p60 = por %p58, %p59
    %p61 = scmp.ne.s32.totalorder %s50, %s51
    %p62 = scmp.eq.s32.totalorder %s26, 0
    %p63 = por %p61, %p62
    %p64 = scmp.ne.s32.totalorder %s50, %s51
    %p65 = scmp.eq.s32.totalorder %s27, 23
    %p66 = por %p64, %p65
    %p68 = scmp.ne.s32.totalorder %s51, %s67
    %p69 = scmp.eq.s32.totalorder %s27, 0
    %p70 = por %p68, %p69
    %s71 = sld [smem:[#allocation7 + %s29]]
    %s72 = sld [smem:[#allocation7 + %s36]]
    %s73 = ssub.s32 %s28, %s40
    %s74 = ssub.s32 %s71, %s72
    %s75 = sor.u32 %s73, %s74
    %p76 = scmp.eq.s32.totalorder %s75, 0
    %s78 = sadd.s32 %s77, 1
    %s79 = scalar_select %p76, %s77, %s78
    %p82 = pneg %p76
    %p83 = scmp.eq.s32.totalorder %s21, 23
    %p84 = por %p82, %p83
    %p85 = scmp.ne.s32.totalorder %s77, %s80
    %p86 = scmp.eq.s32.totalorder %s21, 0
    %p87 = por %p85, %p86
    %p88 = scmp.ne.s32.totalorder %s77, %s80
    %p89 = scmp.eq.s32.totalorder %s26, 23
    %p90 = por %p88, %p89
    %p91 = scmp.ne.s32.totalorder %s80, %s81
    %p92 = scmp.eq.s32.totalorder %s26, 0
    %p93 = por %p91, %p92
    %p94 = scmp.ne.s32.totalorder %s80, %s81
    %p95 = scmp.eq.s32.totalorder %s27, 23
    %p96 = por %p94, %p95
    %p98 = scmp.ne.s32.totalorder %s81, %s97
    %p99 = scmp.eq.s32.totalorder %s27, 0
    %p100 = por %p98, %p99
    %s101 = sld [smem:[#allocation7 + %s29]]
    %s102 = sld [smem:[#allocation7 + %s36]]
    %s103 = ssub.s32 %s28, %s40
    %s104 = ssub.s32 %s101, %s102
    %s105 = sor.u32 %s103, %s104
    %p106 = scmp.eq.s32.totalorder %s105, 0
    %s108 = sadd.s32 %s107, 1
    %s109 = scalar_select %p106, %s107, %s108
    %p112 = pneg %p106
    %p113 = scmp.eq.s32.totalorder %s21, 23
    %p114 = por %p112, %p113
    %p115 = scmp.ne.s32.totalorder %s107, %s110
    %p116 = scmp.eq.s32.totalorder %s21, 0
    %p117 = por %p115, %p116
    %p118 = scmp.ne.s32.totalorder %s107, %s110
    %p119 = scmp.eq.s32.totalorder %s26, 23
    %p120 = por %p118, %p119
    %p121 = scmp.ne.s32.totalorder %s110, %s111
    %p122 = scmp.eq.s32.totalorder %s26, 0
    %p123 = por %p121, %p122
    %p124 = scmp.ne.s32.totalorder %s110, %s111
    %p125 = scmp.eq.s32.totalorder %s27, 23
    %p126 = por %p124, %p125
    %p128 = scmp.ne.s32.totalorder %s111, %s127
    %p129 = scmp.eq.s32.totalorder %s27, 0
    %p130 = por %p128, %p129
    %s131 = sld [smem:[#allocation6 + %s29]]
    %s132 = sld [smem:[#allocation6 + %s36]]
    %s133 = ssub.s32 %s28, %s40
    %s134 = ssub.s32 %s131, %s132
    %s135 = sor.u32 %s133, %s134
    %p136 = scmp.eq.s32.totalorder %s135, 0
    %s138 = sadd.s32 %s137, 1
    %s139 = scalar_select %p136, %s137, %s138
    %p142 = pneg %p136
    %p143 = scmp.eq.s32.totalorder %s21, 23
    %p144 = por %p142, %p143
    %p145 = scmp.ne.s32.totalorder %s137, %s140
    %p146 = scmp.eq.s32.totalorder %s21, 0
    %p147 = por %p145, %p146
    %p148 = scmp.ne.s32.totalorder %s137, %s140
    %p149 = scmp.eq.s32.totalorder %s26, 23
    %p150 = por %p148, %p149
    %p151 = scmp.ne.s32.totalorder %s140, %s141
    %p152 = scmp.eq.s32.totalorder %s26, 0
    %p153 = por %p151, %p152
    %p154 = scmp.ne.s32.totalorder %s140, %s141
    %p155 = scmp.eq.s32.totalorder %s27, 23
    %p156 = por %p154, %p155
    %p158 = scmp.ne.s32.totalorder %s141, %s157
    %p159 = scmp.eq.s32.totalorder %s27, 0
    %p160 = por %p158, %p159
    %p161 = scmp.le.s32.totalorder 1, %s21
    %p162 = scmp.lt.s32.totalorder %s21, 25
    %p163 = pnand %p161, %p162
    %p164 = pneg %p163
    // Predicated region
    $region9: #{tpu_custom_call.1} parent=5 // pred_check
      _
    $region10: #{tpu_custom_call.1} parent=5 // pred_check_branch
      %166 = sbr.rel (%p163) target = $region12
    $region11: #{tpu_custom_call.1} parent=5 // pred_region
      %s167 = ssub.s32 %s21, 1
    $region12: #{tpu_custom_call.1} parent=5 // pred_fallthru
      _
    %p168 = scmp.lt.s32.totalorder %s21, 24
    // Predicated region
    $region13: #{tpu_custom_call.1} parent=5 // pred_check
      %p169 = pneg %p168
    $region14: #{tpu_custom_call.1} parent=5 // pred_check_branch
      %171 = sbr.rel (%p169) target = $region16
    $region15: #{tpu_custom_call.1} parent=5 // pred_region
      // Predicated region
      $region17: #{tpu_custom_call.1} parent=15 // pred_check
        %p172 = pneg %p57
      $region18: #{tpu_custom_call.1} parent=15 // pred_check_branch
        %174 = sbr.rel (%p172) target = $region20
      $region19: #{tpu_custom_call.1} parent=15 // pred_region
        %s175 = sld [smem:[#allocation6 + %s29]]
        %s176 = smul.u32 32, %s175
        %p177 = scmp.lt.s32.totalorder %s28, 7
        %s178 = scalar_select %p177, %s28, 7
        %p179 = scmp.lt.s32.totalorder %s176, 63
        %s180 = scalar_select %p179, %s176, 63
        %s181 = smul.addr %s178, 64
        %s182 = sadd.s32 %s180, %s181
        %s183 = smul.addr %s182, 4
        %s184 = scalar_lea.vmem %s2, %s183
        %s185 = sld [smem:[#allocation6 + %s29]]
        %s186 = smul.u32 32, %s185
      $region20: #{tpu_custom_call.1} parent=15 // pred_fallthru
        _
      // Predicated region
      $region21: #{tpu_custom_call.1} parent=15 // pred_check
        %p187 = pneg %p87
      $region22: #{tpu_custom_call.1} parent=15 // pred_check_branch
        %189 = sbr.rel (%p187) target = $region24
      $region23: #{tpu_custom_call.1} parent=15 // pred_region
        %s190 = sld [smem:[#allocation7 + %s29]]
        %s191 = smul.u32 32, %s190
        %p192 = scmp.lt.s32.totalorder %s28, 7
        %s193 = scalar_select %p192, %s28, 7
        %p194 = scmp.lt.s32.totalorder %s191, 63
        %s195 = scalar_select %p194, %s191, 63
        %s196 = smul.addr %s193, 64
        %s197 = sadd.s32 %s195, %s196
        %s198 = smul.addr %s197, 4
        %s199 = scalar_lea.vmem %s3, %s198
        %s200 = sld [smem:[#allocation7 + %s29]]
        %s201 = smul.u32 32, %s200
      $region24: #{tpu_custom_call.1} parent=15 // pred_fallthru
        _
      // Predicated region
      $region25: #{tpu_custom_call.1} parent=15 // pred_check
        %p202 = pneg %p117
      $region26: #{tpu_custom_call.1} parent=15 // pred_check_branch
        %204 = sbr.rel (%p202) target = $region28
      $region27: #{tpu_custom_call.1} parent=15 // pred_region
        %s205 = sld [smem:[#allocation7 + %s29]]
        %s206 = smul.u32 32, %s205
        %p207 = scmp.lt.s32.totalorder %s28, 7
        %s208 = scalar_select %p207, %s28, 7
        %p209 = scmp.lt.s32.totalorder %s206, 63
        %s210 = scalar_select %p209, %s206, 63
        %s211 = smul.addr %s208, 64
        %s212 = sadd.s32 %s210, %s211
        %s213 = smul.addr %s212, 4
        %s214 = scalar_lea.vmem %s4, %s213
        %s215 = sld [smem:[#allocation7 + %s29]]
        %s216 = smul.u32 32, %s215
      $region28: #{tpu_custom_call.1} parent=15 // pred_fallthru
        _
    $region16: #{tpu_custom_call.1} parent=5 // pred_fallthru
      _
    %p217 = scmp.le.s32.totalorder 1, %s21
    %p218 = scmp.lt.s32.totalorder %s21, 25
    %p219 = pnand %p217, %p218
    %p220 = pneg %p219
    // Predicated region
    $region29: #{tpu_custom_call.1} parent=5 // pred_check
      _
    $region30: #{tpu_custom_call.1} parent=5 // pred_check_branch
      %222 = sbr.rel (%p219) target = $region32
    $region31: #{tpu_custom_call.1} parent=5 // pred_region
      %s223 = ssub.s32 %s21, 1
      %s224 = sld [smem:[#allocation6 + %s31]]
      %s225 = smul.u32 32, %s224
      %p226 = scmp.lt.s32.totalorder %s30, 7
      %s227 = scalar_select %p226, %s30, 7
      %p228 = scmp.lt.s32.totalorder %s225, 63
      %s229 = scalar_select %p228, %s225, 63
      %s230 = smul.addr %s227, 64
      %s231 = sadd.s32 %s229, %s230
      %s232 = smul.addr %s231, 4
      %s233 = scalar_lea.vmem %s2, %s232
      %p234 = pneg %p63
      %p235 = pneg %p60
      %s236 = sld [smem:[#allocation7 + %s31]]
      %s237 = smul.u32 32, %s236
      %p238 = scmp.lt.s32.totalorder %s30, 7
      %s239 = scalar_select %p238, %s30, 7
      %p240 = scmp.lt.s32.totalorder %s237, 63
      %s241 = scalar_select %p240, %s237, 63
      %s242 = smul.addr %s239, 64
      %s243 = sadd.s32 %s241, %s242
      %s244 = smul.addr %s243, 4
      %s245 = scalar_lea.vmem %s3, %s244
      %p246 = pneg %p93
      %p247 = pneg %p90
      %s248 = sld [smem:[#allocation7 + %s31]]
      %s249 = smul.u32 32, %s248
      %p250 = scmp.lt.s32.totalorder %s30, 7
      %s251 = scalar_select %p250, %s30, 7
      %p252 = scmp.lt.s32.totalorder %s249, 63
      %s253 = scalar_select %p252, %s249, 63
      %s254 = smul.addr %s251, 64
      %s255 = sadd.s32 %s253, %s254
      %s256 = smul.addr %s255, 4
      %s257 = scalar_lea.vmem %s4, %s256
      %p258 = pneg %p123
      %p259 = pneg %p120
      %p260 = pneg %p153
      %p261 = pneg %p150
      %s262 = sld [smem:[#allocation6 + %s31]]
      %s263 = smul.u32 32, %s262
      %p264 = scmp.lt.s32.totalorder %s30, 7
      %s265 = scalar_select %p264, %s30, 7
      %p266 = scmp.lt.s32.totalorder %s263, 63
      %s267 = scalar_select %p266, %s263, 63
      %s268 = smul.addr %s265, 64
      %s269 = sadd.s32 %s267, %s268
      %s270 = smul.addr %s269, 4
      %s271 = scalar_lea.vmem %s5, %s270
      %s272 = sld [smem:[#allocation6 + %s31]]
      %s273 = smul.u32 32, %s272
      %p274 = scmp.lt.s32.totalorder %s30, 7
      %s275 = scalar_select %p274, %s30, 7
      %p276 = scmp.lt.s32.totalorder %s273, 63
      %s277 = scalar_select %p276, %s273, 63
      %s278 = smul.addr %s275, 64
      %s279 = sadd.s32 %s277, %s278
      %s280 = smul.addr %s279, 4
      %s281 = scalar_lea.vmem %s2, %s280
      %s282 = sld [smem:[#allocation6 + %s31]]
      %s283 = smul.u32 32, %s282
      %s284 = sld [smem:[#allocation7 + %s31]]
      %s285 = smul.u32 32, %s284
      %p286 = scmp.lt.s32.totalorder %s30, 7
      %s287 = scalar_select %p286, %s30, 7
      %p288 = scmp.lt.s32.totalorder %s285, 63
      %s289 = scalar_select %p288, %s285, 63
      %s290 = smul.addr %s287, 64
      %s291 = sadd.s32 %s289, %s290
      %s292 = smul.addr %s291, 4
      %s293 = scalar_lea.vmem %s3, %s292
      %s294 = sld [smem:[#allocation7 + %s31]]
      %s295 = smul.u32 32, %s294
      %s296 = sld [smem:[#allocation7 + %s31]]
      %s297 = smul.u32 32, %s296
      %p298 = scmp.lt.s32.totalorder %s30, 7
      %s299 = scalar_select %p298, %s30, 7
      %p300 = scmp.lt.s32.totalorder %s297, 63
      %s301 = scalar_select %p300, %s297, 63
      %s302 = smul.addr %s299, 64
      %s303 = sadd.s32 %s301, %s302
      %s304 = smul.addr %s303, 4
      %s305 = scalar_lea.vmem %s4, %s304
      %s306 = sld [smem:[#allocation7 + %s31]]
      %s307 = smul.u32 32, %s306
      %s308 = sld [smem:[#allocation6 + %s31]]
      %s309 = smul.u32 32, %s308
      %p310 = scmp.lt.s32.totalorder %s30, 7
      %s311 = scalar_select %p310, %s30, 7
      %p312 = scmp.lt.s32.totalorder %s309, 63
      %s313 = scalar_select %p312, %s309, 63
      %s314 = smul.addr %s311, 64
      %s315 = sadd.s32 %s313, %s314
      %s316 = smul.addr %s315, 4
      %s317 = scalar_lea.vmem %s5, %s316
      %s318 = sld [smem:[#allocation6 + %s31]]
      %s319 = smul.u32 32, %s318
      %s322 = sld [smem:[#allocation6 + %s31]]
      %s323 = sld [smem:[#allocation7 + %s31]]
      %p324 = scmp.eq.s32.totalorder %s323, 0
      // Predicated region
      $region33: #{tpu_custom_call.1} parent=31 // pred_check
        %p325 = pneg %p324
      $region34: #{tpu_custom_call.1} parent=31 // pred_check_branch
        %327 = sbr.rel (%p325) target = $region36
      $region35: #{tpu_custom_call.1} parent=31 // pred_region
        %vm328 = vcmask 7168
        %329 = vst.msk [vmem:[#allocation2] sm:$0xff] %vm328, -inf
        %330 = vst.msk [vmem:[#allocation2 + $0x8] sm:$0xff] %vm328, -inf
        %331 = vst.msk [vmem:[#allocation2 + $0x10] sm:$0xff] %vm328, -inf
        %332 = vst.msk [vmem:[#allocation2 + $0x18] sm:$0xff] %vm328, -inf
        %333 = vst.msk [vmem:[#allocation2 + $0x20] sm:$0xff] %vm328, -inf
        %334 = vst.msk [vmem:[#allocation2 + $0x28] sm:$0xff] %vm328, -inf
        %335 = vst.msk [vmem:[#allocation2 + $0x30] sm:$0xff] %vm328, -inf
        %336 = vst.msk [vmem:[#allocation2 + $0x38] sm:$0xff] %vm328, -inf
        %337 = vst.msk [vmem:[#allocation2 + $0x40] sm:$0xff] %vm328, -inf
        %338 = vst.msk [vmem:[#allocation2 + $0x48] sm:$0xff] %vm328, -inf
        %339 = vst.msk [vmem:[#allocation2 + $0x50] sm:$0xff] %vm328, -inf
        %340 = vst.msk [vmem:[#allocation2 + $0x58] sm:$0xff] %vm328, -inf
        %341 = vst.msk [vmem:[#allocation2 + $0x60] sm:$0xff] %vm328, -inf
        %342 = vst.msk [vmem:[#allocation2 + $0x68] sm:$0xff] %vm328, -inf
        %343 = vst.msk [vmem:[#allocation2 + $0x70] sm:$0xff] %vm328, -inf
        %344 = vst.msk [vmem:[#allocation2 + $0x78] sm:$0xff] %vm328, -inf
        %345 = vst.msk [vmem:[#allocation2 + $0x80] sm:$0xff] %vm328, -inf
        %346 = vst.msk [vmem:[#allocation2 + $0x88] sm:$0xff] %vm328, -inf
        %347 = vst.msk [vmem:[#allocation2 + $0x90] sm:$0xff] %vm328, -inf
        %348 = vst.msk [vmem:[#allocation2 + $0x98] sm:$0xff] %vm328, -inf
        %349 = vst.msk [vmem:[#allocation2 + $0xa0] sm:$0xff] %vm328, -inf
        %350 = vst.msk [vmem:[#allocation2 + $0xa8] sm:$0xff] %vm328, -inf
        %351 = vst.msk [vmem:[#allocation2 + $0xb0] sm:$0xff] %vm328, -inf
        %352 = vst.msk [vmem:[#allocation2 + $0xb8] sm:$0xff] %vm328, -inf
        %353 = vst.msk [vmem:[#allocation2 + $0xc0] sm:$0xff] %vm328, -inf
        %354 = vst.msk [vmem:[#allocation2 + $0xc8] sm:$0xff] %vm328, -inf
        %355 = vst.msk [vmem:[#allocation2 + $0xd0] sm:$0xff] %vm328, -inf
        %356 = vst.msk [vmem:[#allocation2 + $0xd8] sm:$0xff] %vm328, -inf
        %357 = vst.msk [vmem:[#allocation2 + $0xe0] sm:$0xff] %vm328, -inf
        %358 = vst.msk [vmem:[#allocation2 + $0xe8] sm:$0xff] %vm328, -inf
        %359 = vst.msk [vmem:[#allocation2 + $0xf0] sm:$0xff] %vm328, -inf
        %360 = vst.msk [vmem:[#allocation2 + $0xf8] sm:$0xff] %vm328, -inf
        %361 = vst.msk [vmem:[#allocation3] sm:$0xff] %vm328, 0.0
        %362 = vst.msk [vmem:[#allocation3 + $0x8] sm:$0xff] %vm328, 0.0
        %363 = vst.msk [vmem:[#allocation3 + $0x10] sm:$0xff] %vm328, 0.0
        %364 = vst.msk [vmem:[#allocation3 + $0x18] sm:$0xff] %vm328, 0.0
        %365 = vst.msk [vmem:[#allocation3 + $0x20] sm:$0xff] %vm328, 0.0
        %366 = vst.msk [vmem:[#allocation3 + $0x28] sm:$0xff] %vm328, 0.0
        %367 = vst.msk [vmem:[#allocation3 + $0x30] sm:$0xff] %vm328, 0.0
        %368 = vst.msk [vmem:[#allocation3 + $0x38] sm:$0xff] %vm328, 0.0
        %369 = vst.msk [vmem:[#allocation3 + $0x40] sm:$0xff] %vm328, 0.0
        %370 = vst.msk [vmem:[#allocation3 + $0x48] sm:$0xff] %vm328, 0.0
        %371 = vst.msk [vmem:[#allocation3 + $0x50] sm:$0xff] %vm328, 0.0
        %372 = vst.msk [vmem:[#allocation3 + $0x58] sm:$0xff] %vm328, 0.0
        %373 = vst.msk [vmem:[#allocation3 + $0x60] sm:$0xff] %vm328, 0.0
        %374 = vst.msk [vmem:[#allocation3 + $0x68] sm:$0xff] %vm328, 0.0
        %375 = vst.msk [vmem:[#allocation3 + $0x70] sm:$0xff] %vm328, 0.0
        %376 = vst.msk [vmem:[#allocation3 + $0x78] sm:$0xff] %vm328, 0.0
        %377 = vst.msk [vmem:[#allocation3 + $0x80] sm:$0xff] %vm328, 0.0
        %378 = vst.msk [vmem:[#allocation3 + $0x88] sm:$0xff] %vm328, 0.0
        %379 = vst.msk [vmem:[#allocation3 + $0x90] sm:$0xff] %vm328, 0.0
        %380 = vst.msk [vmem:[#allocation3 + $0x98] sm:$0xff] %vm328, 0.0
        %381 = vst.msk [vmem:[#allocation3 + $0xa0] sm:$0xff] %vm328, 0.0
        %382 = vst.msk [vmem:[#allocation3 + $0xa8] sm:$0xff] %vm328, 0.0
        %383 = vst.msk [vmem:[#allocation3 + $0xb0] sm:$0xff] %vm328, 0.0
        %384 = vst.msk [vmem:[#allocation3 + $0xb8] sm:$0xff] %vm328, 0.0
        %385 = vst.msk [vmem:[#allocation3 + $0xc0] sm:$0xff] %vm328, 0.0
        %386 = vst.msk [vmem:[#allocation3 + $0xc8] sm:$0xff] %vm328, 0.0
        %387 = vst.msk [vmem:[#allocation3 + $0xd0] sm:$0xff] %vm328, 0.0
        %388 = vst.msk [vmem:[#allocation3 + $0xd8] sm:$0xff] %vm328, 0.0
        %389 = vst.msk [vmem:[#allocation3 + $0xe0] sm:$0xff] %vm328, 0.0
        %390 = vst.msk [vmem:[#allocation3 + $0xe8] sm:$0xff] %vm328, 0.0
        %391 = vst.msk [vmem:[#allocation3 + $0xf0] sm:$0xff] %vm328, 0.0
        %392 = vst.msk [vmem:[#allocation3 + $0xf8] sm:$0xff] %vm328, 0.0
        %vm393 = vcmask 523264
        %394 = vst.msk [vmem:[#allocation4] sm:$0xff] %vm393, 0.0
        %395 = vst.msk [vmem:[#allocation4 + $0x8] sm:$0xff] %vm393, 0.0
        %396 = vst.msk [vmem:[#allocation4 + $0x10] sm:$0xff] %vm393, 0.0
        %397 = vst.msk [vmem:[#allocation4 + $0x18] sm:$0xff] %vm393, 0.0
        %398 = vst.msk [vmem:[#allocation4 + $0x20] sm:$0xff] %vm393, 0.0
        %399 = vst.msk [vmem:[#allocation4 + $0x28] sm:$0xff] %vm393, 0.0
        %400 = vst.msk [vmem:[#allocation4 + $0x30] sm:$0xff] %vm393, 0.0
        %401 = vst.msk [vmem:[#allocation4 + $0x38] sm:$0xff] %vm393, 0.0
        %402 = vst.msk [vmem:[#allocation4 + $0x40] sm:$0xff] %vm393, 0.0
        %403 = vst.msk [vmem:[#allocation4 + $0x48] sm:$0xff] %vm393, 0.0
        %404 = vst.msk [vmem:[#allocation4 + $0x50] sm:$0xff] %vm393, 0.0
        %405 = vst.msk [vmem:[#allocation4 + $0x58] sm:$0xff] %vm393, 0.0
        %406 = vst.msk [vmem:[#allocation4 + $0x60] sm:$0xff] %vm393, 0.0
        %407 = vst.msk [vmem:[#allocation4 + $0x68] sm:$0xff] %vm393, 0.0
        %408 = vst.msk [vmem:[#allocation4 + $0x70] sm:$0xff] %vm393, 0.0
        %409 = vst.msk [vmem:[#allocation4 + $0x78] sm:$0xff] %vm393, 0.0
        %410 = vst.msk [vmem:[#allocation4 + $0x80] sm:$0xff] %vm393, 0.0
        %411 = vst.msk [vmem:[#allocation4 + $0x88] sm:$0xff] %vm393, 0.0
        %412 = vst.msk [vmem:[#allocation4 + $0x90] sm:$0xff] %vm393, 0.0
        %413 = vst.msk [vmem:[#allocation4 + $0x98] sm:$0xff] %vm393, 0.0
        %414 = vst.msk [vmem:[#allocation4 + $0xa0] sm:$0xff] %vm393, 0.0
        %415 = vst.msk [vmem:[#allocation4 + $0xa8] sm:$0xff] %vm393, 0.0
        %416 = vst.msk [vmem:[#allocation4 + $0xb0] sm:$0xff] %vm393, 0.0
        %417 = vst.msk [vmem:[#allocation4 + $0xb8] sm:$0xff] %vm393, 0.0
        %418 = vst.msk [vmem:[#allocation4 + $0xc0] sm:$0xff] %vm393, 0.0
        %419 = vst.msk [vmem:[#allocation4 + $0xc8] sm:$0xff] %vm393, 0.0
        %420 = vst.msk [vmem:[#allocation4 + $0xd0] sm:$0xff] %vm393, 0.0
        %421 = vst.msk [vmem:[#allocation4 + $0xd8] sm:$0xff] %vm393, 0.0
        %422 = vst.msk [vmem:[#allocation4 + $0xe0] sm:$0xff] %vm393, 0.0
        %423 = vst.msk [vmem:[#allocation4 + $0xe8] sm:$0xff] %vm393, 0.0
        %424 = vst.msk [vmem:[#allocation4 + $0xf0] sm:$0xff] %vm393, 0.0
        %425 = vst.msk [vmem:[#allocation4 + $0xf8] sm:$0xff] %vm393, 0.0
      $region36: #{tpu_custom_call.1} parent=31 // pred_fallthru
        _
      %p426 = scmp.ge.s32.totalorder %s323, %s322
      // Predicated region
      $region37: #{tpu_custom_call.1} parent=31 // pred_check
        %p427 = pneg %p426
      $region38: #{tpu_custom_call.1} parent=31 // pred_check_branch
        %429 = sbr.rel (%p427) target = $region40
      $region39: #{tpu_custom_call.1} parent=31 // pred_region
        %v430 = vld [vmem:[%s281] sm:$0xf]
        %v431 = vld [vmem:[%s281 + $0x4] sm:$0xf]
        %v432 = vld [vmem:[%s281 + $0x8] sm:$0xf]
        %v433 = vld [vmem:[%s281 + $0xc] sm:$0xf]
        %v434 = vld [vmem:[%s281 + $0x10] sm:$0xf]
        %v435 = vld [vmem:[%s281 + $0x14] sm:$0xf]
        %v436 = vld [vmem:[%s281 + $0x18] sm:$0xf]
        %v437 = vld [vmem:[%s281 + $0x1c] sm:$0xf]
        %v438 = vld [vmem:[%s281 + $0x20] sm:$0xf]
        %v439 = vld [vmem:[%s281 + $0x24] sm:$0xf]
        %v440 = vld [vmem:[%s281 + $0x28] sm:$0xf]
        %v441 = vld [vmem:[%s281 + $0x2c] sm:$0xf]
        %v442 = vld [vmem:[%s281 + $0x30] sm:$0xf]
        %v443 = vld [vmem:[%s281 + $0x34] sm:$0xf]
        %v444 = vld [vmem:[%s281 + $0x38] sm:$0xf]
        %v445 = vld [vmem:[%s281 + $0x3c] sm:$0xf]
        %v446 = vld [vmem:[%s281 + $0x40] sm:$0xf]
        %v447 = vld [vmem:[%s281 + $0x44] sm:$0xf]
        %v448 = vld [vmem:[%s281 + $0x48] sm:$0xf]
        %v449 = vld [vmem:[%s281 + $0x4c] sm:$0xf]
        %v450 = vld [vmem:[%s281 + $0x50] sm:$0xf]
        %v451 = vld [vmem:[%s281 + $0x54] sm:$0xf]
        %v452 = vld [vmem:[%s281 + $0x58] sm:$0xf]
        %v453 = vld [vmem:[%s281 + $0x5c] sm:$0xf]
        %v454 = vld [vmem:[%s281 + $0x60] sm:$0xf]
        %v455 = vld [vmem:[%s281 + $0x64] sm:$0xf]
        %v456 = vld [vmem:[%s281 + $0x68] sm:$0xf]
        %v457 = vld [vmem:[%s281 + $0x6c] sm:$0xf]
        %v458 = vld [vmem:[%s281 + $0x70] sm:$0xf]
        %v459 = vld [vmem:[%s281 + $0x74] sm:$0xf]
        %v460 = vld [vmem:[%s281 + $0x78] sm:$0xf]
        %v461 = vld [vmem:[%s281 + $0x7c] sm:$0xf]
        %v462 = vmul.bf16 %v430, 1040203264
        %v463 = vmul.bf16 %v431, 1040203264
        %v464 = vmul.bf16 %v432, 1040203264
        %v465 = vmul.bf16 %v433, 1040203264
        %v466 = vmul.bf16 %v434, 1040203264
        %v467 = vmul.bf16 %v435, 1040203264
        %v468 = vmul.bf16 %v436, 1040203264
        %v469 = vmul.bf16 %v437, 1040203264
        %v470 = vmul.bf16 %v438, 1040203264
        %v471 = vmul.bf16 %v439, 1040203264
        %v472 = vmul.bf16 %v440, 1040203264
        %v473 = vmul.bf16 %v441, 1040203264
        %v474 = vmul.bf16 %v442, 1040203264
        %v475 = vmul.bf16 %v443, 1040203264
        %v476 = vmul.bf16 %v444, 1040203264
        %v477 = vmul.bf16 %v445, 1040203264
        %v478 = vmul.bf16 %v446, 1040203264
        %v479 = vmul.bf16 %v447, 1040203264
        %v480 = vmul.bf16 %v448, 1040203264
        %v481 = vmul.bf16 %v449, 1040203264
        %v482 = vmul.bf16 %v450, 1040203264
        %v483 = vmul.bf16 %v451, 1040203264
        %v484 = vmul.bf16 %v452, 1040203264
        %v485 = vmul.bf16 %v453, 1040203264
        %v486 = vmul.bf16 %v454, 1040203264
        %v487 = vmul.bf16 %v455, 1040203264
        %v488 = vmul.bf16 %v456, 1040203264
        %v489 = vmul.bf16 %v457, 1040203264
        %v490 = vmul.bf16 %v458, 1040203264
        %v491 = vmul.bf16 %v459, 1040203264
        %v492 = vmul.bf16 %v460, 1040203264
        %v493 = vmul.bf16 %v461, 1040203264
        %v494 = vld [vmem:[%s293] sm:$0xf]
        %v495 = vld [vmem:[%s293 + $0x4] sm:$0xf]
        %v496 = vld [vmem:[%s293 + $0x8] sm:$0xf]
        %v497 = vld [vmem:[%s293 + $0xc] sm:$0xf]
        %v498 = vld [vmem:[%s293 + $0x10] sm:$0xf]
        %v499 = vld [vmem:[%s293 + $0x14] sm:$0xf]
        %v500 = vld [vmem:[%s293 + $0x18] sm:$0xf]
        %v501 = vld [vmem:[%s293 + $0x1c] sm:$0xf]
        %v502 = vld [vmem:[%s293 + $0x20] sm:$0xf]
        %v503 = vld [vmem:[%s293 + $0x24] sm:$0xf]
        %v504 = vld [vmem:[%s293 + $0x28] sm:$0xf]
        %v505 = vld [vmem:[%s293 + $0x2c] sm:$0xf]
        %v506 = vld [vmem:[%s293 + $0x30] sm:$0xf]
        %v507 = vld [vmem:[%s293 + $0x34] sm:$0xf]
        %v508 = vld [vmem:[%s293 + $0x38] sm:$0xf]
        %v509 = vld [vmem:[%s293 + $0x3c] sm:$0xf]
        %v510 = vld [vmem:[%s293 + $0x40] sm:$0xf]
        %v511 = vld [vmem:[%s293 + $0x44] sm:$0xf]
        %v512 = vld [vmem:[%s293 + $0x48] sm:$0xf]
        %v513 = vld [vmem:[%s293 + $0x4c] sm:$0xf]
        %v514 = vld [vmem:[%s293 + $0x50] sm:$0xf]
        %v515 = vld [vmem:[%s293 + $0x54] sm:$0xf]
        %v516 = vld [vmem:[%s293 + $0x58] sm:$0xf]
        %v517 = vld [vmem:[%s293 + $0x5c] sm:$0xf]
        %v518 = vld [vmem:[%s293 + $0x60] sm:$0xf]
        %v519 = vld [vmem:[%s293 + $0x64] sm:$0xf]
        %v520 = vld [vmem:[%s293 + $0x68] sm:$0xf]
        %v521 = vld [vmem:[%s293 + $0x6c] sm:$0xf]
        %v522 = vld [vmem:[%s293 + $0x70] sm:$0xf]
        %v523 = vld [vmem:[%s293 + $0x74] sm:$0xf]
        %v524 = vld [vmem:[%s293 + $0x78] sm:$0xf]
        %v525 = vld [vmem:[%s293 + $0x7c] sm:$0xf]
        %v526 = vld [vmem:[%s305] sm:$0xf]
        %v527 = vld [vmem:[%s305 + $0x4] sm:$0xf]
        %v528 = vld [vmem:[%s305 + $0x8] sm:$0xf]
        %v529 = vld [vmem:[%s305 + $0xc] sm:$0xf]
        %v530 = vld [vmem:[%s305 + $0x10] sm:$0xf]
        %v531 = vld [vmem:[%s305 + $0x14] sm:$0xf]
        %v532 = vld [vmem:[%s305 + $0x18] sm:$0xf]
        %v533 = vld [vmem:[%s305 + $0x1c] sm:$0xf]
        %v534 = vld [vmem:[%s305 + $0x20] sm:$0xf]
        %v535 = vld [vmem:[%s305 + $0x24] sm:$0xf]
        %v536 = vld [vmem:[%s305 + $0x28] sm:$0xf]
        %v537 = vld [vmem:[%s305 + $0x2c] sm:$0xf]
        %v538 = vld [vmem:[%s305 + $0x30] sm:$0xf]
        %v539 = vld [vmem:[%s305 + $0x34] sm:$0xf]
        %v540 = vld [vmem:[%s305 + $0x38] sm:$0xf]
        %v541 = vld [vmem:[%s305 + $0x3c] sm:$0xf]
        %v542 = vld [vmem:[%s305 + $0x40] sm:$0xf]
        %v543 = vld [vmem:[%s305 + $0x44] sm:$0xf]
        %v544 = vld [vmem:[%s305 + $0x48] sm:$0xf]
        %v545 = vld [vmem:[%s305 + $0x4c] sm:$0xf]
        %v546 = vld [vmem:[%s305 + $0x50] sm:$0xf]
        %v547 = vld [vmem:[%s305 + $0x54] sm:$0xf]
        %v548 = vld [vmem:[%s305 + $0x58] sm:$0xf]
        %v549 = vld [vmem:[%s305 + $0x5c] sm:$0xf]
        %v550 = vld [vmem:[%s305 + $0x60] sm:$0xf]
        %v551 = vld [vmem:[%s305 + $0x64] sm:$0xf]
        %v552 = vld [vmem:[%s305 + $0x68] sm:$0xf]
        %v553 = vld [vmem:[%s305 + $0x6c] sm:$0xf]
        %v554 = vld [vmem:[%s305 + $0x70] sm:$0xf]
        %v555 = vld [vmem:[%s305 + $0x74] sm:$0xf]
        %v556 = vld [vmem:[%s305 + $0x78] sm:$0xf]
        %v557 = vld [vmem:[%s305 + $0x7c] sm:$0xf]
        %v590 = vunpack.c.l.b16 %v462
        %v591 = vunpack.c.l.b16 %v463
        %v592 = vunpack.c.l.b16 %v464
        %v593 = vunpack.c.l.b16 %v465
        %v594 = vunpack.c.l.b16 %v466
        %v595 = vunpack.c.l.b16 %v467
        %v596 = vunpack.c.l.b16 %v468
        %v597 = vunpack.c.l.b16 %v469
        %v598 = vunpack.c.l.b16 %v470
        %v599 = vunpack.c.l.b16 %v471
        %v600 = vunpack.c.l.b16 %v472
        %v601 = vunpack.c.l.b16 %v473
        %v602 = vunpack.c.l.b16 %v474
        %v603 = vunpack.c.l.b16 %v475
        %v604 = vunpack.c.l.b16 %v476
        %v605 = vunpack.c.l.b16 %v477
        %v606 = vunpack.c.l.b16 %v478
        %v607 = vunpack.c.l.b16 %v479
        %v608 = vunpack.c.l.b16 %v480
        %v609 = vunpack.c.l.b16 %v481
        %v610 = vunpack.c.l.b16 %v482
        %v611 = vunpack.c.l.b16 %v483
        %v612 = vunpack.c.l.b16 %v484
        %v613 = vunpack.c.l.b16 %v485
        %v614 = vunpack.c.l.b16 %v486
        %v615 = vunpack.c.l.b16 %v487
        %v616 = vunpack.c.l.b16 %v488
        %v617 = vunpack.c.l.b16 %v489
        %v618 = vunpack.c.l.b16 %v490
        %v619 = vunpack.c.l.b16 %v491
        %v620 = vunpack.c.l.b16 %v492
        %v621 = vunpack.c.l.b16 %v493
        %v622 = vpack.c.b16 %v591, %v590
        %v623 = vpack.c.b16 %v593, %v592
        %v624 = vpack.c.b16 %v595, %v594
        %v625 = vpack.c.b16 %v597, %v596
        %v626 = vpack.c.b16 %v599, %v598
        %v627 = vpack.c.b16 %v601, %v600
        %v628 = vpack.c.b16 %v603, %v602
        %v629 = vpack.c.b16 %v605, %v604
        %v630 = vpack.c.b16 %v607, %v606
        %v631 = vpack.c.b16 %v609, %v608
        %v632 = vpack.c.b16 %v611, %v610
        %v633 = vpack.c.b16 %v613, %v612
        %v634 = vpack.c.b16 %v615, %v614
        %v635 = vpack.c.b16 %v617, %v616
        %v636 = vpack.c.b16 %v619, %v618
        %v637 = vpack.c.b16 %v621, %v620
        %v670 = vunpack.c.l.b16 %v494
        %v671 = vunpack.c.l.b16 %v495
        %v672 = vunpack.c.l.b16 %v496
        %v673 = vunpack.c.l.b16 %v497
        %v674 = vunpack.c.l.b16 %v498
        %v675 = vunpack.c.l.b16 %v499
        %v676 = vunpack.c.l.b16 %v500
        %v677 = vunpack.c.l.b16 %v501
        %v678 = vunpack.c.l.b16 %v502
        %v679 = vunpack.c.l.b16 %v503
        %v680 = vunpack.c.l.b16 %v504
        %v681 = vunpack.c.l.b16 %v505
        %v682 = vunpack.c.l.b16 %v506
        %v683 = vunpack.c.l.b16 %v507
        %v684 = vunpack.c.l.b16 %v508
        %v685 = vunpack.c.l.b16 %v509
        %v686 = vunpack.c.l.b16 %v510
        %v687 = vunpack.c.l.b16 %v511
        %v688 = vunpack.c.l.b16 %v512
        %v689 = vunpack.c.l.b16 %v513
        %v690 = vunpack.c.l.b16 %v514
        %v691 = vunpack.c.l.b16 %v515
        %v692 = vunpack.c.l.b16 %v516
        %v693 = vunpack.c.l.b16 %v517
        %v694 = vunpack.c.l.b16 %v518
        %v695 = vunpack.c.l.b16 %v519
        %v696 = vunpack.c.l.b16 %v520
        %v697 = vunpack.c.l.b16 %v521
        %v698 = vunpack.c.l.b16 %v522
        %v699 = vunpack.c.l.b16 %v523
        %v700 = vunpack.c.l.b16 %v524
        %v701 = vunpack.c.l.b16 %v525
        %v702 = vpack.c.b16 %v671, %v670
        %v703 = vpack.c.b16 %v673, %v672
        %v704 = vpack.c.b16 %v675, %v674
        %v705 = vpack.c.b16 %v677, %v676
        %v706 = vpack.c.b16 %v679, %v678
        %v707 = vpack.c.b16 %v681, %v680
        %v708 = vpack.c.b16 %v683, %v682
        %v709 = vpack.c.b16 %v685, %v684
        %v710 = vpack.c.b16 %v687, %v686
        %v711 = vpack.c.b16 %v689, %v688
        %v712 = vpack.c.b16 %v691, %v690
        %v713 = vpack.c.b16 %v693, %v692
        %v714 = vpack.c.b16 %v695, %v694
        %v715 = vpack.c.b16 %v697, %v696
        %v716 = vpack.c.b16 %v699, %v698
        %v717 = vpack.c.b16 %v701, %v700
        %vm718 = vcmask 523264
        %v720 = vsel %vm718, %v622, 0
        %v723 = vsel %vm718, %v623, 0
        %v726 = vsel %vm718, %v624, 0
        %v729 = vsel %vm718, %v625, 0
        %v732 = vsel %vm718, %v626, 0
        %v735 = vsel %vm718, %v627, 0
        %v738 = vsel %vm718, %v628, 0
        %v741 = vsel %vm718, %v629, 0
        %v744 = vsel %vm718, %v630, 0
        %v747 = vsel %vm718, %v631, 0
        %v750 = vsel %vm718, %v632, 0
        %v753 = vsel %vm718, %v633, 0
        %v756 = vsel %vm718, %v634, 0
        %v759 = vsel %vm718, %v635, 0
        %v762 = vsel %vm718, %v636, 0
        %v765 = vsel %vm718, %v637, 0
        %v768 = vsel %vm718, %v702, 0
        %v771 = vsel %vm718, %v703, 0
        %v774 = vsel %vm718, %v704, 0
        %v777 = vsel %vm718, %v705, 0
        %v780 = vsel %vm718, %v706, 0
        %v783 = vsel %vm718, %v707, 0
        %v786 = vsel %vm718, %v708, 0
        %v789 = vsel %vm718, %v709, 0
        %v792 = vsel %vm718, %v710, 0
        %v795 = vsel %vm718, %v711, 0
        %v798 = vsel %vm718, %v712, 0
        %v801 = vsel %vm718, %v713, 0
        %v804 = vsel %vm718, %v714, 0
        %v807 = vsel %vm718, %v715, 0
        %v810 = vsel %vm718, %v716, 0
        %v813 = vsel %vm718, %v717, 0
        %815 = vmatprep.subr.bf16.mxu0 0
        %816 = vmatpush1.bf16.xpose.msra.mxu0 %v768
        %817 = vmatprep.subr.bf16.mxu0 0
        %818 = vmatpush1.bf16.xpose.msra.mxu0 %v771
        %819 = vmatprep.subr.bf16.mxu0 0
        %820 = vmatpush1.bf16.xpose.msra.mxu0 %v774
        %821 = vmatprep.subr.bf16.mxu0 0
        %822 = vmatpush1.bf16.xpose.msra.mxu0 %v777
        %823 = vmatprep.subr.bf16.mxu0 0
        %824 = vmatpush1.bf16.xpose.msra.mxu0 %v780
        %825 = vmatprep.subr.bf16.mxu0 0
        %826 = vmatpush1.bf16.xpose.msra.mxu0 %v783
        %827 = vmatprep.subr.bf16.mxu0 0
        %828 = vmatpush1.bf16.xpose.msra.mxu0 %v786
        %829 = vmatprep.subr.bf16.mxu0 0
        %830 = vmatpush1.bf16.xpose.msra.mxu0 %v789
        %831 = vmatprep.subr.bf16.mxu0 0
        %832 = vmatpush1.bf16.xpose.msra.mxu0 %v792
        %833 = vmatprep.subr.bf16.mxu0 0
        %834 = vmatpush1.bf16.xpose.msra.mxu0 %v795
        %835 = vmatprep.subr.bf16.mxu0 0
        %836 = vmatpush1.bf16.xpose.msra.mxu0 %v798
        %837 = vmatprep.subr.bf16.mxu0 0
        %838 = vmatpush1.bf16.xpose.msra.mxu0 %v801
        %839 = vmatprep.subr.bf16.mxu0 0
        %840 = vmatpush1.bf16.xpose.msra.mxu0 %v804
        %841 = vmatprep.subr.bf16.mxu0 0
        %842 = vmatpush1.bf16.xpose.msra.mxu0 %v807
        %843 = vmatprep.subr.bf16.mxu0 0
        %844 = vmatpush1.bf16.xpose.msra.mxu0 %v810
        %845 = vmatprep.subr.bf16.mxu0 0
        %846 = vmatpush1.bf16.xpose.msra.mxu0 %v813
        %847 = vmatprep.mubr.bf16.mxu0 0
        %848 = vmatmul.mubr.bf16.gmra.mrb[0].mxu0 %v720
        %v849 = vpop.f32.mrb[0].mxu0
        %v850 = vadd.f32 0.0, %v849
        %v851 = vpop.f32.mrb[0].mxu0
        %v852 = vadd.f32 0.0, %v851
        %v853 = vpop.f32.mrb[0].mxu0
        %v854 = vadd.f32 0.0, %v853
        %v855 = vpop.f32.mrb[0].mxu0
        %v856 = vadd.f32 0.0, %v855
        %857 = vmatprep.mubr.bf16.mxu0 0
        %858 = vmatmul.mubr.bf16.gmra.mrb[0].mxu0 %v723
        %v859 = vpop.f32.mrb[0].mxu0
        %v860 = vadd.f32 0.0, %v859
        %v861 = vpop.f32.mrb[0].mxu0
        %v862 = vadd.f32 0.0, %v861
        %v863 = vpop.f32.mrb[0].mxu0
        %v864 = vadd.f32 0.0, %v863
        %v865 = vpop.f32.mrb[0].mxu0
        %v866 = vadd.f32 0.0, %v865
        %867 = vmatprep.mubr.bf16.mxu0 0
        %868 = vmatmul.mubr.bf16.gmra.mrb[0].mxu0 %v726
        %v869 = vpop.f32.mrb[0].mxu0
        %v870 = vadd.f32 0.0, %v869
        %v871 = vpop.f32.mrb[0].mxu0
        %v872 = vadd.f32 0.0, %v871
        %v873 = vpop.f32.mrb[0].mxu0
        %v874 = vadd.f32 0.0, %v873
        %v875 = vpop.f32.mrb[0].mxu0
        %v876 = vadd.f32 0.0, %v875
        %877 = vmatprep.mubr.bf16.mxu0 0
        %878 = vmatmul.mubr.bf16.gmra.mrb[0].mxu0 %v729
        %v879 = vpop.f32.mrb[0].mxu0
        %v880 = vadd.f32 0.0, %v879
        %v881 = vpop.f32.mrb[0].mxu0
        %v882 = vadd.f32 0.0, %v881
        %v883 = vpop.f32.mrb[0].mxu0
        %v884 = vadd.f32 0.0, %v883
        %v885 = vpop.f32.mrb[0].mxu0
        %v886 = vadd.f32 0.0, %v885
        %887 = vmatprep.mubr.bf16.mxu0 0
        %888 = vmatmul.mubr.bf16.gmra.mrb[0].mxu0 %v732
        %v889 = vpop.f32.mrb[0].mxu0
        %v890 = vadd.f32 0.0, %v889
        %v891 = vpop.f32.mrb[0].mxu0
        %v892 = vadd.f32 0.0, %v891
        %v893 = vpop.f32.mrb[0].mxu0
        %v894 = vadd.f32 0.0, %v893
        %v895 = vpop.f32.mrb[0].mxu0
        %v896 = vadd.f32 0.0, %v895
        %897 = vmatprep.mubr.bf16.mxu0 0
        %898 = vmatmul.mubr.bf16.gmra.mrb[0].mxu0 %v735
        %v899 = vpop.f32.mrb[0].mxu0
        %v900 = vadd.f32 0.0, %v899
        %v901 = vpop.f32.mrb[0].mxu0
        %v902 = vadd.f32 0.0, %v901
        %v903 = vpop.f32.mrb[0].mxu0
        %v904 = vadd.f32 0.0, %v903
        %v905 = vpop.f32.mrb[0].mxu0
        %v906 = vadd.f32 0.0, %v905
        %907 = vmatprep.mubr.bf16.mxu0 0
        %908 = vmatmul.mubr.bf16.gmra.mrb[0].mxu0 %v738
        %v909 = vpop.f32.mrb[0].mxu0
        %v910 = vadd.f32 0.0, %v909
        %v911 = vpop.f32.mrb[0].mxu0
        %v912 = vadd.f32 0.0, %v911
        %v913 = vpop.f32.mrb[0].mxu0
        %v914 = vadd.f32 0.0, %v913
        %v915 = vpop.f32.mrb[0].mxu0
        %v916 = vadd.f32 0.0, %v915
        %917 = vmatprep.mubr.bf16.mxu0 0
        %918 = vmatmul.mubr.bf16.gmra.mrb[0].mxu0 %v741
        %v919 = vpop.f32.mrb[0].mxu0
        %v920 = vadd.f32 0.0, %v919
        %v921 = vpop.f32.mrb[0].mxu0
        %v922 = vadd.f32 0.0, %v921
        %v923 = vpop.f32.mrb[0].mxu0
        %v924 = vadd.f32 0.0, %v923
        %v925 = vpop.f32.mrb[0].mxu0
        %v926 = vadd.f32 0.0, %v925
        %927 = vmatprep.mubr.bf16.mxu0 0
        %928 = vmatmul.mubr.bf16.gmra.mrb[0].mxu0 %v744
        %v929 = vpop.f32.mrb[0].mxu0
        %v930 = vadd.f32 0.0, %v929
        %v931 = vpop.f32.mrb[0].mxu0
        %v932 = vadd.f32 0.0, %v931
        %v933 = vpop.f32.mrb[0].mxu0
        %v934 = vadd.f32 0.0, %v933
        %v935 = vpop.f32.mrb[0].mxu0
        %v936 = vadd.f32 0.0, %v935
        %937 = vmatprep.mubr.bf16.mxu0 0
        %938 = vmatmul.mubr.bf16.gmra.mrb[0].mxu0 %v747
        %v939 = vpop.f32.mrb[0].mxu0
        %v940 = vadd.f32 0.0, %v939
        %v941 = vpop.f32.mrb[0].mxu0
        %v942 = vadd.f32 0.0, %v941
        %v943 = vpop.f32.mrb[0].mxu0
        %v944 = vadd.f32 0.0, %v943
        %v945 = vpop.f32.mrb[0].mxu0
        %v946 = vadd.f32 0.0, %v945
        %947 = vmatprep.mubr.bf16.mxu0 0
        %948 = vmatmul.mubr.bf16.gmra.mrb[0].mxu0 %v750
        %v949 = vpop.f32.mrb[0].mxu0
        %v950 = vadd.f32 0.0, %v949
        %v951 = vpop.f32.mrb[0].mxu0
        %v952 = vadd.f32 0.0, %v951
        %v953 = vpop.f32.mrb[0].mxu0
        %v954 = vadd.f32 0.0, %v953
        %v955 = vpop.f32.mrb[0].mxu0
        %v956 = vadd.f32 0.0, %v955
        %957 = vmatprep.mubr.bf16.mxu0 0
        %958 = vmatmul.mubr.bf16.gmra.mrb[0].mxu0 %v753
        %v959 = vpop.f32.mrb[0].mxu0
        %v960 = vadd.f32 0.0, %v959
        %v961 = vpop.f32.mrb[0].mxu0
        %v962 = vadd.f32 0.0, %v961
        %v963 = vpop.f32.mrb[0].mxu0
        %v964 = vadd.f32 0.0, %v963
        %v965 = vpop.f32.mrb[0].mxu0
        %v966 = vadd.f32 0.0, %v965
        %967 = vmatprep.mubr.bf16.mxu0 0
        %968 = vmatmul.mubr.bf16.gmra.mrb[0].mxu0 %v756
        %v969 = vpop.f32.mrb[0].mxu0
        %v970 = vadd.f32 0.0, %v969
        %v971 = vpop.f32.mrb[0].mxu0
        %v972 = vadd.f32 0.0, %v971
        %v973 = vpop.f32.mrb[0].mxu0
        %v974 = vadd.f32 0.0, %v973
        %v975 = vpop.f32.mrb[0].mxu0
        %v976 = vadd.f32 0.0, %v975
        %977 = vmatprep.mubr.bf16.mxu0 0
        %978 = vmatmul.mubr.bf16.gmra.mrb[0].mxu0 %v759
        %v979 = vpop.f32.mrb[0].mxu0
        %v980 = vadd.f32 0.0, %v979
        %v981 = vpop.f32.mrb[0].mxu0
        %v982 = vadd.f32 0.0, %v981
        %v983 = vpop.f32.mrb[0].mxu0
        %v984 = vadd.f32 0.0, %v983
        %v985 = vpop.f32.mrb[0].mxu0
        %v986 = vadd.f32 0.0, %v985
        %987 = vmatprep.mubr.bf16.mxu0 0
        %988 = vmatmul.mubr.bf16.gmra.mrb[0].mxu0 %v762
        %v989 = vpop.f32.mrb[0].mxu0
        %v990 = vadd.f32 0.0, %v989
        %v991 = vpop.f32.mrb[0].mxu0
        %v992 = vadd.f32 0.0, %v991
        %v993 = vpop.f32.mrb[0].mxu0
        %v994 = vadd.f32 0.0, %v993
        %v995 = vpop.f32.mrb[0].mxu0
        %v996 = vadd.f32 0.0, %v995
        %997 = vmatprep.mubr.bf16.mxu0 0
        %998 = vmatmul.mubr.bf16.gmra.mrb[0].mxu0 %v765
        %v999 = vpop.f32.mrb[0].mxu0
        %v1000 = vadd.f32 0.0, %v999
        %v1001 = vpop.f32.mrb[0].mxu0
        %v1002 = vadd.f32 0.0, %v1001
        %v1003 = vpop.f32.mrb[0].mxu0
        %v1004 = vadd.f32 0.0, %v1003
        %v1005 = vpop.f32.mrb[0].mxu0
        %v1006 = vadd.f32 0.0, %v1005
        %1007 = vdwg.mxu0
        %s1008 = smul.u32 %s322, 256
        %v1009 = vlaneseq
        %v1010 = vshrl.u32 %v1009, 7
        %v1011 = vadd.s32 %v1010, 8
        %v1012 = vadd.s32 %v1010, 16
        %v1013 = vadd.s32 %v1010, 24
        %v1014 = vadd.s32 %v1010, 32
        %v1015 = vadd.s32 %v1010, 40
        %v1016 = vadd.s32 %v1010, 48
        %v1017 = vadd.s32 %v1010, 56
        %v1018 = vadd.s32 %v1010, 64
        %v1019 = vadd.s32 %v1010, 72
        %v1020 = vadd.s32 %v1010, 80
        %v1021 = vadd.s32 %v1010, 88
        %v1022 = vadd.s32 %v1010, 96
        %v1023 = vadd.s32 %v1010, 104
        %v1024 = vadd.s32 %v1010, 112
        %v1025 = vadd.s32 %v1010, 120
        %v1026 = vadd.s32 %v1010, 128
        %v1027 = vadd.s32 %v1010, 136
        %v1028 = vadd.s32 %v1010, 144
        %v1029 = vadd.s32 %v1010, 152
        %v1030 = vadd.s32 %v1010, 160
        %v1031 = vadd.s32 %v1010, 168
        %v1032 = vadd.s32 %v1010, 176
        %v1033 = vadd.s32 %v1010, 184
        %v1034 = vadd.s32 %v1010, 192
        %v1035 = vadd.s32 %v1010, 200
        %v1036 = vadd.s32 %v1010, 208
        %v1037 = vadd.s32 %v1010, 216
        %v1038 = vadd.s32 %v1010, 224
        %v1039 = vadd.s32 %v1010, 232
        %v1040 = vadd.s32 %v1010, 240
        %v1041 = vadd.s32 %v1010, 248
        %v1042 = vstv %s1008
        %v1043 = vadd.s32 %v1042, %v1010
        %v1044 = vadd.s32 %v1042, %v1011
        %v1045 = vadd.s32 %v1042, %v1012
        %v1046 = vadd.s32 %v1042, %v1013
        %v1047 = vadd.s32 %v1042, %v1014
        %v1048 = vadd.s32 %v1042, %v1015
        %v1049 = vadd.s32 %v1042, %v1016
        %v1050 = vadd.s32 %v1042, %v1017
        %v1051 = vadd.s32 %v1042, %v1018
        %v1052 = vadd.s32 %v1042, %v1019
        %v1053 = vadd.s32 %v1042, %v1020
        %v1054 = vadd.s32 %v1042, %v1021
        %v1055 = vadd.s32 %v1042, %v1022
        %v1056 = vadd.s32 %v1042, %v1023
        %v1057 = vadd.s32 %v1042, %v1024
        %v1058 = vadd.s32 %v1042, %v1025
        %v1059 = vadd.s32 %v1042, %v1026
        %v1060 = vadd.s32 %v1042, %v1027
        %v1061 = vadd.s32 %v1042, %v1028
        %v1062 = vadd.s32 %v1042, %v1029
        %v1063 = vadd.s32 %v1042, %v1030
        %v1064 = vadd.s32 %v1042, %v1031
        %v1065 = vadd.s32 %v1042, %v1032
        %v1066 = vadd.s32 %v1042, %v1033
        %v1067 = vadd.s32 %v1042, %v1034
        %v1068 = vadd.s32 %v1042, %v1035
        %v1069 = vadd.s32 %v1042, %v1036
        %v1070 = vadd.s32 %v1042, %v1037
        %v1071 = vadd.s32 %v1042, %v1038
        %v1072 = vadd.s32 %v1042, %v1039
        %v1073 = vadd.s32 %v1042, %v1040
        %v1074 = vadd.s32 %v1042, %v1041
        %s1075 = smul.u32 %s323, 256
        %v1076 = vlaneseq
        %v1077 = vand.u32 %v1076, 127
        %v1078 = vadd.s32 %v1077, 128
        %v1079 = vstv %s1075
        %v1080 = vadd.s32 %v1079, %v1077
        %v1081 = vadd.s32 %v1079, %v1078
        %vm1082 = vcmp.ge.s32.totalorder %v1043, %v1080
        %vm1083 = vcmp.ge.s32.totalorder %v1043, %v1081
        %vm1084 = vcmp.ge.s32.totalorder %v1044, %v1080
        %vm1085 = vcmp.ge.s32.totalorder %v1044, %v1081
        %vm1086 = vcmp.ge.s32.totalorder %v1045, %v1080
        %vm1087 = vcmp.ge.s32.totalorder %v1045, %v1081
        %vm1088 = vcmp.ge.s32.totalorder %v1046, %v1080
        %vm1089 = vcmp.ge.s32.totalorder %v1046, %v1081
        %vm1090 = vcmp.ge.s32.totalorder %v1047, %v1080
        %vm1091 = vcmp.ge.s32.totalorder %v1047, %v1081
        %vm1092 = vcmp.ge.s32.totalorder %v1048, %v1080
        %vm1093 = vcmp.ge.s32.totalorder %v1048, %v1081
        %vm1094 = vcmp.ge.s32.totalorder %v1049, %v1080
        %vm1095 = vcmp.ge.s32.totalorder %v1049, %v1081
        %vm1096 = vcmp.ge.s32.totalorder %v1050, %v1080
        %vm1097 = vcmp.ge.s32.totalorder %v1050, %v1081
        %vm1098 = vcmp.ge.s32.totalorder %v1051, %v1080
        %vm1099 = vcmp.ge.s32.totalorder %v1051, %v1081
        %vm1100 = vcmp.ge.s32.totalorder %v1052, %v1080
        %vm1101 = vcmp.ge.s32.totalorder %v1052, %v1081
        %vm1102 = vcmp.ge.s32.totalorder %v1053, %v1080
        %vm1103 = vcmp.ge.s32.totalorder %v1053, %v1081
        %vm1104 = vcmp.ge.s32.totalorder %v1054, %v1080
        %vm1105 = vcmp.ge.s32.totalorder %v1054, %v1081
        %vm1106 = vcmp.ge.s32.totalorder %v1055, %v1080
        %vm1107 = vcmp.ge.s32.totalorder %v1055, %v1081
        %vm1108 = vcmp.ge.s32.totalorder %v1056, %v1080
        %vm1109 = vcmp.ge.s32.totalorder %v1056, %v1081
        %vm1110 = vcmp.ge.s32.totalorder %v1057, %v1080
        %vm1111 = vcmp.ge.s32.totalorder %v1057, %v1081
        %vm1112 = vcmp.ge.s32.totalorder %v1058, %v1080
        %vm1113 = vcmp.ge.s32.totalorder %v1058, %v1081
        %vm1114 = vcmp.ge.s32.totalorder %v1059, %v1080
        %vm1115 = vcmp.ge.s32.totalorder %v1059, %v1081
        %vm1116 = vcmp.ge.s32.totalorder %v1060, %v1080
        %vm1117 = vcmp.ge.s32.totalorder %v1060, %v1081
        %vm1118 = vcmp.ge.s32.totalorder %v1061, %v1080
        %vm1119 = vcmp.ge.s32.totalorder %v1061, %v1081
        %vm1120 = vcmp.ge.s32.totalorder %v1062, %v1080
        %vm1121 = vcmp.ge.s32.totalorder %v1062, %v1081
        %vm1122 = vcmp.ge.s32.totalorder %v1063, %v1080
        %vm1123 = vcmp.ge.s32.totalorder %v1063, %v1081
        %vm1124 = vcmp.ge.s32.totalorder %v1064, %v1080
        %vm1125 = vcmp.ge.s32.totalorder %v1064, %v1081
        %vm1126 = vcmp.ge.s32.totalorder %v1065, %v1080
        %vm1127 = vcmp.ge.s32.totalorder %v1065, %v1081
        %vm1128 = vcmp.ge.s32.totalorder %v1066, %v1080
        %vm1129 = vcmp.ge.s32.totalorder %v1066, %v1081
        %vm1130 = vcmp.ge.s32.totalorder %v1067, %v1080
        %vm1131 = vcmp.ge.s32.totalorder %v1067, %v1081
        %vm1132 = vcmp.ge.s32.totalorder %v1068, %v1080
        %vm1133 = vcmp.ge.s32.totalorder %v1068, %v1081
        %vm1134 = vcmp.ge.s32.totalorder %v1069, %v1080
        %vm1135 = vcmp.ge.s32.totalorder %v1069, %v1081
        %vm1136 = vcmp.ge.s32.totalorder %v1070, %v1080
        %vm1137 = vcmp.ge.s32.totalorder %v1070, %v1081
        %vm1138 = vcmp.ge.s32.totalorder %v1071, %v1080
        %vm1139 = vcmp.ge.s32.totalorder %v1071, %v1081
        %vm1140 = vcmp.ge.s32.totalorder %v1072, %v1080
        %vm1141 = vcmp.ge.s32.totalorder %v1072, %v1081
        %vm1142 = vcmp.ge.s32.totalorder %v1073, %v1080
        %vm1143 = vcmp.ge.s32.totalorder %v1073, %v1081
        %vm1144 = vcmp.ge.s32.totalorder %v1074, %v1080
        %vm1145 = vcmp.ge.s32.totalorder %v1074, %v1081
        %v1146 = vsel %vm1082, %v850, -inf
        %v1147 = vsel %vm1083, %v852, -inf
        %v1148 = vsel %vm1084, %v854, -inf
        %v1149 = vsel %vm1085, %v856, -inf
        %v1150 = vsel %vm1086, %v860, -inf
        %v1151 = vsel %vm1087, %v862, -inf
        %v1152 = vsel %vm1088, %v864, -inf
        %v1153 = vsel %vm1089, %v866, -inf
        %v1154 = vsel %vm1090, %v870, -inf
        %v1155 = vsel %vm1091, %v872, -inf
        %v1156 = vsel %vm1092, %v874, -inf
        %v1157 = vsel %vm1093, %v876, -inf
        %v1158 = vsel %vm1094, %v880, -inf
        %v1159 = vsel %vm1095, %v882, -inf
        %v1160 = vsel %vm1096, %v884, -inf
        %v1161 = vsel %vm1097, %v886, -inf
        %v1162 = vsel %vm1098, %v890, -inf
        %v1163 = vsel %vm1099, %v892, -inf
        %v1164 = vsel %vm1100, %v894, -inf
        %v1165 = vsel %vm1101, %v896, -inf
        %v1166 = vsel %vm1102, %v900, -inf
        %v1167 = vsel %vm1103, %v902, -inf
        %v1168 = vsel %vm1104, %v904, -inf
        %v1169 = vsel %vm1105, %v906, -inf
        %v1170 = vsel %vm1106, %v910, -inf
        %v1171 = vsel %vm1107, %v912, -inf
        %v1172 = vsel %vm1108, %v914, -inf
        %v1173 = vsel %vm1109, %v916, -inf
        %v1174 = vsel %vm1110, %v920, -inf
        %v1175 = vsel %vm1111, %v922, -inf
        %v1176 = vsel %vm1112, %v924, -inf
        %v1177 = vsel %vm1113, %v926, -inf
        %v1178 = vsel %vm1114, %v930, -inf
        %v1179 = vsel %vm1115, %v932, -inf
        %v1180 = vsel %vm1116, %v934, -inf
        %v1181 = vsel %vm1117, %v936, -inf
        %v1182 = vsel %vm1118, %v940, -inf
        %v1183 = vsel %vm1119, %v942, -inf
        %v1184 = vsel %vm1120, %v944, -inf
        %v1185 = vsel %vm1121, %v946, -inf
        %v1186 = vsel %vm1122, %v950, -inf
        %v1187 = vsel %vm1123, %v952, -inf
        %v1188 = vsel %vm1124, %v954, -inf
        %v1189 = vsel %vm1125, %v956, -inf
        %v1190 = vsel %vm1126, %v960, -inf
        %v1191 = vsel %vm1127, %v962, -inf
        %v1192 = vsel %vm1128, %v964, -inf
        %v1193 = vsel %vm1129, %v966, -inf
        %v1194 = vsel %vm1130, %v970, -inf
        %v1195 = vsel %vm1131, %v972, -inf
        %v1196 = vsel %vm1132, %v974, -inf
        %v1197 = vsel %vm1133, %v976, -inf
        %v1198 = vsel %vm1134, %v980, -inf
        %v1199 = vsel %vm1135, %v982, -inf
        %v1200 = vsel %vm1136, %v984, -inf
        %v1201 = vsel %vm1137, %v986, -inf
        %v1202 = vsel %vm1138, %v990, -inf
        %v1203 = vsel %vm1139, %v992, -inf
        %v1204 = vsel %vm1140, %v994, -inf
        %v1205 = vsel %vm1141, %v996, -inf
        %v1206 = vsel %vm1142, %v1000, -inf
        %v1207 = vsel %vm1143, %v1002, -inf
        %v1208 = vsel %vm1144, %v1004, -inf
        %v1209 = vsel %vm1145, %v1006, -inf
        %v1210 = vld [vmem:[#allocation2] sm:$0xff]
        %v1211 = vld [vmem:[#allocation2 + $0x8] sm:$0xff]
        %v1212 = vld [vmem:[#allocation2 + $0x10] sm:$0xff]
        %v1213 = vld [vmem:[#allocation2 + $0x18] sm:$0xff]
        %v1214 = vld [vmem:[#allocation2 + $0x20] sm:$0xff]
        %v1215 = vld [vmem:[#allocation2 + $0x28] sm:$0xff]
        %v1216 = vld [vmem:[#allocation2 + $0x30] sm:$0xff]
        %v1217 = vld [vmem:[#allocation2 + $0x38] sm:$0xff]
        %v1218 = vld [vmem:[#allocation2 + $0x40] sm:$0xff]
        %v1219 = vld [vmem:[#allocation2 + $0x48] sm:$0xff]
        %v1220 = vld [vmem:[#allocation2 + $0x50] sm:$0xff]
        %v1221 = vld [vmem:[#allocation2 + $0x58] sm:$0xff]
        %v1222 = vld [vmem:[#allocation2 + $0x60] sm:$0xff]
        %v1223 = vld [vmem:[#allocation2 + $0x68] sm:$0xff]
        %v1224 = vld [vmem:[#allocation2 + $0x70] sm:$0xff]
        %v1225 = vld [vmem:[#allocation2 + $0x78] sm:$0xff]
        %v1226 = vld [vmem:[#allocation2 + $0x80] sm:$0xff]
        %v1227 = vld [vmem:[#allocation2 + $0x88] sm:$0xff]
        %v1228 = vld [vmem:[#allocation2 + $0x90] sm:$0xff]
        %v1229 = vld [vmem:[#allocation2 + $0x98] sm:$0xff]
        %v1230 = vld [vmem:[#allocation2 + $0xa0] sm:$0xff]
        %v1231 = vld [vmem:[#allocation2 + $0xa8] sm:$0xff]
        %v1232 = vld [vmem:[#allocation2 + $0xb0] sm:$0xff]
        %v1233 = vld [vmem:[#allocation2 + $0xb8] sm:$0xff]
        %v1234 = vld [vmem:[#allocation2 + $0xc0] sm:$0xff]
        %v1235 = vld [vmem:[#allocation2 + $0xc8] sm:$0xff]
        %v1236 = vld [vmem:[#allocation2 + $0xd0] sm:$0xff]
        %v1237 = vld [vmem:[#allocation2 + $0xd8] sm:$0xff]
        %v1238 = vld [vmem:[#allocation2 + $0xe0] sm:$0xff]
        %v1239 = vld [vmem:[#allocation2 + $0xe8] sm:$0xff]
        %v1240 = vld [vmem:[#allocation2 + $0xf0] sm:$0xff]
        %v1241 = vld [vmem:[#allocation2 + $0xf8] sm:$0xff]
        %v1242 = vmax.f32 %v1146, %v1147
        %1243 = vmax.xlane.f32.xlu0 %v1242
        %v1244 = vpop.xlane.xlu0 %1243
        %v1245 = vmax.f32 %v1148, %v1149
        %1246 = vmax.xlane.f32.xlu0 %v1245
        %v1247 = vpop.xlane.xlu0 %1246
        %v1248 = vmax.f32 %v1150, %v1151
        %1249 = vmax.xlane.f32.xlu0 %v1248
        %v1250 = vpop.xlane.xlu0 %1249
        %v1251 = vmax.f32 %v1152, %v1153
        %1252 = vmax.xlane.f32.xlu0 %v1251
        %v1253 = vpop.xlane.xlu0 %1252
        %v1254 = vmax.f32 %v1154, %v1155
        %1255 = vmax.xlane.f32.xlu0 %v1254
        %v1256 = vpop.xlane.xlu0 %1255
        %v1257 = vmax.f32 %v1156, %v1157
        %1258 = vmax.xlane.f32.xlu0 %v1257
        %v1259 = vpop.xlane.xlu0 %1258
        %v1260 = vmax.f32 %v1158, %v1159
        %1261 = vmax.xlane.f32.xlu0 %v1260
        %v1262 = vpop.xlane.xlu0 %1261
        %v1263 = vmax.f32 %v1160, %v1161
        %1264 = vmax.xlane.f32.xlu0 %v1263
        %v1265 = vpop.xlane.xlu0 %1264
        %v1266 = vmax.f32 %v1162, %v1163
        %1267 = vmax.xlane.f32.xlu0 %v1266
        %v1268 = vpop.xlane.xlu0 %1267
        %v1269 = vmax.f32 %v1164, %v1165
        %1270 = vmax.xlane.f32.xlu0 %v1269
        %v1271 = vpop.xlane.xlu0 %1270
        %v1272 = vmax.f32 %v1166, %v1167
        %1273 = vmax.xlane.f32.xlu0 %v1272
        %v1274 = vpop.xlane.xlu0 %1273
        %v1275 = vmax.f32 %v1168, %v1169
        %1276 = vmax.xlane.f32.xlu0 %v1275
        %v1277 = vpop.xlane.xlu0 %1276
        %v1278 = vmax.f32 %v1170, %v1171
        %1279 = vmax.xlane.f32.xlu0 %v1278
        %v1280 = vpop.xlane.xlu0 %1279
        %v1281 = vmax.f32 %v1172, %v1173
        %1282 = vmax.xlane.f32.xlu0 %v1281
        %v1283 = vpop.xlane.xlu0 %1282
        %v1284 = vmax.f32 %v1174, %v1175
        %1285 = vmax.xlane.f32.xlu0 %v1284
        %v1286 = vpop.xlane.xlu0 %1285
        %v1287 = vmax.f32 %v1176, %v1177
        %1288 = vmax.xlane.f32.xlu0 %v1287
        %v1289 = vpop.xlane.xlu0 %1288
        %v1290 = vmax.f32 %v1178, %v1179
        %1291 = vmax.xlane.f32.xlu0 %v1290
        %v1292 = vpop.xlane.xlu0 %1291
        %v1293 = vmax.f32 %v1180, %v1181
        %1294 = vmax.xlane.f32.xlu0 %v1293
        %v1295 = vpop.xlane.xlu0 %1294
        %v1296 = vmax.f32 %v1182, %v1183
        %1297 = vmax.xlane.f32.xlu0 %v1296
        %v1298 = vpop.xlane.xlu0 %1297
        %v1299 = vmax.f32 %v1184, %v1185
        %1300 = vmax.xlane.f32.xlu0 %v1299
        %v1301 = vpop.xlane.xlu0 %1300
        %v1302 = vmax.f32 %v1186, %v1187
        %1303 = vmax.xlane.f32.xlu0 %v1302
        %v1304 = vpop.xlane.xlu0 %1303
        %v1305 = vmax.f32 %v1188, %v1189
        %1306 = vmax.xlane.f32.xlu0 %v1305
        %v1307 = vpop.xlane.xlu0 %1306
        %v1308 = vmax.f32 %v1190, %v1191
        %1309 = vmax.xlane.f32.xlu0 %v1308
        %v1310 = vpop.xlane.xlu0 %1309
        %v1311 = vmax.f32 %v1192, %v1193
        %1312 = vmax.xlane.f32.xlu0 %v1311
        %v1313 = vpop.xlane.xlu0 %1312
        %v1314 = vmax.f32 %v1194, %v1195
        %1315 = vmax.xlane.f32.xlu0 %v1314
        %v1316 = vpop.xlane.xlu0 %1315
        %v1317 = vmax.f32 %v1196, %v1197
        %1318 = vmax.xlane.f32.xlu0 %v1317
        %v1319 = vpop.xlane.xlu0 %1318
        %v1320 = vmax.f32 %v1198, %v1199
        %1321 = vmax.xlane.f32.xlu0 %v1320
        %v1322 = vpop.xlane.xlu0 %1321
        %v1323 = vmax.f32 %v1200, %v1201
        %1324 = vmax.xlane.f32.xlu0 %v1323
        %v1325 = vpop.xlane.xlu0 %1324
        %v1326 = vmax.f32 %v1202, %v1203
        %1327 = vmax.xlane.f32.xlu0 %v1326
        %v1328 = vpop.xlane.xlu0 %1327
        %v1329 = vmax.f32 %v1204, %v1205
        %1330 = vmax.xlane.f32.xlu0 %v1329
        %v1331 = vpop.xlane.xlu0 %1330
        %v1332 = vmax.f32 %v1206, %v1207
        %1333 = vmax.xlane.f32.xlu0 %v1332
        %v1334 = vpop.xlane.xlu0 %1333
        %v1335 = vmax.f32 %v1208, %v1209
        %1336 = vmax.xlane.f32.xlu0 %v1335
        %v1337 = vpop.xlane.xlu0 %1336
        %v1338 = vmax.f32 %v1210, %v1244
        %v1339 = vmax.f32 %v1211, %v1247
        %v1340 = vmax.f32 %v1212, %v1250
        %v1341 = vmax.f32 %v1213, %v1253
        %v1342 = vmax.f32 %v1214, %v1256
        %v1343 = vmax.f32 %v1215, %v1259
        %v1344 = vmax.f32 %v1216, %v1262
        %v1345 = vmax.f32 %v1217, %v1265
        %v1346 = vmax.f32 %v1218, %v1268
        %v1347 = vmax.f32 %v1219, %v1271
        %v1348 = vmax.f32 %v1220, %v1274
        %v1349 = vmax.f32 %v1221, %v1277
        %v1350 = vmax.f32 %v1222, %v1280
        %v1351 = vmax.f32 %v1223, %v1283
        %v1352 = vmax.f32 %v1224, %v1286
        %v1353 = vmax.f32 %v1225, %v1289
        %v1354 = vmax.f32 %v1226, %v1292
        %v1355 = vmax.f32 %v1227, %v1295
        %v1356 = vmax.f32 %v1228, %v1298
        %v1357 = vmax.f32 %v1229, %v1301
        %v1358 = vmax.f32 %v1230, %v1304
        %v1359 = vmax.f32 %v1231, %v1307
        %v1360 = vmax.f32 %v1232, %v1310
        %v1361 = vmax.f32 %v1233, %v1313
        %v1362 = vmax.f32 %v1234, %v1316
        %v1363 = vmax.f32 %v1235, %v1319
        %v1364 = vmax.f32 %v1236, %v1322
        %v1365 = vmax.f32 %v1237, %v1325
        %v1366 = vmax.f32 %v1238, %v1328
        %v1367 = vmax.f32 %v1239, %v1331
        %v1368 = vmax.f32 %v1240, %v1334
        %v1369 = vmax.f32 %v1241, %v1337
        %v1370 = vsub.f32 %v1210, %v1338
        %v1371 = vsub.f32 %v1211, %v1339
        %v1372 = vsub.f32 %v1212, %v1340
        %v1373 = vsub.f32 %v1213, %v1341
        %v1374 = vsub.f32 %v1214, %v1342
        %v1375 = vsub.f32 %v1215, %v1343
        %v1376 = vsub.f32 %v1216, %v1344
        %v1377 = vsub.f32 %v1217, %v1345
        %v1378 = vsub.f32 %v1218, %v1346
        %v1379 = vsub.f32 %v1219, %v1347
        %v1380 = vsub.f32 %v1220, %v1348
        %v1381 = vsub.f32 %v1221, %v1349
        %v1382 = vsub.f32 %v1222, %v1350
        %v1383 = vsub.f32 %v1223, %v1351
        %v1384 = vsub.f32 %v1224, %v1352
        %v1385 = vsub.f32 %v1225, %v1353
        %v1386 = vsub.f32 %v1226, %v1354
        %v1387 = vsub.f32 %v1227, %v1355
        %v1388 = vsub.f32 %v1228, %v1356
        %v1389 = vsub.f32 %v1229, %v1357
        %v1390 = vsub.f32 %v1230, %v1358
        %v1391 = vsub.f32 %v1231, %v1359
        %v1392 = vsub.f32 %v1232, %v1360
        %v1393 = vsub.f32 %v1233, %v1361
        %v1394 = vsub.f32 %v1234, %v1362
        %v1395 = vsub.f32 %v1235, %v1363
        %v1396 = vsub.f32 %v1236, %v1364
        %v1397 = vsub.f32 %v1237, %v1365
        %v1398 = vsub.f32 %v1238, %v1366
        %v1399 = vsub.f32 %v1239, %v1367
        %v1400 = vsub.f32 %v1240, %v1368
        %v1401 = vsub.f32 %v1241, %v1369
        %v1402 = vmul.f32 %v1370, 1.442695
        %v1403 = vpow.pop %v1402
        %v1404 = vmul.f32 %v1371, 1.442695
        %v1405 = vpow.pop %v1404
        %v1406 = vmul.f32 %v1372, 1.442695
        %v1407 = vpow.pop %v1406
        %v1408 = vmul.f32 %v1373, 1.442695
        %v1409 = vpow.pop %v1408
        %v1410 = vmul.f32 %v1374, 1.442695
        %v1411 = vpow.pop %v1410
        %v1412 = vmul.f32 %v1375, 1.442695
        %v1413 = vpow.pop %v1412
        %v1414 = vmul.f32 %v1376, 1.442695
        %v1415 = vpow.pop %v1414
        %v1416 = vmul.f32 %v1377, 1.442695
        %v1417 = vpow.pop %v1416
        %v1418 = vmul.f32 %v1378, 1.442695
        %v1419 = vpow.pop %v1418
        %v1420 = vmul.f32 %v1379, 1.442695
        %v1421 = vpow.pop %v1420
        %v1422 = vmul.f32 %v1380, 1.442695
        %v1423 = vpow.pop %v1422
        %v1424 = vmul.f32 %v1381, 1.442695
        %v1425 = vpow.pop %v1424
        %v1426 = vmul.f32 %v1382, 1.442695
        %v1427 = vpow.pop %v1426
        %v1428 = vmul.f32 %v1383, 1.442695
        %v1429 = vpow.pop %v1428
        %v1430 = vmul.f32 %v1384, 1.442695
        %v1431 = vpow.pop %v1430
        %v1432 = vmul.f32 %v1385, 1.442695
        %v1433 = vpow.pop %v1432
        %v1434 = vmul.f32 %v1386, 1.442695
        %v1435 = vpow.pop %v1434
        %v1436 = vmul.f32 %v1387, 1.442695
        %v1437 = vpow.pop %v1436
        %v1438 = vmul.f32 %v1388, 1.442695
        %v1439 = vpow.pop %v1438
        %v1440 = vmul.f32 %v1389, 1.442695
        %v1441 = vpow.pop %v1440
        %v1442 = vmul.f32 %v1390, 1.442695
        %v1443 = vpow.pop %v1442
        %v1444 = vmul.f32 %v1391, 1.442695
        %v1445 = vpow.pop %v1444
        %v1446 = vmul.f32 %v1392, 1.442695
        %v1447 = vpow.pop %v1446
        %v1448 = vmul.f32 %v1393, 1.442695
        %v1449 = vpow.pop %v1448
        %v1450 = vmul.f32 %v1394, 1.442695
        %v1451 = vpow.pop %v1450
        %v1452 = vmul.f32 %v1395, 1.442695
        %v1453 = vpow.pop %v1452
        %v1454 = vmul.f32 %v1396, 1.442695
        %v1455 = vpow.pop %v1454
        %v1456 = vmul.f32 %v1397, 1.442695
        %v1457 = vpow.pop %v1456
        %v1458 = vmul.f32 %v1398, 1.442695
        %v1459 = vpow.pop %v1458
        %v1460 = vmul.f32 %v1399, 1.442695
        %v1461 = vpow.pop %v1460
        %v1462 = vmul.f32 %v1400, 1.442695
        %v1463 = vpow.pop %v1462
        %v1464 = vmul.f32 %v1401, 1.442695
        %v1465 = vpow.pop %v1464
        %1467 = vset.pattern.permute.xlu0 0
        %1468 = vperm.xlu0 %1467, %v1338
        %v1469 = vpop.permute.xlu0 %1468
        %1472 = vset.pattern.permute.xlu0 0
        %1473 = vperm.xlu0 %1472, %v1339
        %v1474 = vpop.permute.xlu0 %1473
        %1477 = vset.pattern.permute.xlu0 0
        %1478 = vperm.xlu0 %1477, %v1340
        %v1479 = vpop.permute.xlu0 %1478
        %1482 = vset.pattern.permute.xlu0 0
        %1483 = vperm.xlu0 %1482, %v1341
        %v1484 = vpop.permute.xlu0 %1483
        %1487 = vset.pattern.permute.xlu0 0
        %1488 = vperm.xlu0 %1487, %v1342
        %v1489 = vpop.permute.xlu0 %1488
        %1492 = vset.pattern.permute.xlu0 0
        %1493 = vperm.xlu0 %1492, %v1343
        %v1494 = vpop.permute.xlu0 %1493
        %1497 = vset.pattern.permute.xlu0 0
        %1498 = vperm.xlu0 %1497, %v1344
        %v1499 = vpop.permute.xlu0 %1498
        %1502 = vset.pattern.permute.xlu0 0
        %1503 = vperm.xlu0 %1502, %v1345
        %v1504 = vpop.permute.xlu0 %1503
        %1507 = vset.pattern.permute.xlu0 0
        %1508 = vperm.xlu0 %1507, %v1346
        %v1509 = vpop.permute.xlu0 %1508
        %1512 = vset.pattern.permute.xlu0 0
        %1513 = vperm.xlu0 %1512, %v1347
        %v1514 = vpop.permute.xlu0 %1513
        %1517 = vset.pattern.permute.xlu0 0
        %1518 = vperm.xlu0 %1517, %v1348
        %v1519 = vpop.permute.xlu0 %1518
        %1522 = vset.pattern.permute.xlu0 0
        %1523 = vperm.xlu0 %1522, %v1349
        %v1524 = vpop.permute.xlu0 %1523
        %1527 = vset.pattern.permute.xlu0 0
        %1528 = vperm.xlu0 %1527, %v1350
        %v1529 = vpop.permute.xlu0 %1528
        %1532 = vset.pattern.permute.xlu0 0
        %1533 = vperm.xlu0 %1532, %v1351
        %v1534 = vpop.permute.xlu0 %1533
        %1537 = vset.pattern.permute.xlu0 0
        %1538 = vperm.xlu0 %1537, %v1352
        %v1539 = vpop.permute.xlu0 %1538
        %1542 = vset.pattern.permute.xlu0 0
        %1543 = vperm.xlu0 %1542, %v1353
        %v1544 = vpop.permute.xlu0 %1543
        %1547 = vset.pattern.permute.xlu0 0
        %1548 = vperm.xlu0 %1547, %v1354
        %v1549 = vpop.permute.xlu0 %1548
        %1552 = vset.pattern.permute.xlu0 0
        %1553 = vperm.xlu0 %1552, %v1355
        %v1554 = vpop.permute.xlu0 %1553
        %1557 = vset.pattern.permute.xlu0 0
        %1558 = vperm.xlu0 %1557, %v1356
        %v1559 = vpop.permute.xlu0 %1558
        %1562 = vset.pattern.permute.xlu0 0
        %1563 = vperm.xlu0 %1562, %v1357
        %v1564 = vpop.permute.xlu0 %1563
        %1567 = vset.pattern.permute.xlu0 0
        %1568 = vperm.xlu0 %1567, %v1358
        %v1569 = vpop.permute.xlu0 %1568
        %1572 = vset.pattern.permute.xlu0 0
        %1573 = vperm.xlu0 %1572, %v1359
        %v1574 = vpop.permute.xlu0 %1573
        %1577 = vset.pattern.permute.xlu0 0
        %1578 = vperm.xlu0 %1577, %v1360
        %v1579 = vpop.permute.xlu0 %1578
        %1582 = vset.pattern.permute.xlu0 0
        %1583 = vperm.xlu0 %1582, %v1361
        %v1584 = vpop.permute.xlu0 %1583
        %1587 = vset.pattern.permute.xlu0 0
        %1588 = vperm.xlu0 %1587, %v1362
        %v1589 = vpop.permute.xlu0 %1588
        %1592 = vset.pattern.permute.xlu0 0
        %1593 = vperm.xlu0 %1592, %v1363
        %v1594 = vpop.permute.xlu0 %1593
        %1597 = vset.pattern.permute.xlu0 0
        %1598 = vperm.xlu0 %1597, %v1364
        %v1599 = vpop.permute.xlu0 %1598
        %1602 = vset.pattern.permute.xlu0 0
        %1603 = vperm.xlu0 %1602, %v1365
        %v1604 = vpop.permute.xlu0 %1603
        %1607 = vset.pattern.permute.xlu0 0
        %1608 = vperm.xlu0 %1607, %v1366
        %v1609 = vpop.permute.xlu0 %1608
        %1612 = vset.pattern.permute.xlu0 0
        %1613 = vperm.xlu0 %1612, %v1367
        %v1614 = vpop.permute.xlu0 %1613
        %1617 = vset.pattern.permute.xlu0 0
        %1618 = vperm.xlu0 %1617, %v1368
        %v1619 = vpop.permute.xlu0 %1618
        %1622 = vset.pattern.permute.xlu0 0
        %1623 = vperm.xlu0 %1622, %v1369
        %v1624 = vpop.permute.xlu0 %1623
        %v1626 = vsub.f32 %v1146, %v1469
        %v1627 = vsub.f32 %v1147, %v1469
        %v1628 = vsub.f32 %v1148, %v1474
        %v1629 = vsub.f32 %v1149, %v1474
        %v1630 = vsub.f32 %v1150, %v1479
        %v1631 = vsub.f32 %v1151, %v1479
        %v1632 = vsub.f32 %v1152, %v1484
        %v1633 = vsub.f32 %v1153, %v1484
        %v1634 = vsub.f32 %v1154, %v1489
        %v1635 = vsub.f32 %v1155, %v1489
        %v1636 = vsub.f32 %v1156, %v1494
        %v1637 = vsub.f32 %v1157, %v1494
        %v1638 = vsub.f32 %v1158, %v1499
        %v1639 = vsub.f32 %v1159, %v1499
        %v1640 = vsub.f32 %v1160, %v1504
        %v1641 = vsub.f32 %v1161, %v1504
        %v1642 = vsub.f32 %v1162, %v1509
        %v1643 = vsub.f32 %v1163, %v1509
        %v1644 = vsub.f32 %v1164, %v1514
        %v1645 = vsub.f32 %v1165, %v1514
        %v1646 = vsub.f32 %v1166, %v1519
        %v1647 = vsub.f32 %v1167, %v1519
        %v1648 = vsub.f32 %v1168, %v1524
        %v1649 = vsub.f32 %v1169, %v1524
        %v1650 = vsub.f32 %v1170, %v1529
        %v1651 = vsub.f32 %v1171, %v1529
        %v1652 = vsub.f32 %v1172, %v1534
        %v1653 = vsub.f32 %v1173, %v1534
        %v1654 = vsub.f32 %v1174, %v1539
        %v1655 = vsub.f32 %v1175, %v1539
        %v1656 = vsub.f32 %v1176, %v1544
        %v1657 = vsub.f32 %v1177, %v1544
        %v1658 = vsub.f32 %v1178, %v1549
        %v1659 = vsub.f32 %v1179, %v1549
        %v1660 = vsub.f32 %v1180, %v1554
        %v1661 = vsub.f32 %v1181, %v1554
        %v1662 = vsub.f32 %v1182, %v1559
        %v1663 = vsub.f32 %v1183, %v1559
        %v1664 = vsub.f32 %v1184, %v1564
        %v1665 = vsub.f32 %v1185, %v1564
        %v1666 = vsub.f32 %v1186, %v1569
        %v1667 = vsub.f32 %v1187, %v1569
        %v1668 = vsub.f32 %v1188, %v1574
        %v1669 = vsub.f32 %v1189, %v1574
        %v1670 = vsub.f32 %v1190, %v1579
        %v1671 = vsub.f32 %v1191, %v1579
        %v1672 = vsub.f32 %v1192, %v1584
        %v1673 = vsub.f32 %v1193, %v1584
        %v1674 = vsub.f32 %v1194, %v1589
        %v1675 = vsub.f32 %v1195, %v1589
        %v1676 = vsub.f32 %v1196, %v1594
        %v1677 = vsub.f32 %v1197, %v1594
        %v1678 = vsub.f32 %v1198, %v1599
        %v1679 = vsub.f32 %v1199, %v1599
        %v1680 = vsub.f32 %v1200, %v1604
        %v1681 = vsub.f32 %v1201, %v1604
        %v1682 = vsub.f32 %v1202, %v1609
        %v1683 = vsub.f32 %v1203, %v1609
        %v1684 = vsub.f32 %v1204, %v1614
        %v1685 = vsub.f32 %v1205, %v1614
        %v1686 = vsub.f32 %v1206, %v1619
        %v1687 = vsub.f32 %v1207, %v1619
        %v1688 = vsub.f32 %v1208, %v1624
        %v1689 = vsub.f32 %v1209, %v1624
        %v1690 = vmul.f32 %v1626, 1.442695
        %v1691 = vpow.pop %v1690
        %v1692 = vmul.f32 %v1627, 1.442695
        %v1693 = vpow.pop %v1692
        %v1694 = vmul.f32 %v1628, 1.442695
        %v1695 = vpow.pop %v1694
        %v1696 = vmul.f32 %v1629, 1.442695
        %v1697 = vpow.pop %v1696
        %v1698 = vmul.f32 %v1630, 1.442695
        %v1699 = vpow.pop %v1698
        %v1700 = vmul.f32 %v1631, 1.442695
        %v1701 = vpow.pop %v1700
        %v1702 = vmul.f32 %v1632, 1.442695
        %v1703 = vpow.pop %v1702
        %v1704 = vmul.f32 %v1633, 1.442695
        %v1705 = vpow.pop %v1704
        %v1706 = vmul.f32 %v1634, 1.442695
        %v1707 = vpow.pop %v1706
        %v1708 = vmul.f32 %v1635, 1.442695
        %v1709 = vpow.pop %v1708
        %v1710 = vmul.f32 %v1636, 1.442695
        %v1711 = vpow.pop %v1710
        %v1712 = vmul.f32 %v1637, 1.442695
        %v1713 = vpow.pop %v1712
        %v1714 = vmul.f32 %v1638, 1.442695
        %v1715 = vpow.pop %v1714
        %v1716 = vmul.f32 %v1639, 1.442695
        %v1717 = vpow.pop %v1716
        %v1718 = vmul.f32 %v1640, 1.442695
        %v1719 = vpow.pop %v1718
        %v1720 = vmul.f32 %v1641, 1.442695
        %v1721 = vpow.pop %v1720
        %v1722 = vmul.f32 %v1642, 1.442695
        %v1723 = vpow.pop %v1722
        %v1724 = vmul.f32 %v1643, 1.442695
        %v1725 = vpow.pop %v1724
        %v1726 = vmul.f32 %v1644, 1.442695
        %v1727 = vpow.pop %v1726
        %v1728 = vmul.f32 %v1645, 1.442695
        %v1729 = vpow.pop %v1728
        %v1730 = vmul.f32 %v1646, 1.442695
        %v1731 = vpow.pop %v1730
        %v1732 = vmul.f32 %v1647, 1.442695
        %v1733 = vpow.pop %v1732
        %v1734 = vmul.f32 %v1648, 1.442695
        %v1735 = vpow.pop %v1734
        %v1736 = vmul.f32 %v1649, 1.442695
        %v1737 = vpow.pop %v1736
        %v1738 = vmul.f32 %v1650, 1.442695
        %v1739 = vpow.pop %v1738
        %v1740 = vmul.f32 %v1651, 1.442695
        %v1741 = vpow.pop %v1740
        %v1742 = vmul.f32 %v1652, 1.442695
        %v1743 = vpow.pop %v1742
        %v1744 = vmul.f32 %v1653, 1.442695
        %v1745 = vpow.pop %v1744
        %v1746 = vmul.f32 %v1654, 1.442695
        %v1747 = vpow.pop %v1746
        %v1748 = vmul.f32 %v1655, 1.442695
        %v1749 = vpow.pop %v1748
        %v1750 = vmul.f32 %v1656, 1.442695
        %v1751 = vpow.pop %v1750
        %v1752 = vmul.f32 %v1657, 1.442695
        %v1753 = vpow.pop %v1752
        %v1754 = vmul.f32 %v1658, 1.442695
        %v1755 = vpow.pop %v1754
        %v1756 = vmul.f32 %v1659, 1.442695
        %v1757 = vpow.pop %v1756
        %v1758 = vmul.f32 %v1660, 1.442695
        %v1759 = vpow.pop %v1758
        %v1760 = vmul.f32 %v1661, 1.442695
        %v1761 = vpow.pop %v1760
        %v1762 = vmul.f32 %v1662, 1.442695
        %v1763 = vpow.pop %v1762
        %v1764 = vmul.f32 %v1663, 1.442695
        %v1765 = vpow.pop %v1764
        %v1766 = vmul.f32 %v1664, 1.442695
        %v1767 = vpow.pop %v1766
        %v1768 = vmul.f32 %v1665, 1.442695
        %v1769 = vpow.pop %v1768
        %v1770 = vmul.f32 %v1666, 1.442695
        %v1771 = vpow.pop %v1770
        %v1772 = vmul.f32 %v1667, 1.442695
        %v1773 = vpow.pop %v1772
        %v1774 = vmul.f32 %v1668, 1.442695
        %v1775 = vpow.pop %v1774
        %v1776 = vmul.f32 %v1669, 1.442695
        %v1777 = vpow.pop %v1776
        %v1778 = vmul.f32 %v1670, 1.442695
        %v1779 = vpow.pop %v1778
        %v1780 = vmul.f32 %v1671, 1.442695
        %v1781 = vpow.pop %v1780
        %v1782 = vmul.f32 %v1672, 1.442695
        %v1783 = vpow.pop %v1782
        %v1784 = vmul.f32 %v1673, 1.442695
        %v1785 = vpow.pop %v1784
        %v1786 = vmul.f32 %v1674, 1.442695
        %v1787 = vpow.pop %v1786
        %v1788 = vmul.f32 %v1675, 1.442695
        %v1789 = vpow.pop %v1788
        %v1790 = vmul.f32 %v1676, 1.442695
        %v1791 = vpow.pop %v1790
        %v1792 = vmul.f32 %v1677, 1.442695
        %v1793 = vpow.pop %v1792
        %v1794 = vmul.f32 %v1678, 1.442695
        %v1795 = vpow.pop %v1794
        %v1796 = vmul.f32 %v1679, 1.442695
        %v1797 = vpow.pop %v1796
        %v1798 = vmul.f32 %v1680, 1.442695
        %v1799 = vpow.pop %v1798
        %v1800 = vmul.f32 %v1681, 1.442695
        %v1801 = vpow.pop %v1800
        %v1802 = vmul.f32 %v1682, 1.442695
        %v1803 = vpow.pop %v1802
        %v1804 = vmul.f32 %v1683, 1.442695
        %v1805 = vpow.pop %v1804
        %v1806 = vmul.f32 %v1684, 1.442695
        %v1807 = vpow.pop %v1806
        %v1808 = vmul.f32 %v1685, 1.442695
        %v1809 = vpow.pop %v1808
        %v1810 = vmul.f32 %v1686, 1.442695
        %v1811 = vpow.pop %v1810
        %v1812 = vmul.f32 %v1687, 1.442695
        %v1813 = vpow.pop %v1812
        %v1814 = vmul.f32 %v1688, 1.442695
        %v1815 = vpow.pop %v1814
        %v1816 = vmul.f32 %v1689, 1.442695
        %v1817 = vpow.pop %v1816
        %v1818 = vld [vmem:[#allocation3] sm:$0xff]
        %v1819 = vld [vmem:[#allocation3 + $0x8] sm:$0xff]
        %v1820 = vld [vmem:[#allocation3 + $0x10] sm:$0xff]
        %v1821 = vld [vmem:[#allocation3 + $0x18] sm:$0xff]
        %v1822 = vld [vmem:[#allocation3 + $0x20] sm:$0xff]
        %v1823 = vld [vmem:[#allocation3 + $0x28] sm:$0xff]
        %v1824 = vld [vmem:[#allocation3 + $0x30] sm:$0xff]
        %v1825 = vld [vmem:[#allocation3 + $0x38] sm:$0xff]
        %v1826 = vld [vmem:[#allocation3 + $0x40] sm:$0xff]
        %v1827 = vld [vmem:[#allocation3 + $0x48] sm:$0xff]
        %v1828 = vld [vmem:[#allocation3 + $0x50] sm:$0xff]
        %v1829 = vld [vmem:[#allocation3 + $0x58] sm:$0xff]
        %v1830 = vld [vmem:[#allocation3 + $0x60] sm:$0xff]
        %v1831 = vld [vmem:[#allocation3 + $0x68] sm:$0xff]
        %v1832 = vld [vmem:[#allocation3 + $0x70] sm:$0xff]
        %v1833 = vld [vmem:[#allocation3 + $0x78] sm:$0xff]
        %v1834 = vld [vmem:[#allocation3 + $0x80] sm:$0xff]
        %v1835 = vld [vmem:[#allocation3 + $0x88] sm:$0xff]
        %v1836 = vld [vmem:[#allocation3 + $0x90] sm:$0xff]
        %v1837 = vld [vmem:[#allocation3 + $0x98] sm:$0xff]
        %v1838 = vld [vmem:[#allocation3 + $0xa0] sm:$0xff]
        %v1839 = vld [vmem:[#allocation3 + $0xa8] sm:$0xff]
        %v1840 = vld [vmem:[#allocation3 + $0xb0] sm:$0xff]
        %v1841 = vld [vmem:[#allocation3 + $0xb8] sm:$0xff]
        %v1842 = vld [vmem:[#allocation3 + $0xc0] sm:$0xff]
        %v1843 = vld [vmem:[#allocation3 + $0xc8] sm:$0xff]
        %v1844 = vld [vmem:[#allocation3 + $0xd0] sm:$0xff]
        %v1845 = vld [vmem:[#allocation3 + $0xd8] sm:$0xff]
        %v1846 = vld [vmem:[#allocation3 + $0xe0] sm:$0xff]
        %v1847 = vld [vmem:[#allocation3 + $0xe8] sm:$0xff]
        %v1848 = vld [vmem:[#allocation3 + $0xf0] sm:$0xff]
        %v1849 = vld [vmem:[#allocation3 + $0xf8] sm:$0xff]
        %v1850 = vmul.f32 %v1403, %v1818
        %v1851 = vmul.f32 %v1405, %v1819
        %v1852 = vmul.f32 %v1407, %v1820
        %v1853 = vmul.f32 %v1409, %v1821
        %v1854 = vmul.f32 %v1411, %v1822
        %v1855 = vmul.f32 %v1413, %v1823
        %v1856 = vmul.f32 %v1415, %v1824
        %v1857 = vmul.f32 %v1417, %v1825
        %v1858 = vmul.f32 %v1419, %v1826
        %v1859 = vmul.f32 %v1421, %v1827
        %v1860 = vmul.f32 %v1423, %v1828
        %v1861 = vmul.f32 %v1425, %v1829
        %v1862 = vmul.f32 %v1427, %v1830
        %v1863 = vmul.f32 %v1429, %v1831
        %v1864 = vmul.f32 %v1431, %v1832
        %v1865 = vmul.f32 %v1433, %v1833
        %v1866 = vmul.f32 %v1435, %v1834
        %v1867 = vmul.f32 %v1437, %v1835
        %v1868 = vmul.f32 %v1439, %v1836
        %v1869 = vmul.f32 %v1441, %v1837
        %v1870 = vmul.f32 %v1443, %v1838
        %v1871 = vmul.f32 %v1445, %v1839
        %v1872 = vmul.f32 %v1447, %v1840
        %v1873 = vmul.f32 %v1449, %v1841
        %v1874 = vmul.f32 %v1451, %v1842
        %v1875 = vmul.f32 %v1453, %v1843
        %v1876 = vmul.f32 %v1455, %v1844
        %v1877 = vmul.f32 %v1457, %v1845
        %v1878 = vmul.f32 %v1459, %v1846
        %v1879 = vmul.f32 %v1461, %v1847
        %v1880 = vmul.f32 %v1463, %v1848
        %v1881 = vmul.f32 %v1465, %v1849
        %v1882 = vadd.f32 %v1691, %v1693
        %1883 = vadd.xlane.f32.xlu0 %v1882
        %v1884 = vpop.xlane.xlu0 %1883
        %v1885 = vadd.f32 %v1695, %v1697
        %1886 = vadd.xlane.f32.xlu0 %v1885
        %v1887 = vpop.xlane.xlu0 %1886
        %v1888 = vadd.f32 %v1699, %v1701
        %1889 = vadd.xlane.f32.xlu0 %v1888
        %v1890 = vpop.xlane.xlu0 %1889
        %v1891 = vadd.f32 %v1703, %v1705
        %1892 = vadd.xlane.f32.xlu0 %v1891
        %v1893 = vpop.xlane.xlu0 %1892
        %v1894 = vadd.f32 %v1707, %v1709
        %1895 = vadd.xlane.f32.xlu0 %v1894
        %v1896 = vpop.xlane.xlu0 %1895
        %v1897 = vadd.f32 %v1711, %v1713
        %1898 = vadd.xlane.f32.xlu0 %v1897
        %v1899 = vpop.xlane.xlu0 %1898
        %v1900 = vadd.f32 %v1715, %v1717
        %1901 = vadd.xlane.f32.xlu0 %v1900
        %v1902 = vpop.xlane.xlu0 %1901
        %v1903 = vadd.f32 %v1719, %v1721
        %1904 = vadd.xlane.f32.xlu0 %v1903
        %v1905 = vpop.xlane.xlu0 %1904
        %v1906 = vadd.f32 %v1723, %v1725
        %1907 = vadd.xlane.f32.xlu0 %v1906
        %v1908 = vpop.xlane.xlu0 %1907
        %v1909 = vadd.f32 %v1727, %v1729
        %1910 = vadd.xlane.f32.xlu0 %v1909
        %v1911 = vpop.xlane.xlu0 %1910
        %v1912 = vadd.f32 %v1731, %v1733
        %1913 = vadd.xlane.f32.xlu0 %v1912
        %v1914 = vpop.xlane.xlu0 %1913
        %v1915 = vadd.f32 %v1735, %v1737
        %1916 = vadd.xlane.f32.xlu0 %v1915
        %v1917 = vpop.xlane.xlu0 %1916
        %v1918 = vadd.f32 %v1739, %v1741
        %1919 = vadd.xlane.f32.xlu0 %v1918
        %v1920 = vpop.xlane.xlu0 %1919
        %v1921 = vadd.f32 %v1743, %v1745
        %1922 = vadd.xlane.f32.xlu0 %v1921
        %v1923 = vpop.xlane.xlu0 %1922
        %v1924 = vadd.f32 %v1747, %v1749
        %1925 = vadd.xlane.f32.xlu0 %v1924
        %v1926 = vpop.xlane.xlu0 %1925
        %v1927 = vadd.f32 %v1751, %v1753
        %1928 = vadd.xlane.f32.xlu0 %v1927
        %v1929 = vpop.xlane.xlu0 %1928
        %v1930 = vadd.f32 %v1755, %v1757
        %1931 = vadd.xlane.f32.xlu0 %v1930
        %v1932 = vpop.xlane.xlu0 %1931
        %v1933 = vadd.f32 %v1759, %v1761
        %1934 = vadd.xlane.f32.xlu0 %v1933
        %v1935 = vpop.xlane.xlu0 %1934
        %v1936 = vadd.f32 %v1763, %v1765
        %1937 = vadd.xlane.f32.xlu0 %v1936
        %v1938 = vpop.xlane.xlu0 %1937
        %v1939 = vadd.f32 %v1767, %v1769
        %1940 = vadd.xlane.f32.xlu0 %v1939
        %v1941 = vpop.xlane.xlu0 %1940
        %v1942 = vadd.f32 %v1771, %v1773
        %1943 = vadd.xlane.f32.xlu0 %v1942
        %v1944 = vpop.xlane.xlu0 %1943
        %v1945 = vadd.f32 %v1775, %v1777
        %1946 = vadd.xlane.f32.xlu0 %v1945
        %v1947 = vpop.xlane.xlu0 %1946
        %v1948 = vadd.f32 %v1779, %v1781
        %1949 = vadd.xlane.f32.xlu0 %v1948
        %v1950 = vpop.xlane.xlu0 %1949
        %v1951 = vadd.f32 %v1783, %v1785
        %1952 = vadd.xlane.f32.xlu0 %v1951
        %v1953 = vpop.xlane.xlu0 %1952
        %v1954 = vadd.f32 %v1787, %v1789
        %1955 = vadd.xlane.f32.xlu0 %v1954
        %v1956 = vpop.xlane.xlu0 %1955
        %v1957 = vadd.f32 %v1791, %v1793
        %1958 = vadd.xlane.f32.xlu0 %v1957
        %v1959 = vpop.xlane.xlu0 %1958
        %v1960 = vadd.f32 %v1795, %v1797
        %1961 = vadd.xlane.f32.xlu0 %v1960
        %v1962 = vpop.xlane.xlu0 %1961
        %v1963 = vadd.f32 %v1799, %v1801
        %1964 = vadd.xlane.f32.xlu0 %v1963
        %v1965 = vpop.xlane.xlu0 %1964
        %v1966 = vadd.f32 %v1803, %v1805
        %1967 = vadd.xlane.f32.xlu0 %v1966
        %v1968 = vpop.xlane.xlu0 %1967
        %v1969 = vadd.f32 %v1807, %v1809
        %1970 = vadd.xlane.f32.xlu0 %v1969
        %v1971 = vpop.xlane.xlu0 %1970
        %v1972 = vadd.f32 %v1811, %v1813
        %1973 = vadd.xlane.f32.xlu0 %v1972
        %v1974 = vpop.xlane.xlu0 %1973
        %v1975 = vadd.f32 %v1815, %v1817
        %1976 = vadd.xlane.f32.xlu0 %v1975
        %v1977 = vpop.xlane.xlu0 %1976
        %v1978 = vadd.f32 %v1850, %v1884
        %v1979 = vadd.f32 %v1851, %v1887
        %v1980 = vadd.f32 %v1852, %v1890
        %v1981 = vadd.f32 %v1853, %v1893
        %v1982 = vadd.f32 %v1854, %v1896
        %v1983 = vadd.f32 %v1855, %v1899
        %v1984 = vadd.f32 %v1856, %v1902
        %v1985 = vadd.f32 %v1857, %v1905
        %v1986 = vadd.f32 %v1858, %v1908
        %v1987 = vadd.f32 %v1859, %v1911
        %v1988 = vadd.f32 %v1860, %v1914
        %v1989 = vadd.f32 %v1861, %v1917
        %v1990 = vadd.f32 %v1862, %v1920
        %v1991 = vadd.f32 %v1863, %v1923
        %v1992 = vadd.f32 %v1864, %v1926
        %v1993 = vadd.f32 %v1865, %v1929
        %v1994 = vadd.f32 %v1866, %v1932
        %v1995 = vadd.f32 %v1867, %v1935
        %v1996 = vadd.f32 %v1868, %v1938
        %v1997 = vadd.f32 %v1869, %v1941
        %v1998 = vadd.f32 %v1870, %v1944
        %v1999 = vadd.f32 %v1871, %v1947
        %v2000 = vadd.f32 %v1872, %v1950
        %v2001 = vadd.f32 %v1873, %v1953
        %v2002 = vadd.f32 %v1874, %v1956
        %v2003 = vadd.f32 %v1875, %v1959
        %v2004 = vadd.f32 %v1876, %v1962
        %v2005 = vadd.f32 %v1877, %v1965
        %v2006 = vadd.f32 %v1878, %v1968
        %v2007 = vadd.f32 %v1879, %v1971
        %v2008 = vadd.f32 %v1880, %v1974
        %v2009 = vadd.f32 %v1881, %v1977
        %vm2010 = vcmask 7168
        %2011 = vst.msk [vmem:[#allocation3] sm:$0xff] %vm2010, %v1978
        %2012 = vst.msk [vmem:[#allocation3 + $0x8] sm:$0xff] %vm2010, %v1979
        %2013 = vst.msk [vmem:[#allocation3 + $0x10] sm:$0xff] %vm2010, %v1980
        %2014 = vst.msk [vmem:[#allocation3 + $0x18] sm:$0xff] %vm2010, %v1981
        %2015 = vst.msk [vmem:[#allocation3 + $0x20] sm:$0xff] %vm2010, %v1982
        %2016 = vst.msk [vmem:[#allocation3 + $0x28] sm:$0xff] %vm2010, %v1983
        %2017 = vst.msk [vmem:[#allocation3 + $0x30] sm:$0xff] %vm2010, %v1984
        %2018 = vst.msk [vmem:[#allocation3 + $0x38] sm:$0xff] %vm2010, %v1985
        %2019 = vst.msk [vmem:[#allocation3 + $0x40] sm:$0xff] %vm2010, %v1986
        %2020 = vst.msk [vmem:[#allocation3 + $0x48] sm:$0xff] %vm2010, %v1987
        %2021 = vst.msk [vmem:[#allocation3 + $0x50] sm:$0xff] %vm2010, %v1988
        %2022 = vst.msk [vmem:[#allocation3 + $0x58] sm:$0xff] %vm2010, %v1989
        %2023 = vst.msk [vmem:[#allocation3 + $0x60] sm:$0xff] %vm2010, %v1990
        %2024 = vst.msk [vmem:[#allocation3 + $0x68] sm:$0xff] %vm2010, %v1991
        %2025 = vst.msk [vmem:[#allocation3 + $0x70] sm:$0xff] %vm2010, %v1992
        %2026 = vst.msk [vmem:[#allocation3 + $0x78] sm:$0xff] %vm2010, %v1993
        %2027 = vst.msk [vmem:[#allocation3 + $0x80] sm:$0xff] %vm2010, %v1994
        %2028 = vst.msk [vmem:[#allocation3 + $0x88] sm:$0xff] %vm2010, %v1995
        %2029 = vst.msk [vmem:[#allocation3 + $0x90] sm:$0xff] %vm2010, %v1996
        %2030 = vst.msk [vmem:[#allocation3 + $0x98] sm:$0xff] %vm2010, %v1997
        %2031 = vst.msk [vmem:[#allocation3 + $0xa0] sm:$0xff] %vm2010, %v1998
        %2032 = vst.msk [vmem:[#allocation3 + $0xa8] sm:$0xff] %vm2010, %v1999
        %2033 = vst.msk [vmem:[#allocation3 + $0xb0] sm:$0xff] %vm2010, %v2000
        %2034 = vst.msk [vmem:[#allocation3 + $0xb8] sm:$0xff] %vm2010, %v2001
        %2035 = vst.msk [vmem:[#allocation3 + $0xc0] sm:$0xff] %vm2010, %v2002
        %2036 = vst.msk [vmem:[#allocation3 + $0xc8] sm:$0xff] %vm2010, %v2003
        %2037 = vst.msk [vmem:[#allocation3 + $0xd0] sm:$0xff] %vm2010, %v2004
        %2038 = vst.msk [vmem:[#allocation3 + $0xd8] sm:$0xff] %vm2010, %v2005
        %2039 = vst.msk [vmem:[#allocation3 + $0xe0] sm:$0xff] %vm2010, %v2006
        %2040 = vst.msk [vmem:[#allocation3 + $0xe8] sm:$0xff] %vm2010, %v2007
        %2041 = vst.msk [vmem:[#allocation3 + $0xf0] sm:$0xff] %vm2010, %v2008
        %2042 = vst.msk [vmem:[#allocation3 + $0xf8] sm:$0xff] %vm2010, %v2009
        %v2043 = vld [vmem:[#allocation4] sm:$0xff]
        %v2044 = vld [vmem:[#allocation4 + $0x8] sm:$0xff]
        %v2045 = vld [vmem:[#allocation4 + $0x10] sm:$0xff]
        %v2046 = vld [vmem:[#allocation4 + $0x18] sm:$0xff]
        %v2047 = vld [vmem:[#allocation4 + $0x20] sm:$0xff]
        %v2048 = vld [vmem:[#allocation4 + $0x28] sm:$0xff]
        %v2049 = vld [vmem:[#allocation4 + $0x30] sm:$0xff]
        %v2050 = vld [vmem:[#allocation4 + $0x38] sm:$0xff]
        %v2051 = vld [vmem:[#allocation4 + $0x40] sm:$0xff]
        %v2052 = vld [vmem:[#allocation4 + $0x48] sm:$0xff]
        %v2053 = vld [vmem:[#allocation4 + $0x50] sm:$0xff]
        %v2054 = vld [vmem:[#allocation4 + $0x58] sm:$0xff]
        %v2055 = vld [vmem:[#allocation4 + $0x60] sm:$0xff]
        %v2056 = vld [vmem:[#allocation4 + $0x68] sm:$0xff]
        %v2057 = vld [vmem:[#allocation4 + $0x70] sm:$0xff]
        %v2058 = vld [vmem:[#allocation4 + $0x78] sm:$0xff]
        %v2059 = vld [vmem:[#allocation4 + $0x80] sm:$0xff]
        %v2060 = vld [vmem:[#allocation4 + $0x88] sm:$0xff]
        %v2061 = vld [vmem:[#allocation4 + $0x90] sm:$0xff]
        %v2062 = vld [vmem:[#allocation4 + $0x98] sm:$0xff]
        %v2063 = vld [vmem:[#allocation4 + $0xa0] sm:$0xff]
        %v2064 = vld [vmem:[#allocation4 + $0xa8] sm:$0xff]
        %v2065 = vld [vmem:[#allocation4 + $0xb0] sm:$0xff]
        %v2066 = vld [vmem:[#allocation4 + $0xb8] sm:$0xff]
        %v2067 = vld [vmem:[#allocation4 + $0xc0] sm:$0xff]
        %v2068 = vld [vmem:[#allocation4 + $0xc8] sm:$0xff]
        %v2069 = vld [vmem:[#allocation4 + $0xd0] sm:$0xff]
        %v2070 = vld [vmem:[#allocation4 + $0xd8] sm:$0xff]
        %v2071 = vld [vmem:[#allocation4 + $0xe0] sm:$0xff]
        %v2072 = vld [vmem:[#allocation4 + $0xe8] sm:$0xff]
        %v2073 = vld [vmem:[#allocation4 + $0xf0] sm:$0xff]
        %v2074 = vld [vmem:[#allocation4 + $0xf8] sm:$0xff]
        %2076 = vset.pattern.permute.xlu0 0
        %2077 = vperm.xlu0 %2076, %v1403
        %v2078 = vpop.permute.xlu0 %2077
        %2081 = vset.pattern.permute.xlu0 0
        %2082 = vperm.xlu0 %2081, %v1405
        %v2083 = vpop.permute.xlu0 %2082
        %2086 = vset.pattern.permute.xlu0 0
        %2087 = vperm.xlu0 %2086, %v1407
        %v2088 = vpop.permute.xlu0 %2087
        %2091 = vset.pattern.permute.xlu0 0
        %2092 = vperm.xlu0 %2091, %v1409
        %v2093 = vpop.permute.xlu0 %2092
        %2096 = vset.pattern.permute.xlu0 0
        %2097 = vperm.xlu0 %2096, %v1411
        %v2098 = vpop.permute.xlu0 %2097
        %2101 = vset.pattern.permute.xlu0 0
        %2102 = vperm.xlu0 %2101, %v1413
        %v2103 = vpop.permute.xlu0 %2102
        %2106 = vset.pattern.permute.xlu0 0
        %2107 = vperm.xlu0 %2106, %v1415
        %v2108 = vpop.permute.xlu0 %2107
        %2111 = vset.pattern.permute.xlu0 0
        %2112 = vperm.xlu0 %2111, %v1417
        %v2113 = vpop.permute.xlu0 %2112
        %2116 = vset.pattern.permute.xlu0 0
        %2117 = vperm.xlu0 %2116, %v1419
        %v2118 = vpop.permute.xlu0 %2117
        %2121 = vset.pattern.permute.xlu0 0
        %2122 = vperm.xlu0 %2121, %v1421
        %v2123 = vpop.permute.xlu0 %2122
        %2126 = vset.pattern.permute.xlu0 0
        %2127 = vperm.xlu0 %2126, %v1423
        %v2128 = vpop.permute.xlu0 %2127
        %2131 = vset.pattern.permute.xlu0 0
        %2132 = vperm.xlu0 %2131, %v1425
        %v2133 = vpop.permute.xlu0 %2132
        %2136 = vset.pattern.permute.xlu0 0
        %2137 = vperm.xlu0 %2136, %v1427
        %v2138 = vpop.permute.xlu0 %2137
        %2141 = vset.pattern.permute.xlu0 0
        %2142 = vperm.xlu0 %2141, %v1429
        %v2143 = vpop.permute.xlu0 %2142
        %2146 = vset.pattern.permute.xlu0 0
        %2147 = vperm.xlu0 %2146, %v1431
        %v2148 = vpop.permute.xlu0 %2147
        %2151 = vset.pattern.permute.xlu0 0
        %2152 = vperm.xlu0 %2151, %v1433
        %v2153 = vpop.permute.xlu0 %2152
        %2156 = vset.pattern.permute.xlu0 0
        %2157 = vperm.xlu0 %2156, %v1435
        %v2158 = vpop.permute.xlu0 %2157
        %2161 = vset.pattern.permute.xlu0 0
        %2162 = vperm.xlu0 %2161, %v1437
        %v2163 = vpop.permute.xlu0 %2162
        %2166 = vset.pattern.permute.xlu0 0
        %2167 = vperm.xlu0 %2166, %v1439
        %v2168 = vpop.permute.xlu0 %2167
        %2171 = vset.pattern.permute.xlu0 0
        %2172 = vperm.xlu0 %2171, %v1441
        %v2173 = vpop.permute.xlu0 %2172
        %2176 = vset.pattern.permute.xlu0 0
        %2177 = vperm.xlu0 %2176, %v1443
        %v2178 = vpop.permute.xlu0 %2177
        %2181 = vset.pattern.permute.xlu0 0
        %2182 = vperm.xlu0 %2181, %v1445
        %v2183 = vpop.permute.xlu0 %2182
        %2186 = vset.pattern.permute.xlu0 0
        %2187 = vperm.xlu0 %2186, %v1447
        %v2188 = vpop.permute.xlu0 %2187
        %2191 = vset.pattern.permute.xlu0 0
        %2192 = vperm.xlu0 %2191, %v1449
        %v2193 = vpop.permute.xlu0 %2192
        %2196 = vset.pattern.permute.xlu0 0
        %2197 = vperm.xlu0 %2196, %v1451
        %v2198 = vpop.permute.xlu0 %2197
        %2201 = vset.pattern.permute.xlu0 0
        %2202 = vperm.xlu0 %2201, %v1453
        %v2203 = vpop.permute.xlu0 %2202
        %2206 = vset.pattern.permute.xlu0 0
        %2207 = vperm.xlu0 %2206, %v1455
        %v2208 = vpop.permute.xlu0 %2207
        %2211 = vset.pattern.permute.xlu0 0
        %2212 = vperm.xlu0 %2211, %v1457
        %v2213 = vpop.permute.xlu0 %2212
        %2216 = vset.pattern.permute.xlu0 0
        %2217 = vperm.xlu0 %2216, %v1459
        %v2218 = vpop.permute.xlu0 %2217
        %2221 = vset.pattern.permute.xlu0 0
        %2222 = vperm.xlu0 %2221, %v1461
        %v2223 = vpop.permute.xlu0 %2222
        %2226 = vset.pattern.permute.xlu0 0
        %2227 = vperm.xlu0 %2226, %v1463
        %v2228 = vpop.permute.xlu0 %2227
        %2231 = vset.pattern.permute.xlu0 0
        %2232 = vperm.xlu0 %2231, %v1465
        %v2233 = vpop.permute.xlu0 %2232
        %v2235 = vmul.f32 %v2078, %v2043
        %v2236 = vmul.f32 %v2083, %v2044
        %v2237 = vmul.f32 %v2088, %v2045
        %v2238 = vmul.f32 %v2093, %v2046
        %v2239 = vmul.f32 %v2098, %v2047
        %v2240 = vmul.f32 %v2103, %v2048
        %v2241 = vmul.f32 %v2108, %v2049
        %v2242 = vmul.f32 %v2113, %v2050
        %v2243 = vmul.f32 %v2118, %v2051
        %v2244 = vmul.f32 %v2123, %v2052
        %v2245 = vmul.f32 %v2128, %v2053
        %v2246 = vmul.f32 %v2133, %v2054
        %v2247 = vmul.f32 %v2138, %v2055
        %v2248 = vmul.f32 %v2143, %v2056
        %v2249 = vmul.f32 %v2148, %v2057
        %v2250 = vmul.f32 %v2153, %v2058
        %v2251 = vmul.f32 %v2158, %v2059
        %v2252 = vmul.f32 %v2163, %v2060
        %v2253 = vmul.f32 %v2168, %v2061
        %v2254 = vmul.f32 %v2173, %v2062
        %v2255 = vmul.f32 %v2178, %v2063
        %v2256 = vmul.f32 %v2183, %v2064
        %v2257 = vmul.f32 %v2188, %v2065
        %v2258 = vmul.f32 %v2193, %v2066
        %v2259 = vmul.f32 %v2198, %v2067
        %v2260 = vmul.f32 %v2203, %v2068
        %v2261 = vmul.f32 %v2208, %v2069
        %v2262 = vmul.f32 %v2213, %v2070
        %v2263 = vmul.f32 %v2218, %v2071
        %v2264 = vmul.f32 %v2223, %v2072
        %v2265 = vmul.f32 %v2228, %v2073
        %v2266 = vmul.f32 %v2233, %v2074
        %v2267 = vpack.c.bf16 %v1695, %v1691
        %v2268 = vpack.c.bf16 %v1697, %v1693
        %v2269 = vpack.c.bf16 %v1703, %v1699
        %v2270 = vpack.c.bf16 %v1705, %v1701
        %v2271 = vpack.c.bf16 %v1711, %v1707
        %v2272 = vpack.c.bf16 %v1713, %v1709
        %v2273 = vpack.c.bf16 %v1719, %v1715
        %v2274 = vpack.c.bf16 %v1721, %v1717
        %v2275 = vpack.c.bf16 %v1727, %v1723
        %v2276 = vpack.c.bf16 %v1729, %v1725
        %v2277 = vpack.c.bf16 %v1735, %v1731
        %v2278 = vpack.c.bf16 %v1737, %v1733
        %v2279 = vpack.c.bf16 %v1743, %v1739
        %v2280 = vpack.c.bf16 %v1745, %v1741
        %v2281 = vpack.c.bf16 %v1751, %v1747
        %v2282 = vpack.c.bf16 %v1753, %v1749
        %v2283 = vpack.c.bf16 %v1759, %v1755
        %v2284 = vpack.c.bf16 %v1761, %v1757
        %v2285 = vpack.c.bf16 %v1767, %v1763
        %v2286 = vpack.c.bf16 %v1769, %v1765
        %v2287 = vpack.c.bf16 %v1775, %v1771
        %v2288 = vpack.c.bf16 %v1777, %v1773
        %v2289 = vpack.c.bf16 %v1783, %v1779
        %v2290 = vpack.c.bf16 %v1785, %v1781
        %v2291 = vpack.c.bf16 %v1791, %v1787
        %v2292 = vpack.c.bf16 %v1793, %v1789
        %v2293 = vpack.c.bf16 %v1799, %v1795
        %v2294 = vpack.c.bf16 %v1801, %v1797
        %v2295 = vpack.c.bf16 %v1807, %v1803
        %v2296 = vpack.c.bf16 %v1809, %v1805
        %v2297 = vpack.c.bf16 %v1815, %v1811
        %v2298 = vpack.c.bf16 %v1817, %v1813
        %v2331 = vunpack.c.l.b16 %v526
        %v2332 = vunpack.c.l.b16 %v527
        %v2333 = vunpack.c.l.b16 %v528
        %v2334 = vunpack.c.l.b16 %v529
        %v2335 = vunpack.c.l.b16 %v530
        %v2336 = vunpack.c.l.b16 %v531
        %v2337 = vunpack.c.l.b16 %v532
        %v2338 = vunpack.c.l.b16 %v533
        %v2339 = vunpack.c.l.b16 %v534
        %v2340 = vunpack.c.l.b16 %v535
        %v2341 = vunpack.c.l.b16 %v536
        %v2342 = vunpack.c.l.b16 %v537
        %v2343 = vunpack.c.l.b16 %v538
        %v2344 = vunpack.c.l.b16 %v539
        %v2345 = vunpack.c.l.b16 %v540
        %v2346 = vunpack.c.l.b16 %v541
        %v2347 = vunpack.c.l.b16 %v542
        %v2348 = vunpack.c.l.b16 %v543
        %v2349 = vunpack.c.l.b16 %v544
        %v2350 = vunpack.c.l.b16 %v545
        %v2351 = vunpack.c.l.b16 %v546
        %v2352 = vunpack.c.l.b16 %v547
        %v2353 = vunpack.c.l.b16 %v548
        %v2354 = vunpack.c.l.b16 %v549
        %v2355 = vunpack.c.l.b16 %v550
        %v2356 = vunpack.c.l.b16 %v551
        %v2357 = vunpack.c.l.b16 %v552
        %v2358 = vunpack.c.l.b16 %v553
        %v2359 = vunpack.c.l.b16 %v554
        %v2360 = vunpack.c.l.b16 %v555
        %v2361 = vunpack.c.l.b16 %v556
        %v2362 = vunpack.c.l.b16 %v557
        %v2363 = vpack.c.b16 %v2332, %v2331
        %v2364 = vpack.c.b16 %v2334, %v2333
        %v2365 = vpack.c.b16 %v2336, %v2335
        %v2366 = vpack.c.b16 %v2338, %v2337
        %v2367 = vpack.c.b16 %v2340, %v2339
        %v2368 = vpack.c.b16 %v2342, %v2341
        %v2369 = vpack.c.b16 %v2344, %v2343
        %v2370 = vpack.c.b16 %v2346, %v2345
        %v2371 = vpack.c.b16 %v2348, %v2347
        %v2372 = vpack.c.b16 %v2350, %v2349
        %v2373 = vpack.c.b16 %v2352, %v2351
        %v2374 = vpack.c.b16 %v2354, %v2353
        %v2375 = vpack.c.b16 %v2356, %v2355
        %v2376 = vpack.c.b16 %v2358, %v2357
        %v2377 = vpack.c.b16 %v2360, %v2359
        %v2378 = vpack.c.b16 %v2362, %v2361
        %2395 = vmatprep.subr.bf16.mxu0 0
        %2396 = vmatpush1.bf16.msra.mxu0 %v2363
        %2397 = vmatprep.subr.bf16.mxu0 0
        %2398 = vmatpush1.bf16.msra.mxu0 %v2364
        %2399 = vmatprep.subr.bf16.mxu0 0
        %2400 = vmatpush1.bf16.msra.mxu0 %v2365
        %2401 = vmatprep.subr.bf16.mxu0 0
        %2402 = vmatpush1.bf16.msra.mxu0 %v2366
        %2403 = vmatprep.subr.bf16.mxu0 0
        %2404 = vmatpush1.bf16.msra.mxu0 %v2367
        %2405 = vmatprep.subr.bf16.mxu0 0
        %2406 = vmatpush1.bf16.msra.mxu0 %v2368
        %2407 = vmatprep.subr.bf16.mxu0 0
        %2408 = vmatpush1.bf16.msra.mxu0 %v2369
        %2409 = vmatprep.subr.bf16.mxu0 0
        %2410 = vmatpush1.bf16.msra.mxu0 %v2370
        %2411 = vmatprep.subr.bf16.mxu0 0
        %2412 = vmatpush1.bf16.msra.mxu0 %v2371
        %2413 = vmatprep.subr.bf16.mxu0 0
        %2414 = vmatpush1.bf16.msra.mxu0 %v2372
        %2415 = vmatprep.subr.bf16.mxu0 0
        %2416 = vmatpush1.bf16.msra.mxu0 %v2373
        %2417 = vmatprep.subr.bf16.mxu0 0
        %2418 = vmatpush1.bf16.msra.mxu0 %v2374
        %2419 = vmatprep.subr.bf16.mxu0 0
        %2420 = vmatpush1.bf16.msra.mxu0 %v2375
        %2421 = vmatprep.subr.bf16.mxu0 0
        %2422 = vmatpush1.bf16.msra.mxu0 %v2376
        %2423 = vmatprep.subr.bf16.mxu0 0
        %2424 = vmatpush1.bf16.msra.mxu0 %v2377
        %2425 = vmatprep.subr.bf16.mxu0 0
        %2426 = vmatpush1.bf16.msra.mxu0 %v2378
        %2427 = vmatprep.mubr.bf16.mxu0 %v2268
        %2428 = vmatmul.mubr.bf16.gmra.mrb[0].mxu0 %v2267
        %v2429 = vpop.f32.mrb[0].mxu0
        %v2430 = vadd.f32 0.0, %v2429
        %v2431 = vpop.f32.mrb[0].mxu0
        %v2432 = vpop.f32.mrb[0].mxu0
        %v2433 = vadd.f32 0.0, %v2432
        %v2434 = vpop.f32.mrb[0].mxu0
        %2435 = vmatprep.mubr.bf16.mxu0 %v2270
        %2436 = vmatmul.mubr.bf16.gmra.mrb[0].mxu0 %v2269
        %v2437 = vpop.f32.mrb[0].mxu0
        %v2438 = vadd.f32 0.0, %v2437
        %v2439 = vpop.f32.mrb[0].mxu0
        %v2440 = vpop.f32.mrb[0].mxu0
        %v2441 = vadd.f32 0.0, %v2440
        %v2442 = vpop.f32.mrb[0].mxu0
        %2443 = vmatprep.mubr.bf16.mxu0 %v2272
        %2444 = vmatmul.mubr.bf16.gmra.mrb[0].mxu0 %v2271
        %v2445 = vpop.f32.mrb[0].mxu0
        %v2446 = vadd.f32 0.0, %v2445
        %v2447 = vpop.f32.mrb[0].mxu0
        %v2448 = vpop.f32.mrb[0].mxu0
        %v2449 = vadd.f32 0.0, %v2448
        %v2450 = vpop.f32.mrb[0].mxu0
        %2451 = vmatprep.mubr.bf16.mxu0 %v2274
        %2452 = vmatmul.mubr.bf16.gmra.mrb[0].mxu0 %v2273
        %v2453 = vpop.f32.mrb[0].mxu0
        %v2454 = vadd.f32 0.0, %v2453
        %v2455 = vpop.f32.mrb[0].mxu0
        %v2456 = vpop.f32.mrb[0].mxu0
        %v2457 = vadd.f32 0.0, %v2456
        %v2458 = vpop.f32.mrb[0].mxu0
        %2459 = vmatprep.mubr.bf16.mxu0 %v2276
        %2460 = vmatmul.mubr.bf16.gmra.mrb[0].mxu0 %v2275
        %v2461 = vpop.f32.mrb[0].mxu0
        %v2462 = vadd.f32 0.0, %v2461
        %v2463 = vpop.f32.mrb[0].mxu0
        %v2464 = vpop.f32.mrb[0].mxu0
        %v2465 = vadd.f32 0.0, %v2464
        %v2466 = vpop.f32.mrb[0].mxu0
        %2467 = vmatprep.mubr.bf16.mxu0 %v2278
        %2468 = vmatmul.mubr.bf16.gmra.mrb[0].mxu0 %v2277
        %v2469 = vpop.f32.mrb[0].mxu0
        %v2470 = vadd.f32 0.0, %v2469
        %v2471 = vpop.f32.mrb[0].mxu0
        %v2472 = vpop.f32.mrb[0].mxu0
        %v2473 = vadd.f32 0.0, %v2472
        %v2474 = vpop.f32.mrb[0].mxu0
        %2475 = vmatprep.mubr.bf16.mxu0 %v2280
        %2476 = vmatmul.mubr.bf16.gmra.mrb[0].mxu0 %v2279
        %v2477 = vpop.f32.mrb[0].mxu0
        %v2478 = vadd.f32 0.0, %v2477
        %v2479 = vpop.f32.mrb[0].mxu0
        %v2480 = vpop.f32.mrb[0].mxu0
        %v2481 = vadd.f32 0.0, %v2480
        %v2482 = vpop.f32.mrb[0].mxu0
        %2483 = vmatprep.mubr.bf16.mxu0 %v2282
        %2484 = vmatmul.mubr.bf16.gmra.mrb[0].mxu0 %v2281
        %v2485 = vpop.f32.mrb[0].mxu0
        %v2486 = vadd.f32 0.0, %v2485
        %v2487 = vpop.f32.mrb[0].mxu0
        %v2488 = vpop.f32.mrb[0].mxu0
        %v2489 = vadd.f32 0.0, %v2488
        %v2490 = vpop.f32.mrb[0].mxu0
        %2491 = vmatprep.mubr.bf16.mxu0 %v2284
        %2492 = vmatmul.mubr.bf16.gmra.mrb[0].mxu0 %v2283
        %v2493 = vpop.f32.mrb[0].mxu0
        %v2494 = vadd.f32 0.0, %v2493
        %v2495 = vpop.f32.mrb[0].mxu0
        %v2496 = vpop.f32.mrb[0].mxu0
        %v2497 = vadd.f32 0.0, %v2496
        %v2498 = vpop.f32.mrb[0].mxu0
        %2499 = vmatprep.mubr.bf16.mxu0 %v2286
        %2500 = vmatmul.mubr.bf16.gmra.mrb[0].mxu0 %v2285
        %v2501 = vpop.f32.mrb[0].mxu0
        %v2502 = vadd.f32 0.0, %v2501
        %v2503 = vpop.f32.mrb[0].mxu0
        %v2504 = vpop.f32.mrb[0].mxu0
        %v2505 = vadd.f32 0.0, %v2504
        %v2506 = vpop.f32.mrb[0].mxu0
        %2507 = vmatprep.mubr.bf16.mxu0 %v2288
        %2508 = vmatmul.mubr.bf16.gmra.mrb[0].mxu0 %v2287
        %v2509 = vpop.f32.mrb[0].mxu0
        %v2510 = vadd.f32 0.0, %v2509
        %v2511 = vpop.f32.mrb[0].mxu0
        %v2512 = vpop.f32.mrb[0].mxu0
        %v2513 = vadd.f32 0.0, %v2512
        %v2514 = vpop.f32.mrb[0].mxu0
        %2515 = vmatprep.mubr.bf16.mxu0 %v2290
        %2516 = vmatmul.mubr.bf16.gmra.mrb[0].mxu0 %v2289
        %v2517 = vpop.f32.mrb[0].mxu0
        %v2518 = vadd.f32 0.0, %v2517
        %v2519 = vpop.f32.mrb[0].mxu0
        %v2520 = vpop.f32.mrb[0].mxu0
        %v2521 = vadd.f32 0.0, %v2520
        %v2522 = vpop.f32.mrb[0].mxu0
        %2523 = vmatprep.mubr.bf16.mxu0 %v2292
        %2524 = vmatmul.mubr.bf16.gmra.mrb[0].mxu0 %v2291
        %v2525 = vpop.f32.mrb[0].mxu0
        %v2526 = vadd.f32 0.0, %v2525
        %v2527 = vpop.f32.mrb[0].mxu0
        %v2528 = vpop.f32.mrb[0].mxu0
        %v2529 = vadd.f32 0.0, %v2528
        %v2530 = vpop.f32.mrb[0].mxu0
        %2531 = vmatprep.mubr.bf16.mxu0 %v2294
        %2532 = vmatmul.mubr.bf16.gmra.mrb[0].mxu0 %v2293
        %v2533 = vpop.f32.mrb[0].mxu0
        %v2534 = vadd.f32 0.0, %v2533
        %v2535 = vpop.f32.mrb[0].mxu0
        %v2536 = vpop.f32.mrb[0].mxu0
        %v2537 = vadd.f32 0.0, %v2536
        %v2538 = vpop.f32.mrb[0].mxu0
        %2539 = vmatprep.mubr.bf16.mxu0 %v2296
        %2540 = vmatmul.mubr.bf16.gmra.mrb[0].mxu0 %v2295
        %v2541 = vpop.f32.mrb[0].mxu0
        %v2542 = vadd.f32 0.0, %v2541
        %v2543 = vpop.f32.mrb[0].mxu0
        %v2544 = vpop.f32.mrb[0].mxu0
        %v2545 = vadd.f32 0.0, %v2544
        %v2546 = vpop.f32.mrb[0].mxu0
        %2547 = vmatprep.mubr.bf16.mxu0 %v2298
        %2548 = vmatmul.mubr.bf16.gmra.mrb[0].mxu0 %v2297
        %v2549 = vpop.f32.mrb[0].mxu0
        %v2550 = vadd.f32 0.0, %v2549
        %v2551 = vpop.f32.mrb[0].mxu0
        %v2552 = vpop.f32.mrb[0].mxu0
        %v2553 = vadd.f32 0.0, %v2552
        %v2554 = vpop.f32.mrb[0].mxu0
        %2555 = vdwg.mxu0
        %v2556 = vadd.f32 %v2235, %v2430
        %v2557 = vadd.f32 %v2236, %v2433
        %v2558 = vadd.f32 %v2237, %v2438
        %v2559 = vadd.f32 %v2238, %v2441
        %v2560 = vadd.f32 %v2239, %v2446
        %v2561 = vadd.f32 %v2240, %v2449
        %v2562 = vadd.f32 %v2241, %v2454
        %v2563 = vadd.f32 %v2242, %v2457
        %v2564 = vadd.f32 %v2243, %v2462
        %v2565 = vadd.f32 %v2244, %v2465
        %v2566 = vadd.f32 %v2245, %v2470
        %v2567 = vadd.f32 %v2246, %v2473
        %v2568 = vadd.f32 %v2247, %v2478
        %v2569 = vadd.f32 %v2248, %v2481
        %v2570 = vadd.f32 %v2249, %v2486
        %v2571 = vadd.f32 %v2250, %v2489
        %v2572 = vadd.f32 %v2251, %v2494
        %v2573 = vadd.f32 %v2252, %v2497
        %v2574 = vadd.f32 %v2253, %v2502
        %v2575 = vadd.f32 %v2254, %v2505
        %v2576 = vadd.f32 %v2255, %v2510
        %v2577 = vadd.f32 %v2256, %v2513
        %v2578 = vadd.f32 %v2257, %v2518
        %v2579 = vadd.f32 %v2258, %v2521
        %v2580 = vadd.f32 %v2259, %v2526
        %v2581 = vadd.f32 %v2260, %v2529
        %v2582 = vadd.f32 %v2261, %v2534
        %v2583 = vadd.f32 %v2262, %v2537
        %v2584 = vadd.f32 %v2263, %v2542
        %v2585 = vadd.f32 %v2264, %v2545
        %v2586 = vadd.f32 %v2265, %v2550
        %v2587 = vadd.f32 %v2266, %v2553
        %2588 = vst.msk [vmem:[#allocation4] sm:$0xff] %vm718, %v2556
        %2589 = vst.msk [vmem:[#allocation4 + $0x8] sm:$0xff] %vm718, %v2557
        %2590 = vst.msk [vmem:[#allocation4 + $0x10] sm:$0xff] %vm718, %v2558
        %2591 = vst.msk [vmem:[#allocation4 + $0x18] sm:$0xff] %vm718, %v2559
        %2592 = vst.msk [vmem:[#allocation4 + $0x20] sm:$0xff] %vm718, %v2560
        %2593 = vst.msk [vmem:[#allocation4 + $0x28] sm:$0xff] %vm718, %v2561
        %2594 = vst.msk [vmem:[#allocation4 + $0x30] sm:$0xff] %vm718, %v2562
        %2595 = vst.msk [vmem:[#allocation4 + $0x38] sm:$0xff] %vm718, %v2563
        %2596 = vst.msk [vmem:[#allocation4 + $0x40] sm:$0xff] %vm718, %v2564
        %2597 = vst.msk [vmem:[#allocation4 + $0x48] sm:$0xff] %vm718, %v2565
        %2598 = vst.msk [vmem:[#allocation4 + $0x50] sm:$0xff] %vm718, %v2566
        %2599 = vst.msk [vmem:[#allocation4 + $0x58] sm:$0xff] %vm718, %v2567
        %2600 = vst.msk [vmem:[#allocation4 + $0x60] sm:$0xff] %vm718, %v2568
        %2601 = vst.msk [vmem:[#allocation4 + $0x68] sm:$0xff] %vm718, %v2569
        %2602 = vst.msk [vmem:[#allocation4 + $0x70] sm:$0xff] %vm718, %v2570
        %2603 = vst.msk [vmem:[#allocation4 + $0x78] sm:$0xff] %vm718, %v2571
        %2604 = vst.msk [vmem:[#allocation4 + $0x80] sm:$0xff] %vm718, %v2572
        %2605 = vst.msk [vmem:[#allocation4 + $0x88] sm:$0xff] %vm718, %v2573
        %2606 = vst.msk [vmem:[#allocation4 + $0x90] sm:$0xff] %vm718, %v2574
        %2607 = vst.msk [vmem:[#allocation4 + $0x98] sm:$0xff] %vm718, %v2575
        %2608 = vst.msk [vmem:[#allocation4 + $0xa0] sm:$0xff] %vm718, %v2576
        %2609 = vst.msk [vmem:[#allocation4 + $0xa8] sm:$0xff] %vm718, %v2577
        %2610 = vst.msk [vmem:[#allocation4 + $0xb0] sm:$0xff] %vm718, %v2578
        %2611 = vst.msk [vmem:[#allocation4 + $0xb8] sm:$0xff] %vm718, %v2579
        %2612 = vst.msk [vmem:[#allocation4 + $0xc0] sm:$0xff] %vm718, %v2580
        %2613 = vst.msk [vmem:[#allocation4 + $0xc8] sm:$0xff] %vm718, %v2581
        %2614 = vst.msk [vmem:[#allocation4 + $0xd0] sm:$0xff] %vm718, %v2582
        %2615 = vst.msk [vmem:[#allocation4 + $0xd8] sm:$0xff] %vm718, %v2583
        %2616 = vst.msk [vmem:[#allocation4 + $0xe0] sm:$0xff] %vm718, %v2584
        %2617 = vst.msk [vmem:[#allocation4 + $0xe8] sm:$0xff] %vm718, %v2585
        %2618 = vst.msk [vmem:[#allocation4 + $0xf0] sm:$0xff] %vm718, %v2586
        %2619 = vst.msk [vmem:[#allocation4 + $0xf8] sm:$0xff] %vm718, %v2587
        %2620 = vst.msk [vmem:[#allocation2] sm:$0xff] %vm2010, %v1338
        %2621 = vst.msk [vmem:[#allocation2 + $0x8] sm:$0xff] %vm2010, %v1339
        %2622 = vst.msk [vmem:[#allocation2 + $0x10] sm:$0xff] %vm2010, %v1340
        %2623 = vst.msk [vmem:[#allocation2 + $0x18] sm:$0xff] %vm2010, %v1341
        %2624 = vst.msk [vmem:[#allocation2 + $0x20] sm:$0xff] %vm2010, %v1342
        %2625 = vst.msk [vmem:[#allocation2 + $0x28] sm:$0xff] %vm2010, %v1343
        %2626 = vst.msk [vmem:[#allocation2 + $0x30] sm:$0xff] %vm2010, %v1344
        %2627 = vst.msk [vmem:[#allocation2 + $0x38] sm:$0xff] %vm2010, %v1345
        %2628 = vst.msk [vmem:[#allocation2 + $0x40] sm:$0xff] %vm2010, %v1346
        %2629 = vst.msk [vmem:[#allocation2 + $0x48] sm:$0xff] %vm2010, %v1347
        %2630 = vst.msk [vmem:[#allocation2 + $0x50] sm:$0xff] %vm2010, %v1348
        %2631 = vst.msk [vmem:[#allocation2 + $0x58] sm:$0xff] %vm2010, %v1349
        %2632 = vst.msk [vmem:[#allocation2 + $0x60] sm:$0xff] %vm2010, %v1350
        %2633 = vst.msk [vmem:[#allocation2 + $0x68] sm:$0xff] %vm2010, %v1351
        %2634 = vst.msk [vmem:[#allocation2 + $0x70] sm:$0xff] %vm2010, %v1352
        %2635 = vst.msk [vmem:[#allocation2 + $0x78] sm:$0xff] %vm2010, %v1353
        %2636 = vst.msk [vmem:[#allocation2 + $0x80] sm:$0xff] %vm2010, %v1354
        %2637 = vst.msk [vmem:[#allocation2 + $0x88] sm:$0xff] %vm2010, %v1355
        %2638 = vst.msk [vmem:[#allocation2 + $0x90] sm:$0xff] %vm2010, %v1356
        %2639 = vst.msk [vmem:[#allocation2 + $0x98] sm:$0xff] %vm2010, %v1357
        %2640 = vst.msk [vmem:[#allocation2 + $0xa0] sm:$0xff] %vm2010, %v1358
        %2641 = vst.msk [vmem:[#allocation2 + $0xa8] sm:$0xff] %vm2010, %v1359
        %2642 = vst.msk [vmem:[#allocation2 + $0xb0] sm:$0xff] %vm2010, %v1360
        %2643 = vst.msk [vmem:[#allocation2 + $0xb8] sm:$0xff] %vm2010, %v1361
        %2644 = vst.msk [vmem:[#allocation2 + $0xc0] sm:$0xff] %vm2010, %v1362
        %2645 = vst.msk [vmem:[#allocation2 + $0xc8] sm:$0xff] %vm2010, %v1363
        %2646 = vst.msk [vmem:[#allocation2 + $0xd0] sm:$0xff] %vm2010, %v1364
        %2647 = vst.msk [vmem:[#allocation2 + $0xd8] sm:$0xff] %vm2010, %v1365
        %2648 = vst.msk [vmem:[#allocation2 + $0xe0] sm:$0xff] %vm2010, %v1366
        %2649 = vst.msk [vmem:[#allocation2 + $0xe8] sm:$0xff] %vm2010, %v1367
        %2650 = vst.msk [vmem:[#allocation2 + $0xf0] sm:$0xff] %vm2010, %v1368
        %2651 = vst.msk [vmem:[#allocation2 + $0xf8] sm:$0xff] %vm2010, %v1369
      $region40: #{tpu_custom_call.1} parent=31 // pred_fallthru
        _
      %p2652 = scmp.lt.s32.totalorder %s323, %s322
      // Predicated region
      $region41: #{tpu_custom_call.1} parent=31 // pred_check
        %p2653 = pneg %p2652
      $region42: #{tpu_custom_call.1} parent=31 // pred_check_branch
        %2655 = sbr.rel (%p2653) target = $region44
      $region43: #{tpu_custom_call.1} parent=31 // pred_region
        %v2656 = vld [vmem:[%s281] sm:$0xf]
        %v2657 = vld [vmem:[%s281 + $0x4] sm:$0xf]
        %v2658 = vld [vmem:[%s281 + $0x8] sm:$0xf]
        %v2659 = vld [vmem:[%s281 + $0xc] sm:$0xf]
        %v2660 = vld [vmem:[%s281 + $0x10] sm:$0xf]
        %v2661 = vld [vmem:[%s281 + $0x14] sm:$0xf]
        %v2662 = vld [vmem:[%s281 + $0x18] sm:$0xf]
        %v2663 = vld [vmem:[%s281 + $0x1c] sm:$0xf]
        %v2664 = vld [vmem:[%s281 + $0x20] sm:$0xf]
        %v2665 = vld [vmem:[%s281 + $0x24] sm:$0xf]
        %v2666 = vld [vmem:[%s281 + $0x28] sm:$0xf]
        %v2667 = vld [vmem:[%s281 + $0x2c] sm:$0xf]
        %v2668 = vld [vmem:[%s281 + $0x30] sm:$0xf]
        %v2669 = vld [vmem:[%s281 + $0x34] sm:$0xf]
        %v2670 = vld [vmem:[%s281 + $0x38] sm:$0xf]
        %v2671 = vld [vmem:[%s281 + $0x3c] sm:$0xf]
        %v2672 = vld [vmem:[%s281 + $0x40] sm:$0xf]
        %v2673 = vld [vmem:[%s281 + $0x44] sm:$0xf]
        %v2674 = vld [vmem:[%s281 + $0x48] sm:$0xf]
        %v2675 = vld [vmem:[%s281 + $0x4c] sm:$0xf]
        %v2676 = vld [vmem:[%s281 + $0x50] sm:$0xf]
        %v2677 = vld [vmem:[%s281 + $0x54] sm:$0xf]
        %v2678 = vld [vmem:[%s281 + $0x58] sm:$0xf]
        %v2679 = vld [vmem:[%s281 + $0x5c] sm:$0xf]
        %v2680 = vld [vmem:[%s281 + $0x60] sm:$0xf]
        %v2681 = vld [vmem:[%s281 + $0x64] sm:$0xf]
        %v2682 = vld [vmem:[%s281 + $0x68] sm:$0xf]
        %v2683 = vld [vmem:[%s281 + $0x6c] sm:$0xf]
        %v2684 = vld [vmem:[%s281 + $0x70] sm:$0xf]
        %v2685 = vld [vmem:[%s281 + $0x74] sm:$0xf]
        %v2686 = vld [vmem:[%s281 + $0x78] sm:$0xf]
        %v2687 = vld [vmem:[%s281 + $0x7c] sm:$0xf]
        %v2688 = vmul.bf16 %v2656, 1040203264
        %v2689 = vmul.bf16 %v2657, 1040203264
        %v2690 = vmul.bf16 %v2658, 1040203264
        %v2691 = vmul.bf16 %v2659, 1040203264
        %v2692 = vmul.bf16 %v2660, 1040203264
        %v2693 = vmul.bf16 %v2661, 1040203264
        %v2694 = vmul.bf16 %v2662, 1040203264
        %v2695 = vmul.bf16 %v2663, 1040203264
        %v2696 = vmul.bf16 %v2664, 1040203264
        %v2697 = vmul.bf16 %v2665, 1040203264
        %v2698 = vmul.bf16 %v2666, 1040203264
        %v2699 = vmul.bf16 %v2667, 1040203264
        %v2700 = vmul.bf16 %v2668, 1040203264
        %v2701 = vmul.bf16 %v2669, 1040203264
        %v2702 = vmul.bf16 %v2670, 1040203264
        %v2703 = vmul.bf16 %v2671, 1040203264
        %v2704 = vmul.bf16 %v2672, 1040203264
        %v2705 = vmul.bf16 %v2673, 1040203264
        %v2706 = vmul.bf16 %v2674, 1040203264
        %v2707 = vmul.bf16 %v2675, 1040203264
        %v2708 = vmul.bf16 %v2676, 1040203264
        %v2709 = vmul.bf16 %v2677, 1040203264
        %v2710 = vmul.bf16 %v2678, 1040203264
        %v2711 = vmul.bf16 %v2679, 1040203264
        %v2712 = vmul.bf16 %v2680, 1040203264
        %v2713 = vmul.bf16 %v2681, 1040203264
        %v2714 = vmul.bf16 %v2682, 1040203264
        %v2715 = vmul.bf16 %v2683, 1040203264
        %v2716 = vmul.bf16 %v2684, 1040203264
        %v2717 = vmul.bf16 %v2685, 1040203264
        %v2718 = vmul.bf16 %v2686, 1040203264
        %v2719 = vmul.bf16 %v2687, 1040203264
        %v2720 = vld [vmem:[%s293] sm:$0xf]
        %v2721 = vld [vmem:[%s293 + $0x4] sm:$0xf]
        %v2722 = vld [vmem:[%s293 + $0x8] sm:$0xf]
        %v2723 = vld [vmem:[%s293 + $0xc] sm:$0xf]
        %v2724 = vld [vmem:[%s293 + $0x10] sm:$0xf]
        %v2725 = vld [vmem:[%s293 + $0x14] sm:$0xf]
        %v2726 = vld [vmem:[%s293 + $0x18] sm:$0xf]
        %v2727 = vld [vmem:[%s293 + $0x1c] sm:$0xf]
        %v2728 = vld [vmem:[%s293 + $0x20] sm:$0xf]
        %v2729 = vld [vmem:[%s293 + $0x24] sm:$0xf]
        %v2730 = vld [vmem:[%s293 + $0x28] sm:$0xf]
        %v2731 = vld [vmem:[%s293 + $0x2c] sm:$0xf]
        %v2732 = vld [vmem:[%s293 + $0x30] sm:$0xf]
        %v2733 = vld [vmem:[%s293 + $0x34] sm:$0xf]
        %v2734 = vld [vmem:[%s293 + $0x38] sm:$0xf]
        %v2735 = vld [vmem:[%s293 + $0x3c] sm:$0xf]
        %v2736 = vld [vmem:[%s293 + $0x40] sm:$0xf]
        %v2737 = vld [vmem:[%s293 + $0x44] sm:$0xf]
        %v2738 = vld [vmem:[%s293 + $0x48] sm:$0xf]
        %v2739 = vld [vmem:[%s293 + $0x4c] sm:$0xf]
        %v2740 = vld [vmem:[%s293 + $0x50] sm:$0xf]
        %v2741 = vld [vmem:[%s293 + $0x54] sm:$0xf]
        %v2742 = vld [vmem:[%s293 + $0x58] sm:$0xf]
        %v2743 = vld [vmem:[%s293 + $0x5c] sm:$0xf]
        %v2744 = vld [vmem:[%s293 + $0x60] sm:$0xf]
        %v2745 = vld [vmem:[%s293 + $0x64] sm:$0xf]
        %v2746 = vld [vmem:[%s293 + $0x68] sm:$0xf]
        %v2747 = vld [vmem:[%s293 + $0x6c] sm:$0xf]
        %v2748 = vld [vmem:[%s293 + $0x70] sm:$0xf]
        %v2749 = vld [vmem:[%s293 + $0x74] sm:$0xf]
        %v2750 = vld [vmem:[%s293 + $0x78] sm:$0xf]
        %v2751 = vld [vmem:[%s293 + $0x7c] sm:$0xf]
        %v2752 = vld [vmem:[%s305] sm:$0xf]
        %v2753 = vld [vmem:[%s305 + $0x4] sm:$0xf]
        %v2754 = vld [vmem:[%s305 + $0x8] sm:$0xf]
        %v2755 = vld [vmem:[%s305 + $0xc] sm:$0xf]
        %v2756 = vld [vmem:[%s305 + $0x10] sm:$0xf]
        %v2757 = vld [vmem:[%s305 + $0x14] sm:$0xf]
        %v2758 = vld [vmem:[%s305 + $0x18] sm:$0xf]
        %v2759 = vld [vmem:[%s305 + $0x1c] sm:$0xf]
        %v2760 = vld [vmem:[%s305 + $0x20] sm:$0xf]
        %v2761 = vld [vmem:[%s305 + $0x24] sm:$0xf]
        %v2762 = vld [vmem:[%s305 + $0x28] sm:$0xf]
        %v2763 = vld [vmem:[%s305 + $0x2c] sm:$0xf]
        %v2764 = vld [vmem:[%s305 + $0x30] sm:$0xf]
        %v2765 = vld [vmem:[%s305 + $0x34] sm:$0xf]
        %v2766 = vld [vmem:[%s305 + $0x38] sm:$0xf]
        %v2767 = vld [vmem:[%s305 + $0x3c] sm:$0xf]
        %v2768 = vld [vmem:[%s305 + $0x40] sm:$0xf]
        %v2769 = vld [vmem:[%s305 + $0x44] sm:$0xf]
        %v2770 = vld [vmem:[%s305 + $0x48] sm:$0xf]
        %v2771 = vld [vmem:[%s305 + $0x4c] sm:$0xf]
        %v2772 = vld [vmem:[%s305 + $0x50] sm:$0xf]
        %v2773 = vld [vmem:[%s305 + $0x54] sm:$0xf]
        %v2774 = vld [vmem:[%s305 + $0x58] sm:$0xf]
        %v2775 = vld [vmem:[%s305 + $0x5c] sm:$0xf]
        %v2776 = vld [vmem:[%s305 + $0x60] sm:$0xf]
        %v2777 = vld [vmem:[%s305 + $0x64] sm:$0xf]
        %v2778 = vld [vmem:[%s305 + $0x68] sm:$0xf]
        %v2779 = vld [vmem:[%s305 + $0x6c] sm:$0xf]
        %v2780 = vld [vmem:[%s305 + $0x70] sm:$0xf]
        %v2781 = vld [vmem:[%s305 + $0x74] sm:$0xf]
        %v2782 = vld [vmem:[%s305 + $0x78] sm:$0xf]
        %v2783 = vld [vmem:[%s305 + $0x7c] sm:$0xf]
        %v2816 = vunpack.c.l.b16 %v2688
        %v2817 = vunpack.c.l.b16 %v2689
        %v2818 = vunpack.c.l.b16 %v2690
        %v2819 = vunpack.c.l.b16 %v2691
        %v2820 = vunpack.c.l.b16 %v2692
        %v2821 = vunpack.c.l.b16 %v2693
        %v2822 = vunpack.c.l.b16 %v2694
        %v2823 = vunpack.c.l.b16 %v2695
        %v2824 = vunpack.c.l.b16 %v2696
        %v2825 = vunpack.c.l.b16 %v2697
        %v2826 = vunpack.c.l.b16 %v2698
        %v2827 = vunpack.c.l.b16 %v2699
        %v2828 = vunpack.c.l.b16 %v2700
        %v2829 = vunpack.c.l.b16 %v2701
        %v2830 = vunpack.c.l.b16 %v2702
        %v2831 = vunpack.c.l.b16 %v2703
        %v2832 = vunpack.c.l.b16 %v2704
        %v2833 = vunpack.c.l.b16 %v2705
        %v2834 = vunpack.c.l.b16 %v2706
        %v2835 = vunpack.c.l.b16 %v2707
        %v2836 = vunpack.c.l.b16 %v2708
        %v2837 = vunpack.c.l.b16 %v2709
        %v2838 = vunpack.c.l.b16 %v2710
        %v2839 = vunpack.c.l.b16 %v2711
        %v2840 = vunpack.c.l.b16 %v2712
        %v2841 = vunpack.c.l.b16 %v2713
        %v2842 = vunpack.c.l.b16 %v2714
        %v2843 = vunpack.c.l.b16 %v2715
        %v2844 = vunpack.c.l.b16 %v2716
        %v2845 = vunpack.c.l.b16 %v2717
        %v2846 = vunpack.c.l.b16 %v2718
        %v2847 = vunpack.c.l.b16 %v2719
        %v2848 = vpack.c.b16 %v2817, %v2816
        %v2849 = vpack.c.b16 %v2819, %v2818
        %v2850 = vpack.c.b16 %v2821, %v2820
        %v2851 = vpack.c.b16 %v2823, %v2822
        %v2852 = vpack.c.b16 %v2825, %v2824
        %v2853 = vpack.c.b16 %v2827, %v2826
        %v2854 = vpack.c.b16 %v2829, %v2828
        %v2855 = vpack.c.b16 %v2831, %v2830
        %v2856 = vpack.c.b16 %v2833, %v2832
        %v2857 = vpack.c.b16 %v2835, %v2834
        %v2858 = vpack.c.b16 %v2837, %v2836
        %v2859 = vpack.c.b16 %v2839, %v2838
        %v2860 = vpack.c.b16 %v2841, %v2840
        %v2861 = vpack.c.b16 %v2843, %v2842
        %v2862 = vpack.c.b16 %v2845, %v2844
        %v2863 = vpack.c.b16 %v2847, %v2846
        %v2896 = vunpack.c.l.b16 %v2720
        %v2897 = vunpack.c.l.b16 %v2721
        %v2898 = vunpack.c.l.b16 %v2722
        %v2899 = vunpack.c.l.b16 %v2723
        %v2900 = vunpack.c.l.b16 %v2724
        %v2901 = vunpack.c.l.b16 %v2725
        %v2902 = vunpack.c.l.b16 %v2726
        %v2903 = vunpack.c.l.b16 %v2727
        %v2904 = vunpack.c.l.b16 %v2728
        %v2905 = vunpack.c.l.b16 %v2729
        %v2906 = vunpack.c.l.b16 %v2730
        %v2907 = vunpack.c.l.b16 %v2731
        %v2908 = vunpack.c.l.b16 %v2732
        %v2909 = vunpack.c.l.b16 %v2733
        %v2910 = vunpack.c.l.b16 %v2734
        %v2911 = vunpack.c.l.b16 %v2735
        %v2912 = vunpack.c.l.b16 %v2736
        %v2913 = vunpack.c.l.b16 %v2737
        %v2914 = vunpack.c.l.b16 %v2738
        %v2915 = vunpack.c.l.b16 %v2739
        %v2916 = vunpack.c.l.b16 %v2740
        %v2917 = vunpack.c.l.b16 %v2741
        %v2918 = vunpack.c.l.b16 %v2742
        %v2919 = vunpack.c.l.b16 %v2743
        %v2920 = vunpack.c.l.b16 %v2744
        %v2921 = vunpack.c.l.b16 %v2745
        %v2922 = vunpack.c.l.b16 %v2746
        %v2923 = vunpack.c.l.b16 %v2747
        %v2924 = vunpack.c.l.b16 %v2748
        %v2925 = vunpack.c.l.b16 %v2749
        %v2926 = vunpack.c.l.b16 %v2750
        %v2927 = vunpack.c.l.b16 %v2751
        %v2928 = vpack.c.b16 %v2897, %v2896
        %v2929 = vpack.c.b16 %v2899, %v2898
        %v2930 = vpack.c.b16 %v2901, %v2900
        %v2931 = vpack.c.b16 %v2903, %v2902
        %v2932 = vpack.c.b16 %v2905, %v2904
        %v2933 = vpack.c.b16 %v2907, %v2906
        %v2934 = vpack.c.b16 %v2909, %v2908
        %v2935 = vpack.c.b16 %v2911, %v2910
        %v2936 = vpack.c.b16 %v2913, %v2912
        %v2937 = vpack.c.b16 %v2915, %v2914
        %v2938 = vpack.c.b16 %v2917, %v2916
        %v2939 = vpack.c.b16 %v2919, %v2918
        %v2940 = vpack.c.b16 %v2921, %v2920
        %v2941 = vpack.c.b16 %v2923, %v2922
        %v2942 = vpack.c.b16 %v2925, %v2924
        %v2943 = vpack.c.b16 %v2927, %v2926
        %vm2944 = vcmask 523264
        %v2946 = vsel %vm2944, %v2848, 0
        %v2949 = vsel %vm2944, %v2849, 0
        %v2952 = vsel %vm2944, %v2850, 0
        %v2955 = vsel %vm2944, %v2851, 0
        %v2958 = vsel %vm2944, %v2852, 0
        %v2961 = vsel %vm2944, %v2853, 0
        %v2964 = vsel %vm2944, %v2854, 0
        %v2967 = vsel %vm2944, %v2855, 0
        %v2970 = vsel %vm2944, %v2856, 0
        %v2973 = vsel %vm2944, %v2857, 0
        %v2976 = vsel %vm2944, %v2858, 0
        %v2979 = vsel %vm2944, %v2859, 0
        %v2982 = vsel %vm2944, %v2860, 0
        %v2985 = vsel %vm2944, %v2861, 0
        %v2988 = vsel %vm2944, %v2862, 0
        %v2991 = vsel %vm2944, %v2863, 0
        %v2994 = vsel %vm2944, %v2928, 0
        %v2997 = vsel %vm2944, %v2929, 0
        %v3000 = vsel %vm2944, %v2930, 0
        %v3003 = vsel %vm2944, %v2931, 0
        %v3006 = vsel %vm2944, %v2932, 0
        %v3009 = vsel %vm2944, %v2933, 0
        %v3012 = vsel %vm2944, %v2934, 0
        %v3015 = vsel %vm2944, %v2935, 0
        %v3018 = vsel %vm2944, %v2936, 0
        %v3021 = vsel %vm2944, %v2937, 0
        %v3024 = vsel %vm2944, %v2938, 0
        %v3027 = vsel %vm2944, %v2939, 0
        %v3030 = vsel %vm2944, %v2940, 0
        %v3033 = vsel %vm2944, %v2941, 0
        %v3036 = vsel %vm2944, %v2942, 0
        %v3039 = vsel %vm2944, %v2943, 0
        %3041 = vmatprep.subr.bf16.mxu0 0
        %3042 = vmatpush1.bf16.xpose.msra.mxu0 %v2994
        %3043 = vmatprep.subr.bf16.mxu0 0
        %3044 = vmatpush1.bf16.xpose.msra.mxu0 %v2997
        %3045 = vmatprep.subr.bf16.mxu0 0
        %3046 = vmatpush1.bf16.xpose.msra.mxu0 %v3000
        %3047 = vmatprep.subr.bf16.mxu0 0
        %3048 = vmatpush1.bf16.xpose.msra.mxu0 %v3003
        %3049 = vmatprep.subr.bf16.mxu0 0
        %3050 = vmatpush1.bf16.xpose.msra.mxu0 %v3006
        %3051 = vmatprep.subr.bf16.mxu0 0
        %3052 = vmatpush1.bf16.xpose.msra.mxu0 %v3009
        %3053 = vmatprep.subr.bf16.mxu0 0
        %3054 = vmatpush1.bf16.xpose.msra.mxu0 %v3012
        %3055 = vmatprep.subr.bf16.mxu0 0
        %3056 = vmatpush1.bf16.xpose.msra.mxu0 %v3015
        %3057 = vmatprep.subr.bf16.mxu0 0
        %3058 = vmatpush1.bf16.xpose.msra.mxu0 %v3018
        %3059 = vmatprep.subr.bf16.mxu0 0
        %3060 = vmatpush1.bf16.xpose.msra.mxu0 %v3021
        %3061 = vmatprep.subr.bf16.mxu0 0
        %3062 = vmatpush1.bf16.xpose.msra.mxu0 %v3024
        %3063 = vmatprep.subr.bf16.mxu0 0
        %3064 = vmatpush1.bf16.xpose.msra.mxu0 %v3027
        %3065 = vmatprep.subr.bf16.mxu0 0
        %3066 = vmatpush1.bf16.xpose.msra.mxu0 %v3030
        %3067 = vmatprep.subr.bf16.mxu0 0
        %3068 = vmatpush1.bf16.xpose.msra.mxu0 %v3033
        %3069 = vmatprep.subr.bf16.mxu0 0
        %3070 = vmatpush1.bf16.xpose.msra.mxu0 %v3036
        %3071 = vmatprep.subr.bf16.mxu0 0
        %3072 = vmatpush1.bf16.xpose.msra.mxu0 %v3039
        %3073 = vmatprep.mubr.bf16.mxu0 0
        %3074 = vmatmul.mubr.bf16.gmra.mrb[0].mxu0 %v2946
        %v3075 = vpop.f32.mrb[0].mxu0
        %v3076 = vadd.f32 0.0, %v3075
        %v3077 = vpop.f32.mrb[0].mxu0
        %v3078 = vadd.f32 0.0, %v3077
        %v3079 = vpop.f32.mrb[0].mxu0
        %v3080 = vadd.f32 0.0, %v3079
        %v3081 = vpop.f32.mrb[0].mxu0
        %v3082 = vadd.f32 0.0, %v3081
        %3083 = vmatprep.mubr.bf16.mxu0 0
        %3084 = vmatmul.mubr.bf16.gmra.mrb[0].mxu0 %v2949
        %v3085 = vpop.f32.mrb[0].mxu0
        %v3086 = vadd.f32 0.0, %v3085
        %v3087 = vpop.f32.mrb[0].mxu0
        %v3088 = vadd.f32 0.0, %v3087
        %v3089 = vpop.f32.mrb[0].mxu0
        %v3090 = vadd.f32 0.0, %v3089
        %v3091 = vpop.f32.mrb[0].mxu0
        %v3092 = vadd.f32 0.0, %v3091
        %3093 = vmatprep.mubr.bf16.mxu0 0
        %3094 = vmatmul.mubr.bf16.gmra.mrb[0].mxu0 %v2952
        %v3095 = vpop.f32.mrb[0].mxu0
        %v3096 = vadd.f32 0.0, %v3095
        %v3097 = vpop.f32.mrb[0].mxu0
        %v3098 = vadd.f32 0.0, %v3097
        %v3099 = vpop.f32.mrb[0].mxu0
        %v3100 = vadd.f32 0.0, %v3099
        %v3101 = vpop.f32.mrb[0].mxu0
        %v3102 = vadd.f32 0.0, %v3101
        %3103 = vmatprep.mubr.bf16.mxu0 0
        %3104 = vmatmul.mubr.bf16.gmra.mrb[0].mxu0 %v2955
        %v3105 = vpop.f32.mrb[0].mxu0
        %v3106 = vadd.f32 0.0, %v3105
        %v3107 = vpop.f32.mrb[0].mxu0
        %v3108 = vadd.f32 0.0, %v3107
        %v3109 = vpop.f32.mrb[0].mxu0
        %v3110 = vadd.f32 0.0, %v3109
        %v3111 = vpop.f32.mrb[0].mxu0
        %v3112 = vadd.f32 0.0, %v3111
        %3113 = vmatprep.mubr.bf16.mxu0 0
        %3114 = vmatmul.mubr.bf16.gmra.mrb[0].mxu0 %v2958
        %v3115 = vpop.f32.mrb[0].mxu0
        %v3116 = vadd.f32 0.0, %v3115
        %v3117 = vpop.f32.mrb[0].mxu0
        %v3118 = vadd.f32 0.0, %v3117
        %v3119 = vpop.f32.mrb[0].mxu0
        %v3120 = vadd.f32 0.0, %v3119
        %v3121 = vpop.f32.mrb[0].mxu0
        %v3122 = vadd.f32 0.0, %v3121
        %3123 = vmatprep.mubr.bf16.mxu0 0
        %3124 = vmatmul.mubr.bf16.gmra.mrb[0].mxu0 %v2961
        %v3125 = vpop.f32.mrb[0].mxu0
        %v3126 = vadd.f32 0.0, %v3125
        %v3127 = vpop.f32.mrb[0].mxu0
        %v3128 = vadd.f32 0.0, %v3127
        %v3129 = vpop.f32.mrb[0].mxu0
        %v3130 = vadd.f32 0.0, %v3129
        %v3131 = vpop.f32.mrb[0].mxu0
        %v3132 = vadd.f32 0.0, %v3131
        %3133 = vmatprep.mubr.bf16.mxu0 0
        %3134 = vmatmul.mubr.bf16.gmra.mrb[0].mxu0 %v2964
        %v3135 = vpop.f32.mrb[0].mxu0
        %v3136 = vadd.f32 0.0, %v3135
        %v3137 = vpop.f32.mrb[0].mxu0
        %v3138 = vadd.f32 0.0, %v3137
        %v3139 = vpop.f32.mrb[0].mxu0
        %v3140 = vadd.f32 0.0, %v3139
        %v3141 = vpop.f32.mrb[0].mxu0
        %v3142 = vadd.f32 0.0, %v3141
        %3143 = vmatprep.mubr.bf16.mxu0 0
        %3144 = vmatmul.mubr.bf16.gmra.mrb[0].mxu0 %v2967
        %v3145 = vpop.f32.mrb[0].mxu0
        %v3146 = vadd.f32 0.0, %v3145
        %v3147 = vpop.f32.mrb[0].mxu0
        %v3148 = vadd.f32 0.0, %v3147
        %v3149 = vpop.f32.mrb[0].mxu0
        %v3150 = vadd.f32 0.0, %v3149
        %v3151 = vpop.f32.mrb[0].mxu0
        %v3152 = vadd.f32 0.0, %v3151
        %3153 = vmatprep.mubr.bf16.mxu0 0
        %3154 = vmatmul.mubr.bf16.gmra.mrb[0].mxu0 %v2970
        %v3155 = vpop.f32.mrb[0].mxu0
        %v3156 = vadd.f32 0.0, %v3155
        %v3157 = vpop.f32.mrb[0].mxu0
        %v3158 = vadd.f32 0.0, %v3157
        %v3159 = vpop.f32.mrb[0].mxu0
        %v3160 = vadd.f32 0.0, %v3159
        %v3161 = vpop.f32.mrb[0].mxu0
        %v3162 = vadd.f32 0.0, %v3161
        %3163 = vmatprep.mubr.bf16.mxu0 0
        %3164 = vmatmul.mubr.bf16.gmra.mrb[0].mxu0 %v2973
        %v3165 = vpop.f32.mrb[0].mxu0
        %v3166 = vadd.f32 0.0, %v3165
        %v3167 = vpop.f32.mrb[0].mxu0
        %v3168 = vadd.f32 0.0, %v3167
        %v3169 = vpop.f32.mrb[0].mxu0
        %v3170 = vadd.f32 0.0, %v3169
        %v3171 = vpop.f32.mrb[0].mxu0
        %v3172 = vadd.f32 0.0, %v3171
        %3173 = vmatprep.mubr.bf16.mxu0 0
        %3174 = vmatmul.mubr.bf16.gmra.mrb[0].mxu0 %v2976
        %v3175 = vpop.f32.mrb[0].mxu0
        %v3176 = vadd.f32 0.0, %v3175
        %v3177 = vpop.f32.mrb[0].mxu0
        %v3178 = vadd.f32 0.0, %v3177
        %v3179 = vpop.f32.mrb[0].mxu0
        %v3180 = vadd.f32 0.0, %v3179
        %v3181 = vpop.f32.mrb[0].mxu0
        %v3182 = vadd.f32 0.0, %v3181
        %3183 = vmatprep.mubr.bf16.mxu0 0
        %3184 = vmatmul.mubr.bf16.gmra.mrb[0].mxu0 %v2979
        %v3185 = vpop.f32.mrb[0].mxu0
        %v3186 = vadd.f32 0.0, %v3185
        %v3187 = vpop.f32.mrb[0].mxu0
        %v3188 = vadd.f32 0.0, %v3187
        %v3189 = vpop.f32.mrb[0].mxu0
        %v3190 = vadd.f32 0.0, %v3189
        %v3191 = vpop.f32.mrb[0].mxu0
        %v3192 = vadd.f32 0.0, %v3191
        %3193 = vmatprep.mubr.bf16.mxu0 0
        %3194 = vmatmul.mubr.bf16.gmra.mrb[0].mxu0 %v2982
        %v3195 = vpop.f32.mrb[0].mxu0
        %v3196 = vadd.f32 0.0, %v3195
        %v3197 = vpop.f32.mrb[0].mxu0
        %v3198 = vadd.f32 0.0, %v3197
        %v3199 = vpop.f32.mrb[0].mxu0
        %v3200 = vadd.f32 0.0, %v3199
        %v3201 = vpop.f32.mrb[0].mxu0
        %v3202 = vadd.f32 0.0, %v3201
        %3203 = vmatprep.mubr.bf16.mxu0 0
        %3204 = vmatmul.mubr.bf16.gmra.mrb[0].mxu0 %v2985
        %v3205 = vpop.f32.mrb[0].mxu0
        %v3206 = vadd.f32 0.0, %v3205
        %v3207 = vpop.f32.mrb[0].mxu0
        %v3208 = vadd.f32 0.0, %v3207
        %v3209 = vpop.f32.mrb[0].mxu0
        %v3210 = vadd.f32 0.0, %v3209
        %v3211 = vpop.f32.mrb[0].mxu0
        %v3212 = vadd.f32 0.0, %v3211
        %3213 = vmatprep.mubr.bf16.mxu0 0
        %3214 = vmatmul.mubr.bf16.gmra.mrb[0].mxu0 %v2988
        %v3215 = vpop.f32.mrb[0].mxu0
        %v3216 = vadd.f32 0.0, %v3215
        %v3217 = vpop.f32.mrb[0].mxu0
        %v3218 = vadd.f32 0.0, %v3217
        %v3219 = vpop.f32.mrb[0].mxu0
        %v3220 = vadd.f32 0.0, %v3219
        %v3221 = vpop.f32.mrb[0].mxu0
        %v3222 = vadd.f32 0.0, %v3221
        %3223 = vmatprep.mubr.bf16.mxu0 0
        %3224 = vmatmul.mubr.bf16.gmra.mrb[0].mxu0 %v2991
        %v3225 = vpop.f32.mrb[0].mxu0
        %v3226 = vadd.f32 0.0, %v3225
        %v3227 = vpop.f32.mrb[0].mxu0
        %v3228 = vadd.f32 0.0, %v3227
        %v3229 = vpop.f32.mrb[0].mxu0
        %v3230 = vadd.f32 0.0, %v3229
        %v3231 = vpop.f32.mrb[0].mxu0
        %v3232 = vadd.f32 0.0, %v3231
        %3233 = vdwg.mxu0
        %v3234 = vld [vmem:[#allocation2] sm:$0xff]
        %v3235 = vld [vmem:[#allocation2 + $0x8] sm:$0xff]
        %v3236 = vld [vmem:[#allocation2 + $0x10] sm:$0xff]
        %v3237 = vld [vmem:[#allocation2 + $0x18] sm:$0xff]
        %v3238 = vld [vmem:[#allocation2 + $0x20] sm:$0xff]
        %v3239 = vld [vmem:[#allocation2 + $0x28] sm:$0xff]
        %v3240 = vld [vmem:[#allocation2 + $0x30] sm:$0xff]
        %v3241 = vld [vmem:[#allocation2 + $0x38] sm:$0xff]
        %v3242 = vld [vmem:[#allocation2 + $0x40] sm:$0xff]
        %v3243 = vld [vmem:[#allocation2 + $0x48] sm:$0xff]
        %v3244 = vld [vmem:[#allocation2 + $0x50] sm:$0xff]
        %v3245 = vld [vmem:[#allocation2 + $0x58] sm:$0xff]
        %v3246 = vld [vmem:[#allocation2 + $0x60] sm:$0xff]
        %v3247 = vld [vmem:[#allocation2 + $0x68] sm:$0xff]
        %v3248 = vld [vmem:[#allocation2 + $0x70] sm:$0xff]
        %v3249 = vld [vmem:[#allocation2 + $0x78] sm:$0xff]
        %v3250 = vld [vmem:[#allocation2 + $0x80] sm:$0xff]
        %v3251 = vld [vmem:[#allocation2 + $0x88] sm:$0xff]
        %v3252 = vld [vmem:[#allocation2 + $0x90] sm:$0xff]
        %v3253 = vld [vmem:[#allocation2 + $0x98] sm:$0xff]
        %v3254 = vld [vmem:[#allocation2 + $0xa0] sm:$0xff]
        %v3255 = vld [vmem:[#allocation2 + $0xa8] sm:$0xff]
        %v3256 = vld [vmem:[#allocation2 + $0xb0] sm:$0xff]
        %v3257 = vld [vmem:[#allocation2 + $0xb8] sm:$0xff]
        %v3258 = vld [vmem:[#allocation2 + $0xc0] sm:$0xff]
        %v3259 = vld [vmem:[#allocation2 + $0xc8] sm:$0xff]
        %v3260 = vld [vmem:[#allocation2 + $0xd0] sm:$0xff]
        %v3261 = vld [vmem:[#allocation2 + $0xd8] sm:$0xff]
        %v3262 = vld [vmem:[#allocation2 + $0xe0] sm:$0xff]
        %v3263 = vld [vmem:[#allocation2 + $0xe8] sm:$0xff]
        %v3264 = vld [vmem:[#allocation2 + $0xf0] sm:$0xff]
        %v3265 = vld [vmem:[#allocation2 + $0xf8] sm:$0xff]
        %v3266 = vmax.f32 %v3076, %v3078
        %3267 = vmax.xlane.f32.xlu0 %v3266
        %v3268 = vpop.xlane.xlu0 %3267
        %v3269 = vmax.f32 %v3080, %v3082
        %3270 = vmax.xlane.f32.xlu0 %v3269
        %v3271 = vpop.xlane.xlu0 %3270
        %v3272 = vmax.f32 %v3086, %v3088
        %3273 = vmax.xlane.f32.xlu0 %v3272
        %v3274 = vpop.xlane.xlu0 %3273
        %v3275 = vmax.f32 %v3090, %v3092
        %3276 = vmax.xlane.f32.xlu0 %v3275
        %v3277 = vpop.xlane.xlu0 %3276
        %v3278 = vmax.f32 %v3096, %v3098
        %3279 = vmax.xlane.f32.xlu0 %v3278
        %v3280 = vpop.xlane.xlu0 %3279
        %v3281 = vmax.f32 %v3100, %v3102
        %3282 = vmax.xlane.f32.xlu0 %v3281
        %v3283 = vpop.xlane.xlu0 %3282
        %v3284 = vmax.f32 %v3106, %v3108
        %3285 = vmax.xlane.f32.xlu0 %v3284
        %v3286 = vpop.xlane.xlu0 %3285
        %v3287 = vmax.f32 %v3110, %v3112
        %3288 = vmax.xlane.f32.xlu0 %v3287
        %v3289 = vpop.xlane.xlu0 %3288
        %v3290 = vmax.f32 %v3116, %v3118
        %3291 = vmax.xlane.f32.xlu0 %v3290
        %v3292 = vpop.xlane.xlu0 %3291
        %v3293 = vmax.f32 %v3120, %v3122
        %3294 = vmax.xlane.f32.xlu0 %v3293
        %v3295 = vpop.xlane.xlu0 %3294
        %v3296 = vmax.f32 %v3126, %v3128
        %3297 = vmax.xlane.f32.xlu0 %v3296
        %v3298 = vpop.xlane.xlu0 %3297
        %v3299 = vmax.f32 %v3130, %v3132
        %3300 = vmax.xlane.f32.xlu0 %v3299
        %v3301 = vpop.xlane.xlu0 %3300
        %v3302 = vmax.f32 %v3136, %v3138
        %3303 = vmax.xlane.f32.xlu0 %v3302
        %v3304 = vpop.xlane.xlu0 %3303
        %v3305 = vmax.f32 %v3140, %v3142
        %3306 = vmax.xlane.f32.xlu0 %v3305
        %v3307 = vpop.xlane.xlu0 %3306
        %v3308 = vmax.f32 %v3146, %v3148
        %3309 = vmax.xlane.f32.xlu0 %v3308
        %v3310 = vpop.xlane.xlu0 %3309
        %v3311 = vmax.f32 %v3150, %v3152
        %3312 = vmax.xlane.f32.xlu0 %v3311
        %v3313 = vpop.xlane.xlu0 %3312
        %v3314 = vmax.f32 %v3156, %v3158
        %3315 = vmax.xlane.f32.xlu0 %v3314
        %v3316 = vpop.xlane.xlu0 %3315
        %v3317 = vmax.f32 %v3160, %v3162
        %3318 = vmax.xlane.f32.xlu0 %v3317
        %v3319 = vpop.xlane.xlu0 %3318
        %v3320 = vmax.f32 %v3166, %v3168
        %3321 = vmax.xlane.f32.xlu0 %v3320
        %v3322 = vpop.xlane.xlu0 %3321
        %v3323 = vmax.f32 %v3170, %v3172
        %3324 = vmax.xlane.f32.xlu0 %v3323
        %v3325 = vpop.xlane.xlu0 %3324
        %v3326 = vmax.f32 %v3176, %v3178
        %3327 = vmax.xlane.f32.xlu0 %v3326
        %v3328 = vpop.xlane.xlu0 %3327
        %v3329 = vmax.f32 %v3180, %v3182
        %3330 = vmax.xlane.f32.xlu0 %v3329
        %v3331 = vpop.xlane.xlu0 %3330
        %v3332 = vmax.f32 %v3186, %v3188
        %3333 = vmax.xlane.f32.xlu0 %v3332
        %v3334 = vpop.xlane.xlu0 %3333
        %v3335 = vmax.f32 %v3190, %v3192
        %3336 = vmax.xlane.f32.xlu0 %v3335
        %v3337 = vpop.xlane.xlu0 %3336
        %v3338 = vmax.f32 %v3196, %v3198
        %3339 = vmax.xlane.f32.xlu0 %v3338
        %v3340 = vpop.xlane.xlu0 %3339
        %v3341 = vmax.f32 %v3200, %v3202
        %3342 = vmax.xlane.f32.xlu0 %v3341
        %v3343 = vpop.xlane.xlu0 %3342
        %v3344 = vmax.f32 %v3206, %v3208
        %3345 = vmax.xlane.f32.xlu0 %v3344
        %v3346 = vpop.xlane.xlu0 %3345
        %v3347 = vmax.f32 %v3210, %v3212
        %3348 = vmax.xlane.f32.xlu0 %v3347
        %v3349 = vpop.xlane.xlu0 %3348
        %v3350 = vmax.f32 %v3216, %v3218
        %3351 = vmax.xlane.f32.xlu0 %v3350
        %v3352 = vpop.xlane.xlu0 %3351
        %v3353 = vmax.f32 %v3220, %v3222
        %3354 = vmax.xlane.f32.xlu0 %v3353
        %v3355 = vpop.xlane.xlu0 %3354
        %v3356 = vmax.f32 %v3226, %v3228
        %3357 = vmax.xlane.f32.xlu0 %v3356
        %v3358 = vpop.xlane.xlu0 %3357
        %v3359 = vmax.f32 %v3230, %v3232
        %3360 = vmax.xlane.f32.xlu0 %v3359
        %v3361 = vpop.xlane.xlu0 %3360
        %v3362 = vmax.f32 %v3234, %v3268
        %v3363 = vmax.f32 %v3235, %v3271
        %v3364 = vmax.f32 %v3236, %v3274
        %v3365 = vmax.f32 %v3237, %v3277
        %v3366 = vmax.f32 %v3238, %v3280
        %v3367 = vmax.f32 %v3239, %v3283
        %v3368 = vmax.f32 %v3240, %v3286
        %v3369 = vmax.f32 %v3241, %v3289
        %v3370 = vmax.f32 %v3242, %v3292
        %v3371 = vmax.f32 %v3243, %v3295
        %v3372 = vmax.f32 %v3244, %v3298
        %v3373 = vmax.f32 %v3245, %v3301
        %v3374 = vmax.f32 %v3246, %v3304
        %v3375 = vmax.f32 %v3247, %v3307
        %v3376 = vmax.f32 %v3248, %v3310
        %v3377 = vmax.f32 %v3249, %v3313
        %v3378 = vmax.f32 %v3250, %v3316
        %v3379 = vmax.f32 %v3251, %v3319
        %v3380 = vmax.f32 %v3252, %v3322
        %v3381 = vmax.f32 %v3253, %v3325
        %v3382 = vmax.f32 %v3254, %v3328
        %v3383 = vmax.f32 %v3255, %v3331
        %v3384 = vmax.f32 %v3256, %v3334
        %v3385 = vmax.f32 %v3257, %v3337
        %v3386 = vmax.f32 %v3258, %v3340
        %v3387 = vmax.f32 %v3259, %v3343
        %v3388 = vmax.f32 %v3260, %v3346
        %v3389 = vmax.f32 %v3261, %v3349
        %v3390 = vmax.f32 %v3262, %v3352
        %v3391 = vmax.f32 %v3263, %v3355
        %v3392 = vmax.f32 %v3264, %v3358
        %v3393 = vmax.f32 %v3265, %v3361
        %v3394 = vsub.f32 %v3234, %v3362
        %v3395 = vsub.f32 %v3235, %v3363
        %v3396 = vsub.f32 %v3236, %v3364
        %v3397 = vsub.f32 %v3237, %v3365
        %v3398 = vsub.f32 %v3238, %v3366
        %v3399 = vsub.f32 %v3239, %v3367
        %v3400 = vsub.f32 %v3240, %v3368
        %v3401 = vsub.f32 %v3241, %v3369
        %v3402 = vsub.f32 %v3242, %v3370
        %v3403 = vsub.f32 %v3243, %v3371
        %v3404 = vsub.f32 %v3244, %v3372
        %v3405 = vsub.f32 %v3245, %v3373
        %v3406 = vsub.f32 %v3246, %v3374
        %v3407 = vsub.f32 %v3247, %v3375
        %v3408 = vsub.f32 %v3248, %v3376
        %v3409 = vsub.f32 %v3249, %v3377
        %v3410 = vsub.f32 %v3250, %v3378
        %v3411 = vsub.f32 %v3251, %v3379
        %v3412 = vsub.f32 %v3252, %v3380
        %v3413 = vsub.f32 %v3253, %v3381
        %v3414 = vsub.f32 %v3254, %v3382
        %v3415 = vsub.f32 %v3255, %v3383
        %v3416 = vsub.f32 %v3256, %v3384
        %v3417 = vsub.f32 %v3257, %v3385
        %v3418 = vsub.f32 %v3258, %v3386
        %v3419 = vsub.f32 %v3259, %v3387
        %v3420 = vsub.f32 %v3260, %v3388
        %v3421 = vsub.f32 %v3261, %v3389
        %v3422 = vsub.f32 %v3262, %v3390
        %v3423 = vsub.f32 %v3263, %v3391
        %v3424 = vsub.f32 %v3264, %v3392
        %v3425 = vsub.f32 %v3265, %v3393
        %v3426 = vmul.f32 %v3394, 1.442695
        %v3427 = vpow.pop %v3426
        %v3428 = vmul.f32 %v3395, 1.442695
        %v3429 = vpow.pop %v3428
        %v3430 = vmul.f32 %v3396, 1.442695
        %v3431 = vpow.pop %v3430
        %v3432 = vmul.f32 %v3397, 1.442695
        %v3433 = vpow.pop %v3432
        %v3434 = vmul.f32 %v3398, 1.442695
        %v3435 = vpow.pop %v3434
        %v3436 = vmul.f32 %v3399, 1.442695
        %v3437 = vpow.pop %v3436
        %v3438 = vmul.f32 %v3400, 1.442695
        %v3439 = vpow.pop %v3438
        %v3440 = vmul.f32 %v3401, 1.442695
        %v3441 = vpow.pop %v3440
        %v3442 = vmul.f32 %v3402, 1.442695
        %v3443 = vpow.pop %v3442
        %v3444 = vmul.f32 %v3403, 1.442695
        %v3445 = vpow.pop %v3444
        %v3446 = vmul.f32 %v3404, 1.442695
        %v3447 = vpow.pop %v3446
        %v3448 = vmul.f32 %v3405, 1.442695
        %v3449 = vpow.pop %v3448
        %v3450 = vmul.f32 %v3406, 1.442695
        %v3451 = vpow.pop %v3450
        %v3452 = vmul.f32 %v3407, 1.442695
        %v3453 = vpow.pop %v3452
        %v3454 = vmul.f32 %v3408, 1.442695
        %v3455 = vpow.pop %v3454
        %v3456 = vmul.f32 %v3409, 1.442695
        %v3457 = vpow.pop %v3456
        %v3458 = vmul.f32 %v3410, 1.442695
        %v3459 = vpow.pop %v3458
        %v3460 = vmul.f32 %v3411, 1.442695
        %v3461 = vpow.pop %v3460
        %v3462 = vmul.f32 %v3412, 1.442695
        %v3463 = vpow.pop %v3462
        %v3464 = vmul.f32 %v3413, 1.442695
        %v3465 = vpow.pop %v3464
        %v3466 = vmul.f32 %v3414, 1.442695
        %v3467 = vpow.pop %v3466
        %v3468 = vmul.f32 %v3415, 1.442695
        %v3469 = vpow.pop %v3468
        %v3470 = vmul.f32 %v3416, 1.442695
        %v3471 = vpow.pop %v3470
        %v3472 = vmul.f32 %v3417, 1.442695
        %v3473 = vpow.pop %v3472
        %v3474 = vmul.f32 %v3418, 1.442695
        %v3475 = vpow.pop %v3474
        %v3476 = vmul.f32 %v3419, 1.442695
        %v3477 = vpow.pop %v3476
        %v3478 = vmul.f32 %v3420, 1.442695
        %v3479 = vpow.pop %v3478
        %v3480 = vmul.f32 %v3421, 1.442695
        %v3481 = vpow.pop %v3480
        %v3482 = vmul.f32 %v3422, 1.442695
        %v3483 = vpow.pop %v3482
        %v3484 = vmul.f32 %v3423, 1.442695
        %v3485 = vpow.pop %v3484
        %v3486 = vmul.f32 %v3424, 1.442695
        %v3487 = vpow.pop %v3486
        %v3488 = vmul.f32 %v3425, 1.442695
        %v3489 = vpow.pop %v3488
        %3491 = vset.pattern.permute.xlu0 0
        %3492 = vperm.xlu0 %3491, %v3362
        %v3493 = vpop.permute.xlu0 %3492
        %3496 = vset.pattern.permute.xlu0 0
        %3497 = vperm.xlu0 %3496, %v3363
        %v3498 = vpop.permute.xlu0 %3497
        %3501 = vset.pattern.permute.xlu0 0
        %3502 = vperm.xlu0 %3501, %v3364
        %v3503 = vpop.permute.xlu0 %3502
        %3506 = vset.pattern.permute.xlu0 0
        %3507 = vperm.xlu0 %3506, %v3365
        %v3508 = vpop.permute.xlu0 %3507
        %3511 = vset.pattern.permute.xlu0 0
        %3512 = vperm.xlu0 %3511, %v3366
        %v3513 = vpop.permute.xlu0 %3512
        %3516 = vset.pattern.permute.xlu0 0
        %3517 = vperm.xlu0 %3516, %v3367
        %v3518 = vpop.permute.xlu0 %3517
        %3521 = vset.pattern.permute.xlu0 0
        %3522 = vperm.xlu0 %3521, %v3368
        %v3523 = vpop.permute.xlu0 %3522
        %3526 = vset.pattern.permute.xlu0 0
        %3527 = vperm.xlu0 %3526, %v3369
        %v3528 = vpop.permute.xlu0 %3527
        %3531 = vset.pattern.permute.xlu0 0
        %3532 = vperm.xlu0 %3531, %v3370
        %v3533 = vpop.permute.xlu0 %3532
        %3536 = vset.pattern.permute.xlu0 0
        %3537 = vperm.xlu0 %3536, %v3371
        %v3538 = vpop.permute.xlu0 %3537
        %3541 = vset.pattern.permute.xlu0 0
        %3542 = vperm.xlu0 %3541, %v3372
        %v3543 = vpop.permute.xlu0 %3542
        %3546 = vset.pattern.permute.xlu0 0
        %3547 = vperm.xlu0 %3546, %v3373
        %v3548 = vpop.permute.xlu0 %3547
        %3551 = vset.pattern.permute.xlu0 0
        %3552 = vperm.xlu0 %3551, %v3374
        %v3553 = vpop.permute.xlu0 %3552
        %3556 = vset.pattern.permute.xlu0 0
        %3557 = vperm.xlu0 %3556, %v3375
        %v3558 = vpop.permute.xlu0 %3557
        %3561 = vset.pattern.permute.xlu0 0
        %3562 = vperm.xlu0 %3561, %v3376
        %v3563 = vpop.permute.xlu0 %3562
        %3566 = vset.pattern.permute.xlu0 0
        %3567 = vperm.xlu0 %3566, %v3377
        %v3568 = vpop.permute.xlu0 %3567
        %3571 = vset.pattern.permute.xlu0 0
        %3572 = vperm.xlu0 %3571, %v3378
        %v3573 = vpop.permute.xlu0 %3572
        %3576 = vset.pattern.permute.xlu0 0
        %3577 = vperm.xlu0 %3576, %v3379
        %v3578 = vpop.permute.xlu0 %3577
        %3581 = vset.pattern.permute.xlu0 0
        %3582 = vperm.xlu0 %3581, %v3380
        %v3583 = vpop.permute.xlu0 %3582
        %3586 = vset.pattern.permute.xlu0 0
        %3587 = vperm.xlu0 %3586, %v3381
        %v3588 = vpop.permute.xlu0 %3587
        %3591 = vset.pattern.permute.xlu0 0
        %3592 = vperm.xlu0 %3591, %v3382
        %v3593 = vpop.permute.xlu0 %3592
        %3596 = vset.pattern.permute.xlu0 0
        %3597 = vperm.xlu0 %3596, %v3383
        %v3598 = vpop.permute.xlu0 %3597
        %3601 = vset.pattern.permute.xlu0 0
        %3602 = vperm.xlu0 %3601, %v3384
        %v3603 = vpop.permute.xlu0 %3602
        %3606 = vset.pattern.permute.xlu0 0
        %3607 = vperm.xlu0 %3606, %v3385
        %v3608 = vpop.permute.xlu0 %3607
        %3611 = vset.pattern.permute.xlu0 0
        %3612 = vperm.xlu0 %3611, %v3386
        %v3613 = vpop.permute.xlu0 %3612
        %3616 = vset.pattern.permute.xlu0 0
        %3617 = vperm.xlu0 %3616, %v3387
        %v3618 = vpop.permute.xlu0 %3617
        %3621 = vset.pattern.permute.xlu0 0
        %3622 = vperm.xlu0 %3621, %v3388
        %v3623 = vpop.permute.xlu0 %3622
        %3626 = vset.pattern.permute.xlu0 0
        %3627 = vperm.xlu0 %3626, %v3389
        %v3628 = vpop.permute.xlu0 %3627
        %3631 = vset.pattern.permute.xlu0 0
        %3632 = vperm.xlu0 %3631, %v3390
        %v3633 = vpop.permute.xlu0 %3632
        %3636 = vset.pattern.permute.xlu0 0
        %3637 = vperm.xlu0 %3636, %v3391
        %v3638 = vpop.permute.xlu0 %3637
        %3641 = vset.pattern.permute.xlu0 0
        %3642 = vperm.xlu0 %3641, %v3392
        %v3643 = vpop.permute.xlu0 %3642
        %3646 = vset.pattern.permute.xlu0 0
        %3647 = vperm.xlu0 %3646, %v3393
        %v3648 = vpop.permute.xlu0 %3647
        %v3650 = vsub.f32 %v3076, %v3493
        %v3651 = vsub.f32 %v3078, %v3493
        %v3652 = vsub.f32 %v3080, %v3498
        %v3653 = vsub.f32 %v3082, %v3498
        %v3654 = vsub.f32 %v3086, %v3503
        %v3655 = vsub.f32 %v3088, %v3503
        %v3656 = vsub.f32 %v3090, %v3508
        %v3657 = vsub.f32 %v3092, %v3508
        %v3658 = vsub.f32 %v3096, %v3513
        %v3659 = vsub.f32 %v3098, %v3513
        %v3660 = vsub.f32 %v3100, %v3518
        %v3661 = vsub.f32 %v3102, %v3518
        %v3662 = vsub.f32 %v3106, %v3523
        %v3663 = vsub.f32 %v3108, %v3523
        %v3664 = vsub.f32 %v3110, %v3528
        %v3665 = vsub.f32 %v3112, %v3528
        %v3666 = vsub.f32 %v3116, %v3533
        %v3667 = vsub.f32 %v3118, %v3533
        %v3668 = vsub.f32 %v3120, %v3538
        %v3669 = vsub.f32 %v3122, %v3538
        %v3670 = vsub.f32 %v3126, %v3543
        %v3671 = vsub.f32 %v3128, %v3543
        %v3672 = vsub.f32 %v3130, %v3548
        %v3673 = vsub.f32 %v3132, %v3548
        %v3674 = vsub.f32 %v3136, %v3553
        %v3675 = vsub.f32 %v3138, %v3553
        %v3676 = vsub.f32 %v3140, %v3558
        %v3677 = vsub.f32 %v3142, %v3558
        %v3678 = vsub.f32 %v3146, %v3563
        %v3679 = vsub.f32 %v3148, %v3563
        %v3680 = vsub.f32 %v3150, %v3568
        %v3681 = vsub.f32 %v3152, %v3568
        %v3682 = vsub.f32 %v3156, %v3573
        %v3683 = vsub.f32 %v3158, %v3573
        %v3684 = vsub.f32 %v3160, %v3578
        %v3685 = vsub.f32 %v3162, %v3578
        %v3686 = vsub.f32 %v3166, %v3583
        %v3687 = vsub.f32 %v3168, %v3583
        %v3688 = vsub.f32 %v3170, %v3588
        %v3689 = vsub.f32 %v3172, %v3588
        %v3690 = vsub.f32 %v3176, %v3593
        %v3691 = vsub.f32 %v3178, %v3593
        %v3692 = vsub.f32 %v3180, %v3598
        %v3693 = vsub.f32 %v3182, %v3598
        %v3694 = vsub.f32 %v3186, %v3603
        %v3695 = vsub.f32 %v3188, %v3603
        %v3696 = vsub.f32 %v3190, %v3608
        %v3697 = vsub.f32 %v3192, %v3608
        %v3698 = vsub.f32 %v3196, %v3613
        %v3699 = vsub.f32 %v3198, %v3613
        %v3700 = vsub.f32 %v3200, %v3618
        %v3701 = vsub.f32 %v3202, %v3618
        %v3702 = vsub.f32 %v3206, %v3623
        %v3703 = vsub.f32 %v3208, %v3623
        %v3704 = vsub.f32 %v3210, %v3628
        %v3705 = vsub.f32 %v3212, %v3628
        %v3706 = vsub.f32 %v3216, %v3633
        %v3707 = vsub.f32 %v3218, %v3633
        %v3708 = vsub.f32 %v3220, %v3638
        %v3709 = vsub.f32 %v3222, %v3638
        %v3710 = vsub.f32 %v3226, %v3643
        %v3711 = vsub.f32 %v3228, %v3643
        %v3712 = vsub.f32 %v3230, %v3648
        %v3713 = vsub.f32 %v3232, %v3648
        %v3714 = vmul.f32 %v3650, 1.442695
        %v3715 = vpow.pop %v3714
        %v3716 = vmul.f32 %v3651, 1.442695
        %v3717 = vpow.pop %v3716
        %v3718 = vmul.f32 %v3652, 1.442695
        %v3719 = vpow.pop %v3718
        %v3720 = vmul.f32 %v3653, 1.442695
        %v3721 = vpow.pop %v3720
        %v3722 = vmul.f32 %v3654, 1.442695
        %v3723 = vpow.pop %v3722
        %v3724 = vmul.f32 %v3655, 1.442695
        %v3725 = vpow.pop %v3724
        %v3726 = vmul.f32 %v3656, 1.442695
        %v3727 = vpow.pop %v3726
        %v3728 = vmul.f32 %v3657, 1.442695
        %v3729 = vpow.pop %v3728
        %v3730 = vmul.f32 %v3658, 1.442695
        %v3731 = vpow.pop %v3730
        %v3732 = vmul.f32 %v3659, 1.442695
        %v3733 = vpow.pop %v3732
        %v3734 = vmul.f32 %v3660, 1.442695
        %v3735 = vpow.pop %v3734
        %v3736 = vmul.f32 %v3661, 1.442695
        %v3737 = vpow.pop %v3736
        %v3738 = vmul.f32 %v3662, 1.442695
        %v3739 = vpow.pop %v3738
        %v3740 = vmul.f32 %v3663, 1.442695
        %v3741 = vpow.pop %v3740
        %v3742 = vmul.f32 %v3664, 1.442695
        %v3743 = vpow.pop %v3742
        %v3744 = vmul.f32 %v3665, 1.442695
        %v3745 = vpow.pop %v3744
        %v3746 = vmul.f32 %v3666, 1.442695
        %v3747 = vpow.pop %v3746
        %v3748 = vmul.f32 %v3667, 1.442695
        %v3749 = vpow.pop %v3748
        %v3750 = vmul.f32 %v3668, 1.442695
        %v3751 = vpow.pop %v3750
        %v3752 = vmul.f32 %v3669, 1.442695
        %v3753 = vpow.pop %v3752
        %v3754 = vmul.f32 %v3670, 1.442695
        %v3755 = vpow.pop %v3754
        %v3756 = vmul.f32 %v3671, 1.442695
        %v3757 = vpow.pop %v3756
        %v3758 = vmul.f32 %v3672, 1.442695
        %v3759 = vpow.pop %v3758
        %v3760 = vmul.f32 %v3673, 1.442695
        %v3761 = vpow.pop %v3760
        %v3762 = vmul.f32 %v3674, 1.442695
        %v3763 = vpow.pop %v3762
        %v3764 = vmul.f32 %v3675, 1.442695
        %v3765 = vpow.pop %v3764
        %v3766 = vmul.f32 %v3676, 1.442695
        %v3767 = vpow.pop %v3766
        %v3768 = vmul.f32 %v3677, 1.442695
        %v3769 = vpow.pop %v3768
        %v3770 = vmul.f32 %v3678, 1.442695
        %v3771 = vpow.pop %v3770
        %v3772 = vmul.f32 %v3679, 1.442695
        %v3773 = vpow.pop %v3772
        %v3774 = vmul.f32 %v3680, 1.442695
        %v3775 = vpow.pop %v3774
        %v3776 = vmul.f32 %v3681, 1.442695
        %v3777 = vpow.pop %v3776
        %v3778 = vmul.f32 %v3682, 1.442695
        %v3779 = vpow.pop %v3778
        %v3780 = vmul.f32 %v3683, 1.442695
        %v3781 = vpow.pop %v3780
        %v3782 = vmul.f32 %v3684, 1.442695
        %v3783 = vpow.pop %v3782
        %v3784 = vmul.f32 %v3685, 1.442695
        %v3785 = vpow.pop %v3784
        %v3786 = vmul.f32 %v3686, 1.442695
        %v3787 = vpow.pop %v3786
        %v3788 = vmul.f32 %v3687, 1.442695
        %v3789 = vpow.pop %v3788
        %v3790 = vmul.f32 %v3688, 1.442695
        %v3791 = vpow.pop %v3790
        %v3792 = vmul.f32 %v3689, 1.442695
        %v3793 = vpow.pop %v3792
        %v3794 = vmul.f32 %v3690, 1.442695
        %v3795 = vpow.pop %v3794
        %v3796 = vmul.f32 %v3691, 1.442695
        %v3797 = vpow.pop %v3796
        %v3798 = vmul.f32 %v3692, 1.442695
        %v3799 = vpow.pop %v3798
        %v3800 = vmul.f32 %v3693, 1.442695
        %v3801 = vpow.pop %v3800
        %v3802 = vmul.f32 %v3694, 1.442695
        %v3803 = vpow.pop %v3802
        %v3804 = vmul.f32 %v3695, 1.442695
        %v3805 = vpow.pop %v3804
        %v3806 = vmul.f32 %v3696, 1.442695
        %v3807 = vpow.pop %v3806
        %v3808 = vmul.f32 %v3697, 1.442695
        %v3809 = vpow.pop %v3808
        %v3810 = vmul.f32 %v3698, 1.442695
        %v3811 = vpow.pop %v3810
        %v3812 = vmul.f32 %v3699, 1.442695
        %v3813 = vpow.pop %v3812
        %v3814 = vmul.f32 %v3700, 1.442695
        %v3815 = vpow.pop %v3814
        %v3816 = vmul.f32 %v3701, 1.442695
        %v3817 = vpow.pop %v3816
        %v3818 = vmul.f32 %v3702, 1.442695
        %v3819 = vpow.pop %v3818
        %v3820 = vmul.f32 %v3703, 1.442695
        %v3821 = vpow.pop %v3820
        %v3822 = vmul.f32 %v3704, 1.442695
        %v3823 = vpow.pop %v3822
        %v3824 = vmul.f32 %v3705, 1.442695
        %v3825 = vpow.pop %v3824
        %v3826 = vmul.f32 %v3706, 1.442695
        %v3827 = vpow.pop %v3826
        %v3828 = vmul.f32 %v3707, 1.442695
        %v3829 = vpow.pop %v3828
        %v3830 = vmul.f32 %v3708, 1.442695
        %v3831 = vpow.pop %v3830
        %v3832 = vmul.f32 %v3709, 1.442695
        %v3833 = vpow.pop %v3832
        %v3834 = vmul.f32 %v3710, 1.442695
        %v3835 = vpow.pop %v3834
        %v3836 = vmul.f32 %v3711, 1.442695
        %v3837 = vpow.pop %v3836
        %v3838 = vmul.f32 %v3712, 1.442695
        %v3839 = vpow.pop %v3838
        %v3840 = vmul.f32 %v3713, 1.442695
        %v3841 = vpow.pop %v3840
        %v3842 = vld [vmem:[#allocation3] sm:$0xff]
        %v3843 = vld [vmem:[#allocation3 + $0x8] sm:$0xff]
        %v3844 = vld [vmem:[#allocation3 + $0x10] sm:$0xff]
        %v3845 = vld [vmem:[#allocation3 + $0x18] sm:$0xff]
        %v3846 = vld [vmem:[#allocation3 + $0x20] sm:$0xff]
        %v3847 = vld [vmem:[#allocation3 + $0x28] sm:$0xff]
        %v3848 = vld [vmem:[#allocation3 + $0x30] sm:$0xff]
        %v3849 = vld [vmem:[#allocation3 + $0x38] sm:$0xff]
        %v3850 = vld [vmem:[#allocation3 + $0x40] sm:$0xff]
        %v3851 = vld [vmem:[#allocation3 + $0x48] sm:$0xff]
        %v3852 = vld [vmem:[#allocation3 + $0x50] sm:$0xff]
        %v3853 = vld [vmem:[#allocation3 + $0x58] sm:$0xff]
        %v3854 = vld [vmem:[#allocation3 + $0x60] sm:$0xff]
        %v3855 = vld [vmem:[#allocation3 + $0x68] sm:$0xff]
        %v3856 = vld [vmem:[#allocation3 + $0x70] sm:$0xff]
        %v3857 = vld [vmem:[#allocation3 + $0x78] sm:$0xff]
        %v3858 = vld [vmem:[#allocation3 + $0x80] sm:$0xff]
        %v3859 = vld [vmem:[#allocation3 + $0x88] sm:$0xff]
        %v3860 = vld [vmem:[#allocation3 + $0x90] sm:$0xff]
        %v3861 = vld [vmem:[#allocation3 + $0x98] sm:$0xff]
        %v3862 = vld [vmem:[#allocation3 + $0xa0] sm:$0xff]
        %v3863 = vld [vmem:[#allocation3 + $0xa8] sm:$0xff]
        %v3864 = vld [vmem:[#allocation3 + $0xb0] sm:$0xff]
        %v3865 = vld [vmem:[#allocation3 + $0xb8] sm:$0xff]
        %v3866 = vld [vmem:[#allocation3 + $0xc0] sm:$0xff]
        %v3867 = vld [vmem:[#allocation3 + $0xc8] sm:$0xff]
        %v3868 = vld [vmem:[#allocation3 + $0xd0] sm:$0xff]
        %v3869 = vld [vmem:[#allocation3 + $0xd8] sm:$0xff]
        %v3870 = vld [vmem:[#allocation3 + $0xe0] sm:$0xff]
        %v3871 = vld [vmem:[#allocation3 + $0xe8] sm:$0xff]
        %v3872 = vld [vmem:[#allocation3 + $0xf0] sm:$0xff]
        %v3873 = vld [vmem:[#allocation3 + $0xf8] sm:$0xff]
        %v3874 = vmul.f32 %v3427, %v3842
        %v3875 = vmul.f32 %v3429, %v3843
        %v3876 = vmul.f32 %v3431, %v3844
        %v3877 = vmul.f32 %v3433, %v3845
        %v3878 = vmul.f32 %v3435, %v3846
        %v3879 = vmul.f32 %v3437, %v3847
        %v3880 = vmul.f32 %v3439, %v3848
        %v3881 = vmul.f32 %v3441, %v3849
        %v3882 = vmul.f32 %v3443, %v3850
        %v3883 = vmul.f32 %v3445, %v3851
        %v3884 = vmul.f32 %v3447, %v3852
        %v3885 = vmul.f32 %v3449, %v3853
        %v3886 = vmul.f32 %v3451, %v3854
        %v3887 = vmul.f32 %v3453, %v3855
        %v3888 = vmul.f32 %v3455, %v3856
        %v3889 = vmul.f32 %v3457, %v3857
        %v3890 = vmul.f32 %v3459, %v3858
        %v3891 = vmul.f32 %v3461, %v3859
        %v3892 = vmul.f32 %v3463, %v3860
        %v3893 = vmul.f32 %v3465, %v3861
        %v3894 = vmul.f32 %v3467, %v3862
        %v3895 = vmul.f32 %v3469, %v3863
        %v3896 = vmul.f32 %v3471, %v3864
        %v3897 = vmul.f32 %v3473, %v3865
        %v3898 = vmul.f32 %v3475, %v3866
        %v3899 = vmul.f32 %v3477, %v3867
        %v3900 = vmul.f32 %v3479, %v3868
        %v3901 = vmul.f32 %v3481, %v3869
        %v3902 = vmul.f32 %v3483, %v3870
        %v3903 = vmul.f32 %v3485, %v3871
        %v3904 = vmul.f32 %v3487, %v3872
        %v3905 = vmul.f32 %v3489, %v3873
        %v3906 = vadd.f32 %v3715, %v3717
        %3907 = vadd.xlane.f32.xlu0 %v3906
        %v3908 = vpop.xlane.xlu0 %3907
        %v3909 = vadd.f32 %v3719, %v3721
        %3910 = vadd.xlane.f32.xlu0 %v3909
        %v3911 = vpop.xlane.xlu0 %3910
        %v3912 = vadd.f32 %v3723, %v3725
        %3913 = vadd.xlane.f32.xlu0 %v3912
        %v3914 = vpop.xlane.xlu0 %3913
        %v3915 = vadd.f32 %v3727, %v3729
        %3916 = vadd.xlane.f32.xlu0 %v3915
        %v3917 = vpop.xlane.xlu0 %3916
        %v3918 = vadd.f32 %v3731, %v3733
        %3919 = vadd.xlane.f32.xlu0 %v3918
        %v3920 = vpop.xlane.xlu0 %3919
        %v3921 = vadd.f32 %v3735, %v3737
        %3922 = vadd.xlane.f32.xlu0 %v3921
        %v3923 = vpop.xlane.xlu0 %3922
        %v3924 = vadd.f32 %v3739, %v3741
        %3925 = vadd.xlane.f32.xlu0 %v3924
        %v3926 = vpop.xlane.xlu0 %3925
        %v3927 = vadd.f32 %v3743, %v3745
        %3928 = vadd.xlane.f32.xlu0 %v3927
        %v3929 = vpop.xlane.xlu0 %3928
        %v3930 = vadd.f32 %v3747, %v3749
        %3931 = vadd.xlane.f32.xlu0 %v3930
        %v3932 = vpop.xlane.xlu0 %3931
        %v3933 = vadd.f32 %v3751, %v3753
        %3934 = vadd.xlane.f32.xlu0 %v3933
        %v3935 = vpop.xlane.xlu0 %3934
        %v3936 = vadd.f32 %v3755, %v3757
        %3937 = vadd.xlane.f32.xlu0 %v3936
        %v3938 = vpop.xlane.xlu0 %3937
        %v3939 = vadd.f32 %v3759, %v3761
        %3940 = vadd.xlane.f32.xlu0 %v3939
        %v3941 = vpop.xlane.xlu0 %3940
        %v3942 = vadd.f32 %v3763, %v3765
        %3943 = vadd.xlane.f32.xlu0 %v3942
        %v3944 = vpop.xlane.xlu0 %3943
        %v3945 = vadd.f32 %v3767, %v3769
        %3946 = vadd.xlane.f32.xlu0 %v3945
        %v3947 = vpop.xlane.xlu0 %3946
        %v3948 = vadd.f32 %v3771, %v3773
        %3949 = vadd.xlane.f32.xlu0 %v3948
        %v3950 = vpop.xlane.xlu0 %3949
        %v3951 = vadd.f32 %v3775, %v3777
        %3952 = vadd.xlane.f32.xlu0 %v3951
        %v3953 = vpop.xlane.xlu0 %3952
        %v3954 = vadd.f32 %v3779, %v3781
        %3955 = vadd.xlane.f32.xlu0 %v3954
        %v3956 = vpop.xlane.xlu0 %3955
        %v3957 = vadd.f32 %v3783, %v3785
        %3958 = vadd.xlane.f32.xlu0 %v3957
        %v3959 = vpop.xlane.xlu0 %3958
        %v3960 = vadd.f32 %v3787, %v3789
        %3961 = vadd.xlane.f32.xlu0 %v3960
        %v3962 = vpop.xlane.xlu0 %3961
        %v3963 = vadd.f32 %v3791, %v3793
        %3964 = vadd.xlane.f32.xlu0 %v3963
        %v3965 = vpop.xlane.xlu0 %3964
        %v3966 = vadd.f32 %v3795, %v3797
        %3967 = vadd.xlane.f32.xlu0 %v3966
        %v3968 = vpop.xlane.xlu0 %3967
        %v3969 = vadd.f32 %v3799, %v3801
        %3970 = vadd.xlane.f32.xlu0 %v3969
        %v3971 = vpop.xlane.xlu0 %3970
        %v3972 = vadd.f32 %v3803, %v3805
        %3973 = vadd.xlane.f32.xlu0 %v3972
        %v3974 = vpop.xlane.xlu0 %3973
        %v3975 = vadd.f32 %v3807, %v3809
        %3976 = vadd.xlane.f32.xlu0 %v3975
        %v3977 = vpop.xlane.xlu0 %3976
        %v3978 = vadd.f32 %v3811, %v3813
        %3979 = vadd.xlane.f32.xlu0 %v3978
        %v3980 = vpop.xlane.xlu0 %3979
        %v3981 = vadd.f32 %v3815, %v3817
        %3982 = vadd.xlane.f32.xlu0 %v3981
        %v3983 = vpop.xlane.xlu0 %3982
        %v3984 = vadd.f32 %v3819, %v3821
        %3985 = vadd.xlane.f32.xlu0 %v3984
        %v3986 = vpop.xlane.xlu0 %3985
        %v3987 = vadd.f32 %v3823, %v3825
        %3988 = vadd.xlane.f32.xlu0 %v3987
        %v3989 = vpop.xlane.xlu0 %3988
        %v3990 = vadd.f32 %v3827, %v3829
        %3991 = vadd.xlane.f32.xlu0 %v3990
        %v3992 = vpop.xlane.xlu0 %3991
        %v3993 = vadd.f32 %v3831, %v3833
        %3994 = vadd.xlane.f32.xlu0 %v3993
        %v3995 = vpop.xlane.xlu0 %3994
        %v3996 = vadd.f32 %v3835, %v3837
        %3997 = vadd.xlane.f32.xlu0 %v3996
        %v3998 = vpop.xlane.xlu0 %3997
        %v3999 = vadd.f32 %v3839, %v3841
        %4000 = vadd.xlane.f32.xlu0 %v3999
        %v4001 = vpop.xlane.xlu0 %4000
        %v4002 = vadd.f32 %v3874, %v3908
        %v4003 = vadd.f32 %v3875, %v3911
        %v4004 = vadd.f32 %v3876, %v3914
        %v4005 = vadd.f32 %v3877, %v3917
        %v4006 = vadd.f32 %v3878, %v3920
        %v4007 = vadd.f32 %v3879, %v3923
        %v4008 = vadd.f32 %v3880, %v3926
        %v4009 = vadd.f32 %v3881, %v3929
        %v4010 = vadd.f32 %v3882, %v3932
        %v4011 = vadd.f32 %v3883, %v3935
        %v4012 = vadd.f32 %v3884, %v3938
        %v4013 = vadd.f32 %v3885, %v3941
        %v4014 = vadd.f32 %v3886, %v3944
        %v4015 = vadd.f32 %v3887, %v3947
        %v4016 = vadd.f32 %v3888, %v3950
        %v4017 = vadd.f32 %v3889, %v3953
        %v4018 = vadd.f32 %v3890, %v3956
        %v4019 = vadd.f32 %v3891, %v3959
        %v4020 = vadd.f32 %v3892, %v3962
        %v4021 = vadd.f32 %v3893, %v3965
        %v4022 = vadd.f32 %v3894, %v3968
        %v4023 = vadd.f32 %v3895, %v3971
        %v4024 = vadd.f32 %v3896, %v3974
        %v4025 = vadd.f32 %v3897, %v3977
        %v4026 = vadd.f32 %v3898, %v3980
        %v4027 = vadd.f32 %v3899, %v3983
        %v4028 = vadd.f32 %v3900, %v3986
        %v4029 = vadd.f32 %v3901, %v3989
        %v4030 = vadd.f32 %v3902, %v3992
        %v4031 = vadd.f32 %v3903, %v3995
        %v4032 = vadd.f32 %v3904, %v3998
        %v4033 = vadd.f32 %v3905, %v4001
        %vm4034 = vcmask 7168
        %4035 = vst.msk [vmem:[#allocation3] sm:$0xff] %vm4034, %v4002
        %4036 = vst.msk [vmem:[#allocation3 + $0x8] sm:$0xff] %vm4034, %v4003
        %4037 = vst.msk [vmem:[#allocation3 + $0x10] sm:$0xff] %vm4034, %v4004
        %4038 = vst.msk [vmem:[#allocation3 + $0x18] sm:$0xff] %vm4034, %v4005
        %4039 = vst.msk [vmem:[#allocation3 + $0x20] sm:$0xff] %vm4034, %v4006
        %4040 = vst.msk [vmem:[#allocation3 + $0x28] sm:$0xff] %vm4034, %v4007
        %4041 = vst.msk [vmem:[#allocation3 + $0x30] sm:$0xff] %vm4034, %v4008
        %4042 = vst.msk [vmem:[#allocation3 + $0x38] sm:$0xff] %vm4034, %v4009
        %4043 = vst.msk [vmem:[#allocation3 + $0x40] sm:$0xff] %vm4034, %v4010
        %4044 = vst.msk [vmem:[#allocation3 + $0x48] sm:$0xff] %vm4034, %v4011
        %4045 = vst.msk [vmem:[#allocation3 + $0x50] sm:$0xff] %vm4034, %v4012
        %4046 = vst.msk [vmem:[#allocation3 + $0x58] sm:$0xff] %vm4034, %v4013
        %4047 = vst.msk [vmem:[#allocation3 + $0x60] sm:$0xff] %vm4034, %v4014
        %4048 = vst.msk [vmem:[#allocation3 + $0x68] sm:$0xff] %vm4034, %v4015
        %4049 = vst.msk [vmem:[#allocation3 + $0x70] sm:$0xff] %vm4034, %v4016
        %4050 = vst.msk [vmem:[#allocation3 + $0x78] sm:$0xff] %vm4034, %v4017
        %4051 = vst.msk [vmem:[#allocation3 + $0x80] sm:$0xff] %vm4034, %v4018
        %4052 = vst.msk [vmem:[#allocation3 + $0x88] sm:$0xff] %vm4034, %v4019
        %4053 = vst.msk [vmem:[#allocation3 + $0x90] sm:$0xff] %vm4034, %v4020
        %4054 = vst.msk [vmem:[#allocation3 + $0x98] sm:$0xff] %vm4034, %v4021
        %4055 = vst.msk [vmem:[#allocation3 + $0xa0] sm:$0xff] %vm4034, %v4022
        %4056 = vst.msk [vmem:[#allocation3 + $0xa8] sm:$0xff] %vm4034, %v4023
        %4057 = vst.msk [vmem:[#allocation3 + $0xb0] sm:$0xff] %vm4034, %v4024
        %4058 = vst.msk [vmem:[#allocation3 + $0xb8] sm:$0xff] %vm4034, %v4025
        %4059 = vst.msk [vmem:[#allocation3 + $0xc0] sm:$0xff] %vm4034, %v4026
        %4060 = vst.msk [vmem:[#allocation3 + $0xc8] sm:$0xff] %vm4034, %v4027
        %4061 = vst.msk [vmem:[#allocation3 + $0xd0] sm:$0xff] %vm4034, %v4028
        %4062 = vst.msk [vmem:[#allocation3 + $0xd8] sm:$0xff] %vm4034, %v4029
        %4063 = vst.msk [vmem:[#allocation3 + $0xe0] sm:$0xff] %vm4034, %v4030
        %4064 = vst.msk [vmem:[#allocation3 + $0xe8] sm:$0xff] %vm4034, %v4031
        %4065 = vst.msk [vmem:[#allocation3 + $0xf0] sm:$0xff] %vm4034, %v4032
        %4066 = vst.msk [vmem:[#allocation3 + $0xf8] sm:$0xff] %vm4034, %v4033
        %v4067 = vld [vmem:[#allocation4] sm:$0xff]
        %v4068 = vld [vmem:[#allocation4 + $0x8] sm:$0xff]
        %v4069 = vld [vmem:[#allocation4 + $0x10] sm:$0xff]
        %v4070 = vld [vmem:[#allocation4 + $0x18] sm:$0xff]
        %v4071 = vld [vmem:[#allocation4 + $0x20] sm:$0xff]
        %v4072 = vld [vmem:[#allocation4 + $0x28] sm:$0xff]
        %v4073 = vld [vmem:[#allocation4 + $0x30] sm:$0xff]
        %v4074 = vld [vmem:[#allocation4 + $0x38] sm:$0xff]
        %v4075 = vld [vmem:[#allocation4 + $0x40] sm:$0xff]
        %v4076 = vld [vmem:[#allocation4 + $0x48] sm:$0xff]
        %v4077 = vld [vmem:[#allocation4 + $0x50] sm:$0xff]
        %v4078 = vld [vmem:[#allocation4 + $0x58] sm:$0xff]
        %v4079 = vld [vmem:[#allocation4 + $0x60] sm:$0xff]
        %v4080 = vld [vmem:[#allocation4 + $0x68] sm:$0xff]
        %v4081 = vld [vmem:[#allocation4 + $0x70] sm:$0xff]
        %v4082 = vld [vmem:[#allocation4 + $0x78] sm:$0xff]
        %v4083 = vld [vmem:[#allocation4 + $0x80] sm:$0xff]
        %v4084 = vld [vmem:[#allocation4 + $0x88] sm:$0xff]
        %v4085 = vld [vmem:[#allocation4 + $0x90] sm:$0xff]
        %v4086 = vld [vmem:[#allocation4 + $0x98] sm:$0xff]
        %v4087 = vld [vmem:[#allocation4 + $0xa0] sm:$0xff]
        %v4088 = vld [vmem:[#allocation4 + $0xa8] sm:$0xff]
        %v4089 = vld [vmem:[#allocation4 + $0xb0] sm:$0xff]
        %v4090 = vld [vmem:[#allocation4 + $0xb8] sm:$0xff]
        %v4091 = vld [vmem:[#allocation4 + $0xc0] sm:$0xff]
        %v4092 = vld [vmem:[#allocation4 + $0xc8] sm:$0xff]
        %v4093 = vld [vmem:[#allocation4 + $0xd0] sm:$0xff]
        %v4094 = vld [vmem:[#allocation4 + $0xd8] sm:$0xff]
        %v4095 = vld [vmem:[#allocation4 + $0xe0] sm:$0xff]
        %v4096 = vld [vmem:[#allocation4 + $0xe8] sm:$0xff]
        %v4097 = vld [vmem:[#allocation4 + $0xf0] sm:$0xff]
        %v4098 = vld [vmem:[#allocation4 + $0xf8] sm:$0xff]
        %4100 = vset.pattern.permute.xlu0 0
        %4101 = vperm.xlu0 %4100, %v3427
        %v4102 = vpop.permute.xlu0 %4101
        %4105 = vset.pattern.permute.xlu0 0
        %4106 = vperm.xlu0 %4105, %v3429
        %v4107 = vpop.permute.xlu0 %4106
        %4110 = vset.pattern.permute.xlu0 0
        %4111 = vperm.xlu0 %4110, %v3431
        %v4112 = vpop.permute.xlu0 %4111
        %4115 = vset.pattern.permute.xlu0 0
        %4116 = vperm.xlu0 %4115, %v3433
        %v4117 = vpop.permute.xlu0 %4116
        %4120 = vset.pattern.permute.xlu0 0
        %4121 = vperm.xlu0 %4120, %v3435
        %v4122 = vpop.permute.xlu0 %4121
        %4125 = vset.pattern.permute.xlu0 0
        %4126 = vperm.xlu0 %4125, %v3437
        %v4127 = vpop.permute.xlu0 %4126
        %4130 = vset.pattern.permute.xlu0 0
        %4131 = vperm.xlu0 %4130, %v3439
        %v4132 = vpop.permute.xlu0 %4131
        %4135 = vset.pattern.permute.xlu0 0
        %4136 = vperm.xlu0 %4135, %v3441
        %v4137 = vpop.permute.xlu0 %4136
        %4140 = vset.pattern.permute.xlu0 0
        %4141 = vperm.xlu0 %4140, %v3443
        %v4142 = vpop.permute.xlu0 %4141
        %4145 = vset.pattern.permute.xlu0 0
        %4146 = vperm.xlu0 %4145, %v3445
        %v4147 = vpop.permute.xlu0 %4146
        %4150 = vset.pattern.permute.xlu0 0
        %4151 = vperm.xlu0 %4150, %v3447
        %v4152 = vpop.permute.xlu0 %4151
        %4155 = vset.pattern.permute.xlu0 0
        %4156 = vperm.xlu0 %4155, %v3449
        %v4157 = vpop.permute.xlu0 %4156
        %4160 = vset.pattern.permute.xlu0 0
        %4161 = vperm.xlu0 %4160, %v3451
        %v4162 = vpop.permute.xlu0 %4161
        %4165 = vset.pattern.permute.xlu0 0
        %4166 = vperm.xlu0 %4165, %v3453
        %v4167 = vpop.permute.xlu0 %4166
        %4170 = vset.pattern.permute.xlu0 0
        %4171 = vperm.xlu0 %4170, %v3455
        %v4172 = vpop.permute.xlu0 %4171
        %4175 = vset.pattern.permute.xlu0 0
        %4176 = vperm.xlu0 %4175, %v3457
        %v4177 = vpop.permute.xlu0 %4176
        %4180 = vset.pattern.permute.xlu0 0
        %4181 = vperm.xlu0 %4180, %v3459
        %v4182 = vpop.permute.xlu0 %4181
        %4185 = vset.pattern.permute.xlu0 0
        %4186 = vperm.xlu0 %4185, %v3461
        %v4187 = vpop.permute.xlu0 %4186
        %4190 = vset.pattern.permute.xlu0 0
        %4191 = vperm.xlu0 %4190, %v3463
        %v4192 = vpop.permute.xlu0 %4191
        %4195 = vset.pattern.permute.xlu0 0
        %4196 = vperm.xlu0 %4195, %v3465
        %v4197 = vpop.permute.xlu0 %4196
        %4200 = vset.pattern.permute.xlu0 0
        %4201 = vperm.xlu0 %4200, %v3467
        %v4202 = vpop.permute.xlu0 %4201
        %4205 = vset.pattern.permute.xlu0 0
        %4206 = vperm.xlu0 %4205, %v3469
        %v4207 = vpop.permute.xlu0 %4206
        %4210 = vset.pattern.permute.xlu0 0
        %4211 = vperm.xlu0 %4210, %v3471
        %v4212 = vpop.permute.xlu0 %4211
        %4215 = vset.pattern.permute.xlu0 0
        %4216 = vperm.xlu0 %4215, %v3473
        %v4217 = vpop.permute.xlu0 %4216
        %4220 = vset.pattern.permute.xlu0 0
        %4221 = vperm.xlu0 %4220, %v3475
        %v4222 = vpop.permute.xlu0 %4221
        %4225 = vset.pattern.permute.xlu0 0
        %4226 = vperm.xlu0 %4225, %v3477
        %v4227 = vpop.permute.xlu0 %4226
        %4230 = vset.pattern.permute.xlu0 0
        %4231 = vperm.xlu0 %4230, %v3479
        %v4232 = vpop.permute.xlu0 %4231
        %4235 = vset.pattern.permute.xlu0 0
        %4236 = vperm.xlu0 %4235, %v3481
        %v4237 = vpop.permute.xlu0 %4236
        %4240 = vset.pattern.permute.xlu0 0
        %4241 = vperm.xlu0 %4240, %v3483
        %v4242 = vpop.permute.xlu0 %4241
        %4245 = vset.pattern.permute.xlu0 0
        %4246 = vperm.xlu0 %4245, %v3485
        %v4247 = vpop.permute.xlu0 %4246
        %4250 = vset.pattern.permute.xlu0 0
        %4251 = vperm.xlu0 %4250, %v3487
        %v4252 = vpop.permute.xlu0 %4251
        %4255 = vset.pattern.permute.xlu0 0
        %4256 = vperm.xlu0 %4255, %v3489
        %v4257 = vpop.permute.xlu0 %4256
        %v4259 = vmul.f32 %v4102, %v4067
        %v4260 = vmul.f32 %v4107, %v4068
        %v4261 = vmul.f32 %v4112, %v4069
        %v4262 = vmul.f32 %v4117, %v4070
        %v4263 = vmul.f32 %v4122, %v4071
        %v4264 = vmul.f32 %v4127, %v4072
        %v4265 = vmul.f32 %v4132, %v4073
        %v4266 = vmul.f32 %v4137, %v4074
        %v4267 = vmul.f32 %v4142, %v4075
        %v4268 = vmul.f32 %v4147, %v4076
        %v4269 = vmul.f32 %v4152, %v4077
        %v4270 = vmul.f32 %v4157, %v4078
        %v4271 = vmul.f32 %v4162, %v4079
        %v4272 = vmul.f32 %v4167, %v4080
        %v4273 = vmul.f32 %v4172, %v4081
        %v4274 = vmul.f32 %v4177, %v4082
        %v4275 = vmul.f32 %v4182, %v4083
        %v4276 = vmul.f32 %v4187, %v4084
        %v4277 = vmul.f32 %v4192, %v4085
        %v4278 = vmul.f32 %v4197, %v4086
        %v4279 = vmul.f32 %v4202, %v4087
        %v4280 = vmul.f32 %v4207, %v4088
        %v4281 = vmul.f32 %v4212, %v4089
        %v4282 = vmul.f32 %v4217, %v4090
        %v4283 = vmul.f32 %v4222, %v4091
        %v4284 = vmul.f32 %v4227, %v4092
        %v4285 = vmul.f32 %v4232, %v4093
        %v4286 = vmul.f32 %v4237, %v4094
        %v4287 = vmul.f32 %v4242, %v4095
        %v4288 = vmul.f32 %v4247, %v4096
        %v4289 = vmul.f32 %v4252, %v4097
        %v4290 = vmul.f32 %v4257, %v4098
        %v4291 = vpack.c.bf16 %v3719, %v3715
        %v4292 = vpack.c.bf16 %v3721, %v3717
        %v4293 = vpack.c.bf16 %v3727, %v3723
        %v4294 = vpack.c.bf16 %v3729, %v3725
        %v4295 = vpack.c.bf16 %v3735, %v3731
        %v4296 = vpack.c.bf16 %v3737, %v3733
        %v4297 = vpack.c.bf16 %v3743, %v3739
        %v4298 = vpack.c.bf16 %v3745, %v3741
        %v4299 = vpack.c.bf16 %v3751, %v3747
        %v4300 = vpack.c.bf16 %v3753, %v3749
        %v4301 = vpack.c.bf16 %v3759, %v3755
        %v4302 = vpack.c.bf16 %v3761, %v3757
        %v4303 = vpack.c.bf16 %v3767, %v3763
        %v4304 = vpack.c.bf16 %v3769, %v3765
        %v4305 = vpack.c.bf16 %v3775, %v3771
        %v4306 = vpack.c.bf16 %v3777, %v3773
        %v4307 = vpack.c.bf16 %v3783, %v3779
        %v4308 = vpack.c.bf16 %v3785, %v3781
        %v4309 = vpack.c.bf16 %v3791, %v3787
        %v4310 = vpack.c.bf16 %v3793, %v3789
        %v4311 = vpack.c.bf16 %v3799, %v3795
        %v4312 = vpack.c.bf16 %v3801, %v3797
        %v4313 = vpack.c.bf16 %v3807, %v3803
        %v4314 = vpack.c.bf16 %v3809, %v3805
        %v4315 = vpack.c.bf16 %v3815, %v3811
        %v4316 = vpack.c.bf16 %v3817, %v3813
        %v4317 = vpack.c.bf16 %v3823, %v3819
        %v4318 = vpack.c.bf16 %v3825, %v3821
        %v4319 = vpack.c.bf16 %v3831, %v3827
        %v4320 = vpack.c.bf16 %v3833, %v3829
        %v4321 = vpack.c.bf16 %v3839, %v3835
        %v4322 = vpack.c.bf16 %v3841, %v3837
        %v4355 = vunpack.c.l.b16 %v2752
        %v4356 = vunpack.c.l.b16 %v2753
        %v4357 = vunpack.c.l.b16 %v2754
        %v4358 = vunpack.c.l.b16 %v2755
        %v4359 = vunpack.c.l.b16 %v2756
        %v4360 = vunpack.c.l.b16 %v2757
        %v4361 = vunpack.c.l.b16 %v2758
        %v4362 = vunpack.c.l.b16 %v2759
        %v4363 = vunpack.c.l.b16 %v2760
        %v4364 = vunpack.c.l.b16 %v2761
        %v4365 = vunpack.c.l.b16 %v2762
        %v4366 = vunpack.c.l.b16 %v2763
        %v4367 = vunpack.c.l.b16 %v2764
        %v4368 = vunpack.c.l.b16 %v2765
        %v4369 = vunpack.c.l.b16 %v2766
        %v4370 = vunpack.c.l.b16 %v2767
        %v4371 = vunpack.c.l.b16 %v2768
        %v4372 = vunpack.c.l.b16 %v2769
        %v4373 = vunpack.c.l.b16 %v2770
        %v4374 = vunpack.c.l.b16 %v2771
        %v4375 = vunpack.c.l.b16 %v2772
        %v4376 = vunpack.c.l.b16 %v2773
        %v4377 = vunpack.c.l.b16 %v2774
        %v4378 = vunpack.c.l.b16 %v2775
        %v4379 = vunpack.c.l.b16 %v2776
        %v4380 = vunpack.c.l.b16 %v2777
        %v4381 = vunpack.c.l.b16 %v2778
        %v4382 = vunpack.c.l.b16 %v2779
        %v4383 = vunpack.c.l.b16 %v2780
        %v4384 = vunpack.c.l.b16 %v2781
        %v4385 = vunpack.c.l.b16 %v2782
        %v4386 = vunpack.c.l.b16 %v2783
        %v4387 = vpack.c.b16 %v4356, %v4355
        %v4388 = vpack.c.b16 %v4358, %v4357
        %v4389 = vpack.c.b16 %v4360, %v4359
        %v4390 = vpack.c.b16 %v4362, %v4361
        %v4391 = vpack.c.b16 %v4364, %v4363
        %v4392 = vpack.c.b16 %v4366, %v4365
        %v4393 = vpack.c.b16 %v4368, %v4367
        %v4394 = vpack.c.b16 %v4370, %v4369
        %v4395 = vpack.c.b16 %v4372, %v4371
        %v4396 = vpack.c.b16 %v4374, %v4373
        %v4397 = vpack.c.b16 %v4376, %v4375
        %v4398 = vpack.c.b16 %v4378, %v4377
        %v4399 = vpack.c.b16 %v4380, %v4379
        %v4400 = vpack.c.b16 %v4382, %v4381
        %v4401 = vpack.c.b16 %v4384, %v4383
        %v4402 = vpack.c.b16 %v4386, %v4385
        %4419 = vmatprep.subr.bf16.mxu0 0
        %4420 = vmatpush1.bf16.msra.mxu0 %v4387
        %4421 = vmatprep.subr.bf16.mxu0 0
        %4422 = vmatpush1.bf16.msra.mxu0 %v4388
        %4423 = vmatprep.subr.bf16.mxu0 0
        %4424 = vmatpush1.bf16.msra.mxu0 %v4389
        %4425 = vmatprep.subr.bf16.mxu0 0
        %4426 = vmatpush1.bf16.msra.mxu0 %v4390
        %4427 = vmatprep.subr.bf16.mxu0 0
        %4428 = vmatpush1.bf16.msra.mxu0 %v4391
        %4429 = vmatprep.subr.bf16.mxu0 0
        %4430 = vmatpush1.bf16.msra.mxu0 %v4392
        %4431 = vmatprep.subr.bf16.mxu0 0
        %4432 = vmatpush1.bf16.msra.mxu0 %v4393
        %4433 = vmatprep.subr.bf16.mxu0 0
        %4434 = vmatpush1.bf16.msra.mxu0 %v4394
        %4435 = vmatprep.subr.bf16.mxu0 0
        %4436 = vmatpush1.bf16.msra.mxu0 %v4395
        %4437 = vmatprep.subr.bf16.mxu0 0
        %4438 = vmatpush1.bf16.msra.mxu0 %v4396
        %4439 = vmatprep.subr.bf16.mxu0 0
        %4440 = vmatpush1.bf16.msra.mxu0 %v4397
        %4441 = vmatprep.subr.bf16.mxu0 0
        %4442 = vmatpush1.bf16.msra.mxu0 %v4398
        %4443 = vmatprep.subr.bf16.mxu0 0
        %4444 = vmatpush1.bf16.msra.mxu0 %v4399
        %4445 = vmatprep.subr.bf16.mxu0 0
        %4446 = vmatpush1.bf16.msra.mxu0 %v4400
        %4447 = vmatprep.subr.bf16.mxu0 0
        %4448 = vmatpush1.bf16.msra.mxu0 %v4401
        %4449 = vmatprep.subr.bf16.mxu0 0
        %4450 = vmatpush1.bf16.msra.mxu0 %v4402
        %4451 = vmatprep.mubr.bf16.mxu0 %v4292
        %4452 = vmatmul.mubr.bf16.gmra.mrb[0].mxu0 %v4291
        %v4453 = vpop.f32.mrb[0].mxu0
        %v4454 = vadd.f32 0.0, %v4453
        %v4455 = vpop.f32.mrb[0].mxu0
        %v4456 = vpop.f32.mrb[0].mxu0
        %v4457 = vadd.f32 0.0, %v4456
        %v4458 = vpop.f32.mrb[0].mxu0
        %4459 = vmatprep.mubr.bf16.mxu0 %v4294
        %4460 = vmatmul.mubr.bf16.gmra.mrb[0].mxu0 %v4293
        %v4461 = vpop.f32.mrb[0].mxu0
        %v4462 = vadd.f32 0.0, %v4461
        %v4463 = vpop.f32.mrb[0].mxu0
        %v4464 = vpop.f32.mrb[0].mxu0
        %v4465 = vadd.f32 0.0, %v4464
        %v4466 = vpop.f32.mrb[0].mxu0
        %4467 = vmatprep.mubr.bf16.mxu0 %v4296
        %4468 = vmatmul.mubr.bf16.gmra.mrb[0].mxu0 %v4295
        %v4469 = vpop.f32.mrb[0].mxu0
        %v4470 = vadd.f32 0.0, %v4469
        %v4471 = vpop.f32.mrb[0].mxu0
        %v4472 = vpop.f32.mrb[0].mxu0
        %v4473 = vadd.f32 0.0, %v4472
        %v4474 = vpop.f32.mrb[0].mxu0
        %4475 = vmatprep.mubr.bf16.mxu0 %v4298
        %4476 = vmatmul.mubr.bf16.gmra.mrb[0].mxu0 %v4297
        %v4477 = vpop.f32.mrb[0].mxu0
        %v4478 = vadd.f32 0.0, %v4477
        %v4479 = vpop.f32.mrb[0].mxu0
        %v4480 = vpop.f32.mrb[0].mxu0
        %v4481 = vadd.f32 0.0, %v4480
        %v4482 = vpop.f32.mrb[0].mxu0
        %4483 = vmatprep.mubr.bf16.mxu0 %v4300
        %4484 = vmatmul.mubr.bf16.gmra.mrb[0].mxu0 %v4299
        %v4485 = vpop.f32.mrb[0].mxu0
        %v4486 = vadd.f32 0.0, %v4485
        %v4487 = vpop.f32.mrb[0].mxu0
        %v4488 = vpop.f32.mrb[0].mxu0
        %v4489 = vadd.f32 0.0, %v4488
        %v4490 = vpop.f32.mrb[0].mxu0
        %4491 = vmatprep.mubr.bf16.mxu0 %v4302
        %4492 = vmatmul.mubr.bf16.gmra.mrb[0].mxu0 %v4301
        %v4493 = vpop.f32.mrb[0].mxu0
        %v4494 = vadd.f32 0.0, %v4493
        %v4495 = vpop.f32.mrb[0].mxu0
        %v4496 = vpop.f32.mrb[0].mxu0
        %v4497 = vadd.f32 0.0, %v4496
        %v4498 = vpop.f32.mrb[0].mxu0
        %4499 = vmatprep.mubr.bf16.mxu0 %v4304
        %4500 = vmatmul.mubr.bf16.gmra.mrb[0].mxu0 %v4303
        %v4501 = vpop.f32.mrb[0].mxu0
        %v4502 = vadd.f32 0.0, %v4501
        %v4503 = vpop.f32.mrb[0].mxu0
        %v4504 = vpop.f32.mrb[0].mxu0
        %v4505 = vadd.f32 0.0, %v4504
        %v4506 = vpop.f32.mrb[0].mxu0
        %4507 = vmatprep.mubr.bf16.mxu0 %v4306
        %4508 = vmatmul.mubr.bf16.gmra.mrb[0].mxu0 %v4305
        %v4509 = vpop.f32.mrb[0].mxu0
        %v4510 = vadd.f32 0.0, %v4509
        %v4511 = vpop.f32.mrb[0].mxu0
        %v4512 = vpop.f32.mrb[0].mxu0
        %v4513 = vadd.f32 0.0, %v4512
        %v4514 = vpop.f32.mrb[0].mxu0
        %4515 = vmatprep.mubr.bf16.mxu0 %v4308
        %4516 = vmatmul.mubr.bf16.gmra.mrb[0].mxu0 %v4307
        %v4517 = vpop.f32.mrb[0].mxu0
        %v4518 = vadd.f32 0.0, %v4517
        %v4519 = vpop.f32.mrb[0].mxu0
        %v4520 = vpop.f32.mrb[0].mxu0
        %v4521 = vadd.f32 0.0, %v4520
        %v4522 = vpop.f32.mrb[0].mxu0
        %4523 = vmatprep.mubr.bf16.mxu0 %v4310
        %4524 = vmatmul.mubr.bf16.gmra.mrb[0].mxu0 %v4309
        %v4525 = vpop.f32.mrb[0].mxu0
        %v4526 = vadd.f32 0.0, %v4525
        %v4527 = vpop.f32.mrb[0].mxu0
        %v4528 = vpop.f32.mrb[0].mxu0
        %v4529 = vadd.f32 0.0, %v4528
        %v4530 = vpop.f32.mrb[0].mxu0
        %4531 = vmatprep.mubr.bf16.mxu0 %v4312
        %4532 = vmatmul.mubr.bf16.gmra.mrb[0].mxu0 %v4311
        %v4533 = vpop.f32.mrb[0].mxu0
        %v4534 = vadd.f32 0.0, %v4533
        %v4535 = vpop.f32.mrb[0].mxu0
        %v4536 = vpop.f32.mrb[0].mxu0
        %v4537 = vadd.f32 0.0, %v4536
        %v4538 = vpop.f32.mrb[0].mxu0
        %4539 = vmatprep.mubr.bf16.mxu0 %v4314
        %4540 = vmatmul.mubr.bf16.gmra.mrb[0].mxu0 %v4313
        %v4541 = vpop.f32.mrb[0].mxu0
        %v4542 = vadd.f32 0.0, %v4541
        %v4543 = vpop.f32.mrb[0].mxu0
        %v4544 = vpop.f32.mrb[0].mxu0
        %v4545 = vadd.f32 0.0, %v4544
        %v4546 = vpop.f32.mrb[0].mxu0
        %4547 = vmatprep.mubr.bf16.mxu0 %v4316
        %4548 = vmatmul.mubr.bf16.gmra.mrb[0].mxu0 %v4315
        %v4549 = vpop.f32.mrb[0].mxu0
        %v4550 = vadd.f32 0.0, %v4549
        %v4551 = vpop.f32.mrb[0].mxu0
        %v4552 = vpop.f32.mrb[0].mxu0
        %v4553 = vadd.f32 0.0, %v4552
        %v4554 = vpop.f32.mrb[0].mxu0
        %4555 = vmatprep.mubr.bf16.mxu0 %v4318
        %4556 = vmatmul.mubr.bf16.gmra.mrb[0].mxu0 %v4317
        %v4557 = vpop.f32.mrb[0].mxu0
        %v4558 = vadd.f32 0.0, %v4557
        %v4559 = vpop.f32.mrb[0].mxu0
        %v4560 = vpop.f32.mrb[0].mxu0
        %v4561 = vadd.f32 0.0, %v4560
        %v4562 = vpop.f32.mrb[0].mxu0
        %4563 = vmatprep.mubr.bf16.mxu0 %v4320
        %4564 = vmatmul.mubr.bf16.gmra.mrb[0].mxu0 %v4319
        %v4565 = vpop.f32.mrb[0].mxu0
        %v4566 = vadd.f32 0.0, %v4565
        %v4567 = vpop.f32.mrb[0].mxu0
        %v4568 = vpop.f32.mrb[0].mxu0
        %v4569 = vadd.f32 0.0, %v4568
        %v4570 = vpop.f32.mrb[0].mxu0
        %4571 = vmatprep.mubr.bf16.mxu0 %v4322
        %4572 = vmatmul.mubr.bf16.gmra.mrb[0].mxu0 %v4321
        %v4573 = vpop.f32.mrb[0].mxu0
        %v4574 = vadd.f32 0.0, %v4573
        %v4575 = vpop.f32.mrb[0].mxu0
        %v4576 = vpop.f32.mrb[0].mxu0
        %v4577 = vadd.f32 0.0, %v4576
        %v4578 = vpop.f32.mrb[0].mxu0
        %4579 = vdwg.mxu0
        %v4580 = vadd.f32 %v4259, %v4454
        %v4581 = vadd.f32 %v4260, %v4457
        %v4582 = vadd.f32 %v4261, %v4462
        %v4583 = vadd.f32 %v4262, %v4465
        %v4584 = vadd.f32 %v4263, %v4470
        %v4585 = vadd.f32 %v4264, %v4473
        %v4586 = vadd.f32 %v4265, %v4478
        %v4587 = vadd.f32 %v4266, %v4481
        %v4588 = vadd.f32 %v4267, %v4486
        %v4589 = vadd.f32 %v4268, %v4489
        %v4590 = vadd.f32 %v4269, %v4494
        %v4591 = vadd.f32 %v4270, %v4497
        %v4592 = vadd.f32 %v4271, %v4502
        %v4593 = vadd.f32 %v4272, %v4505
        %v4594 = vadd.f32 %v4273, %v4510
        %v4595 = vadd.f32 %v4274, %v4513
        %v4596 = vadd.f32 %v4275, %v4518
        %v4597 = vadd.f32 %v4276, %v4521
        %v4598 = vadd.f32 %v4277, %v4526
        %v4599 = vadd.f32 %v4278, %v4529
        %v4600 = vadd.f32 %v4279, %v4534
        %v4601 = vadd.f32 %v4280, %v4537
        %v4602 = vadd.f32 %v4281, %v4542
        %v4603 = vadd.f32 %v4282, %v4545
        %v4604 = vadd.f32 %v4283, %v4550
        %v4605 = vadd.f32 %v4284, %v4553
        %v4606 = vadd.f32 %v4285, %v4558
        %v4607 = vadd.f32 %v4286, %v4561
        %v4608 = vadd.f32 %v4287, %v4566
        %v4609 = vadd.f32 %v4288, %v4569
        %v4610 = vadd.f32 %v4289, %v4574
        %v4611 = vadd.f32 %v4290, %v4577
        %4612 = vst.msk [vmem:[#allocation4] sm:$0xff] %vm2944, %v4580
        %4613 = vst.msk [vmem:[#allocation4 + $0x8] sm:$0xff] %vm2944, %v4581
        %4614 = vst.msk [vmem:[#allocation4 + $0x10] sm:$0xff] %vm2944, %v4582
        %4615 = vst.msk [vmem:[#allocation4 + $0x18] sm:$0xff] %vm2944, %v4583
        %4616 = vst.msk [vmem:[#allocation4 + $0x20] sm:$0xff] %vm2944, %v4584
        %4617 = vst.msk [vmem:[#allocation4 + $0x28] sm:$0xff] %vm2944, %v4585
        %4618 = vst.msk [vmem:[#allocation4 + $0x30] sm:$0xff] %vm2944, %v4586
        %4619 = vst.msk [vmem:[#allocation4 + $0x38] sm:$0xff] %vm2944, %v4587
        %4620 = vst.msk [vmem:[#allocation4 + $0x40] sm:$0xff] %vm2944, %v4588
        %4621 = vst.msk [vmem:[#allocation4 + $0x48] sm:$0xff] %vm2944, %v4589
        %4622 = vst.msk [vmem:[#allocation4 + $0x50] sm:$0xff] %vm2944, %v4590
        %4623 = vst.msk [vmem:[#allocation4 + $0x58] sm:$0xff] %vm2944, %v4591
        %4624 = vst.msk [vmem:[#allocation4 + $0x60] sm:$0xff] %vm2944, %v4592
        %4625 = vst.msk [vmem:[#allocation4 + $0x68] sm:$0xff] %vm2944, %v4593
        %4626 = vst.msk [vmem:[#allocation4 + $0x70] sm:$0xff] %vm2944, %v4594
        %4627 = vst.msk [vmem:[#allocation4 + $0x78] sm:$0xff] %vm2944, %v4595
        %4628 = vst.msk [vmem:[#allocation4 + $0x80] sm:$0xff] %vm2944, %v4596
        %4629 = vst.msk [vmem:[#allocation4 + $0x88] sm:$0xff] %vm2944, %v4597
        %4630 = vst.msk [vmem:[#allocation4 + $0x90] sm:$0xff] %vm2944, %v4598
        %4631 = vst.msk [vmem:[#allocation4 + $0x98] sm:$0xff] %vm2944, %v4599
        %4632 = vst.msk [vmem:[#allocation4 + $0xa0] sm:$0xff] %vm2944, %v4600
        %4633 = vst.msk [vmem:[#allocation4 + $0xa8] sm:$0xff] %vm2944, %v4601
        %4634 = vst.msk [vmem:[#allocation4 + $0xb0] sm:$0xff] %vm2944, %v4602
        %4635 = vst.msk [vmem:[#allocation4 + $0xb8] sm:$0xff] %vm2944, %v4603
        %4636 = vst.msk [vmem:[#allocation4 + $0xc0] sm:$0xff] %vm2944, %v4604
        %4637 = vst.msk [vmem:[#allocation4 + $0xc8] sm:$0xff] %vm2944, %v4605
        %4638 = vst.msk [vmem:[#allocation4 + $0xd0] sm:$0xff] %vm2944, %v4606
        %4639 = vst.msk [vmem:[#allocation4 + $0xd8] sm:$0xff] %vm2944, %v4607
        %4640 = vst.msk [vmem:[#allocation4 + $0xe0] sm:$0xff] %vm2944, %v4608
        %4641 = vst.msk [vmem:[#allocation4 + $0xe8] sm:$0xff] %vm2944, %v4609
        %4642 = vst.msk [vmem:[#allocation4 + $0xf0] sm:$0xff] %vm2944, %v4610
        %4643 = vst.msk [vmem:[#allocation4 + $0xf8] sm:$0xff] %vm2944, %v4611
        %4644 = vst.msk [vmem:[#allocation2] sm:$0xff] %vm4034, %v3362
        %4645 = vst.msk [vmem:[#allocation2 + $0x8] sm:$0xff] %vm4034, %v3363
        %4646 = vst.msk [vmem:[#allocation2 + $0x10] sm:$0xff] %vm4034, %v3364
        %4647 = vst.msk [vmem:[#allocation2 + $0x18] sm:$0xff] %vm4034, %v3365
        %4648 = vst.msk [vmem:[#allocation2 + $0x20] sm:$0xff] %vm4034, %v3366
        %4649 = vst.msk [vmem:[#allocation2 + $0x28] sm:$0xff] %vm4034, %v3367
        %4650 = vst.msk [vmem:[#allocation2 + $0x30] sm:$0xff] %vm4034, %v3368
        %4651 = vst.msk [vmem:[#allocation2 + $0x38] sm:$0xff] %vm4034, %v3369
        %4652 = vst.msk [vmem:[#allocation2 + $0x40] sm:$0xff] %vm4034, %v3370
        %4653 = vst.msk [vmem:[#allocation2 + $0x48] sm:$0xff] %vm4034, %v3371
        %4654 = vst.msk [vmem:[#allocation2 + $0x50] sm:$0xff] %vm4034, %v3372
        %4655 = vst.msk [vmem:[#allocation2 + $0x58] sm:$0xff] %vm4034, %v3373
        %4656 = vst.msk [vmem:[#allocation2 + $0x60] sm:$0xff] %vm4034, %v3374
        %4657 = vst.msk [vmem:[#allocation2 + $0x68] sm:$0xff] %vm4034, %v3375
        %4658 = vst.msk [vmem:[#allocation2 + $0x70] sm:$0xff] %vm4034, %v3376
        %4659 = vst.msk [vmem:[#allocation2 + $0x78] sm:$0xff] %vm4034, %v3377
        %4660 = vst.msk [vmem:[#allocation2 + $0x80] sm:$0xff] %vm4034, %v3378
        %4661 = vst.msk [vmem:[#allocation2 + $0x88] sm:$0xff] %vm4034, %v3379
        %4662 = vst.msk [vmem:[#allocation2 + $0x90] sm:$0xff] %vm4034, %v3380
        %4663 = vst.msk [vmem:[#allocation2 + $0x98] sm:$0xff] %vm4034, %v3381
        %4664 = vst.msk [vmem:[#allocation2 + $0xa0] sm:$0xff] %vm4034, %v3382
        %4665 = vst.msk [vmem:[#allocation2 + $0xa8] sm:$0xff] %vm4034, %v3383
        %4666 = vst.msk [vmem:[#allocation2 + $0xb0] sm:$0xff] %vm4034, %v3384
        %4667 = vst.msk [vmem:[#allocation2 + $0xb8] sm:$0xff] %vm4034, %v3385
        %4668 = vst.msk [vmem:[#allocation2 + $0xc0] sm:$0xff] %vm4034, %v3386
        %4669 = vst.msk [vmem:[#allocation2 + $0xc8] sm:$0xff] %vm4034, %v3387
        %4670 = vst.msk [vmem:[#allocation2 + $0xd0] sm:$0xff] %vm4034, %v3388
        %4671 = vst.msk [vmem:[#allocation2 + $0xd8] sm:$0xff] %vm4034, %v3389
        %4672 = vst.msk [vmem:[#allocation2 + $0xe0] sm:$0xff] %vm4034, %v3390
        %4673 = vst.msk [vmem:[#allocation2 + $0xe8] sm:$0xff] %vm4034, %v3391
        %4674 = vst.msk [vmem:[#allocation2 + $0xf0] sm:$0xff] %vm4034, %v3392
        %4675 = vst.msk [vmem:[#allocation2 + $0xf8] sm:$0xff] %vm4034, %v3393
      $region44: #{tpu_custom_call.1} parent=31 // pred_fallthru
        _
      %p4676 = scmp.eq.s32.totalorder %s323, %s322
      // Predicated region
      $region45: #{tpu_custom_call.1} parent=31 // pred_check
        %p4677 = pneg %p4676
      $region46: #{tpu_custom_call.1} parent=31 // pred_check_branch
        %4679 = sbr.rel (%p4677) target = $region48
      $region47: #{tpu_custom_call.1} parent=31 // pred_region
        %v4680 = vld [vmem:[#allocation3] sm:$0xff]
        %v4681 = vld [vmem:[#allocation3 + $0x8] sm:$0xff]
        %v4682 = vld [vmem:[#allocation3 + $0x10] sm:$0xff]
        %v4683 = vld [vmem:[#allocation3 + $0x18] sm:$0xff]
        %v4684 = vld [vmem:[#allocation3 + $0x20] sm:$0xff]
        %v4685 = vld [vmem:[#allocation3 + $0x28] sm:$0xff]
        %v4686 = vld [vmem:[#allocation3 + $0x30] sm:$0xff]
        %v4687 = vld [vmem:[#allocation3 + $0x38] sm:$0xff]
        %v4688 = vld [vmem:[#allocation3 + $0x40] sm:$0xff]
        %v4689 = vld [vmem:[#allocation3 + $0x48] sm:$0xff]
        %v4690 = vld [vmem:[#allocation3 + $0x50] sm:$0xff]
        %v4691 = vld [vmem:[#allocation3 + $0x58] sm:$0xff]
        %v4692 = vld [vmem:[#allocation3 + $0x60] sm:$0xff]
        %v4693 = vld [vmem:[#allocation3 + $0x68] sm:$0xff]
        %v4694 = vld [vmem:[#allocation3 + $0x70] sm:$0xff]
        %v4695 = vld [vmem:[#allocation3 + $0x78] sm:$0xff]
        %v4696 = vld [vmem:[#allocation3 + $0x80] sm:$0xff]
        %v4697 = vld [vmem:[#allocation3 + $0x88] sm:$0xff]
        %v4698 = vld [vmem:[#allocation3 + $0x90] sm:$0xff]
        %v4699 = vld [vmem:[#allocation3 + $0x98] sm:$0xff]
        %v4700 = vld [vmem:[#allocation3 + $0xa0] sm:$0xff]
        %v4701 = vld [vmem:[#allocation3 + $0xa8] sm:$0xff]
        %v4702 = vld [vmem:[#allocation3 + $0xb0] sm:$0xff]
        %v4703 = vld [vmem:[#allocation3 + $0xb8] sm:$0xff]
        %v4704 = vld [vmem:[#allocation3 + $0xc0] sm:$0xff]
        %v4705 = vld [vmem:[#allocation3 + $0xc8] sm:$0xff]
        %v4706 = vld [vmem:[#allocation3 + $0xd0] sm:$0xff]
        %v4707 = vld [vmem:[#allocation3 + $0xd8] sm:$0xff]
        %v4708 = vld [vmem:[#allocation3 + $0xe0] sm:$0xff]
        %v4709 = vld [vmem:[#allocation3 + $0xe8] sm:$0xff]
        %v4710 = vld [vmem:[#allocation3 + $0xf0] sm:$0xff]
        %v4711 = vld [vmem:[#allocation3 + $0xf8] sm:$0xff]
        %v4712 = vrcp.pop %v4680
        %v4713 = vrcp.pop %v4681
        %v4714 = vrcp.pop %v4682
        %v4715 = vrcp.pop %v4683
        %v4716 = vrcp.pop %v4684
        %v4717 = vrcp.pop %v4685
        %v4718 = vrcp.pop %v4686
        %v4719 = vrcp.pop %v4687
        %v4720 = vrcp.pop %v4688
        %v4721 = vrcp.pop %v4689
        %v4722 = vrcp.pop %v4690
        %v4723 = vrcp.pop %v4691
        %v4724 = vrcp.pop %v4692
        %v4725 = vrcp.pop %v4693
        %v4726 = vrcp.pop %v4694
        %v4727 = vrcp.pop %v4695
        %v4728 = vrcp.pop %v4696
        %v4729 = vrcp.pop %v4697
        %v4730 = vrcp.pop %v4698
        %v4731 = vrcp.pop %v4699
        %v4732 = vrcp.pop %v4700
        %v4733 = vrcp.pop %v4701
        %v4734 = vrcp.pop %v4702
        %v4735 = vrcp.pop %v4703
        %v4736 = vrcp.pop %v4704
        %v4737 = vrcp.pop %v4705
        %v4738 = vrcp.pop %v4706
        %v4739 = vrcp.pop %v4707
        %v4740 = vrcp.pop %v4708
        %v4741 = vrcp.pop %v4709
        %v4742 = vrcp.pop %v4710
        %v4743 = vrcp.pop %v4711
        %v4744 = vld [vmem:[#allocation4] sm:$0xff]
        %v4745 = vld [vmem:[#allocation4 + $0x8] sm:$0xff]
        %v4746 = vld [vmem:[#allocation4 + $0x10] sm:$0xff]
        %v4747 = vld [vmem:[#allocation4 + $0x18] sm:$0xff]
        %v4748 = vld [vmem:[#allocation4 + $0x20] sm:$0xff]
        %v4749 = vld [vmem:[#allocation4 + $0x28] sm:$0xff]
        %v4750 = vld [vmem:[#allocation4 + $0x30] sm:$0xff]
        %v4751 = vld [vmem:[#allocation4 + $0x38] sm:$0xff]
        %v4752 = vld [vmem:[#allocation4 + $0x40] sm:$0xff]
        %v4753 = vld [vmem:[#allocation4 + $0x48] sm:$0xff]
        %v4754 = vld [vmem:[#allocation4 + $0x50] sm:$0xff]
        %v4755 = vld [vmem:[#allocation4 + $0x58] sm:$0xff]
        %v4756 = vld [vmem:[#allocation4 + $0x60] sm:$0xff]
        %v4757 = vld [vmem:[#allocation4 + $0x68] sm:$0xff]
        %v4758 = vld [vmem:[#allocation4 + $0x70] sm:$0xff]
        %v4759 = vld [vmem:[#allocation4 + $0x78] sm:$0xff]
        %v4760 = vld [vmem:[#allocation4 + $0x80] sm:$0xff]
        %v4761 = vld [vmem:[#allocation4 + $0x88] sm:$0xff]
        %v4762 = vld [vmem:[#allocation4 + $0x90] sm:$0xff]
        %v4763 = vld [vmem:[#allocation4 + $0x98] sm:$0xff]
        %v4764 = vld [vmem:[#allocation4 + $0xa0] sm:$0xff]
        %v4765 = vld [vmem:[#allocation4 + $0xa8] sm:$0xff]
        %v4766 = vld [vmem:[#allocation4 + $0xb0] sm:$0xff]
        %v4767 = vld [vmem:[#allocation4 + $0xb8] sm:$0xff]
        %v4768 = vld [vmem:[#allocation4 + $0xc0] sm:$0xff]
        %v4769 = vld [vmem:[#allocation4 + $0xc8] sm:$0xff]
        %v4770 = vld [vmem:[#allocation4 + $0xd0] sm:$0xff]
        %v4771 = vld [vmem:[#allocation4 + $0xd8] sm:$0xff]
        %v4772 = vld [vmem:[#allocation4 + $0xe0] sm:$0xff]
        %v4773 = vld [vmem:[#allocation4 + $0xe8] sm:$0xff]
        %v4774 = vld [vmem:[#allocation4 + $0xf0] sm:$0xff]
        %v4775 = vld [vmem:[#allocation4 + $0xf8] sm:$0xff]
        %4777 = vset.pattern.permute.xlu0 0
        %4778 = vperm.xlu0 %4777, %v4712
        %v4779 = vpop.permute.xlu0 %4778
        %4782 = vset.pattern.permute.xlu0 0
        %4783 = vperm.xlu0 %4782, %v4713
        %v4784 = vpop.permute.xlu0 %4783
        %4787 = vset.pattern.permute.xlu0 0
        %4788 = vperm.xlu0 %4787, %v4714
        %v4789 = vpop.permute.xlu0 %4788
        %4792 = vset.pattern.permute.xlu0 0
        %4793 = vperm.xlu0 %4792, %v4715
        %v4794 = vpop.permute.xlu0 %4793
        %4797 = vset.pattern.permute.xlu0 0
        %4798 = vperm.xlu0 %4797, %v4716
        %v4799 = vpop.permute.xlu0 %4798
        %4802 = vset.pattern.permute.xlu0 0
        %4803 = vperm.xlu0 %4802, %v4717
        %v4804 = vpop.permute.xlu0 %4803
        %4807 = vset.pattern.permute.xlu0 0
        %4808 = vperm.xlu0 %4807, %v4718
        %v4809 = vpop.permute.xlu0 %4808
        %4812 = vset.pattern.permute.xlu0 0
        %4813 = vperm.xlu0 %4812, %v4719
        %v4814 = vpop.permute.xlu0 %4813
        %4817 = vset.pattern.permute.xlu0 0
        %4818 = vperm.xlu0 %4817, %v4720
        %v4819 = vpop.permute.xlu0 %4818
        %4822 = vset.pattern.permute.xlu0 0
        %4823 = vperm.xlu0 %4822, %v4721
        %v4824 = vpop.permute.xlu0 %4823
        %4827 = vset.pattern.permute.xlu0 0
        %4828 = vperm.xlu0 %4827, %v4722
        %v4829 = vpop.permute.xlu0 %4828
        %4832 = vset.pattern.permute.xlu0 0
        %4833 = vperm.xlu0 %4832, %v4723
        %v4834 = vpop.permute.xlu0 %4833
        %4837 = vset.pattern.permute.xlu0 0
        %4838 = vperm.xlu0 %4837, %v4724
        %v4839 = vpop.permute.xlu0 %4838
        %4842 = vset.pattern.permute.xlu0 0
        %4843 = vperm.xlu0 %4842, %v4725
        %v4844 = vpop.permute.xlu0 %4843
        %4847 = vset.pattern.permute.xlu0 0
        %4848 = vperm.xlu0 %4847, %v4726
        %v4849 = vpop.permute.xlu0 %4848
        %4852 = vset.pattern.permute.xlu0 0
        %4853 = vperm.xlu0 %4852, %v4727
        %v4854 = vpop.permute.xlu0 %4853
        %4857 = vset.pattern.permute.xlu0 0
        %4858 = vperm.xlu0 %4857, %v4728
        %v4859 = vpop.permute.xlu0 %4858
        %4862 = vset.pattern.permute.xlu0 0
        %4863 = vperm.xlu0 %4862, %v4729
        %v4864 = vpop.permute.xlu0 %4863
        %4867 = vset.pattern.permute.xlu0 0
        %4868 = vperm.xlu0 %4867, %v4730
        %v4869 = vpop.permute.xlu0 %4868
        %4872 = vset.pattern.permute.xlu0 0
        %4873 = vperm.xlu0 %4872, %v4731
        %v4874 = vpop.permute.xlu0 %4873
        %4877 = vset.pattern.permute.xlu0 0
        %4878 = vperm.xlu0 %4877, %v4732
        %v4879 = vpop.permute.xlu0 %4878
        %4882 = vset.pattern.permute.xlu0 0
        %4883 = vperm.xlu0 %4882, %v4733
        %v4884 = vpop.permute.xlu0 %4883
        %4887 = vset.pattern.permute.xlu0 0
        %4888 = vperm.xlu0 %4887, %v4734
        %v4889 = vpop.permute.xlu0 %4888
        %4892 = vset.pattern.permute.xlu0 0
        %4893 = vperm.xlu0 %4892, %v4735
        %v4894 = vpop.permute.xlu0 %4893
        %4897 = vset.pattern.permute.xlu0 0
        %4898 = vperm.xlu0 %4897, %v4736
        %v4899 = vpop.permute.xlu0 %4898
        %4902 = vset.pattern.permute.xlu0 0
        %4903 = vperm.xlu0 %4902, %v4737
        %v4904 = vpop.permute.xlu0 %4903
        %4907 = vset.pattern.permute.xlu0 0
        %4908 = vperm.xlu0 %4907, %v4738
        %v4909 = vpop.permute.xlu0 %4908
        %4912 = vset.pattern.permute.xlu0 0
        %4913 = vperm.xlu0 %4912, %v4739
        %v4914 = vpop.permute.xlu0 %4913
        %4917 = vset.pattern.permute.xlu0 0
        %4918 = vperm.xlu0 %4917, %v4740
        %v4919 = vpop.permute.xlu0 %4918
        %4922 = vset.pattern.permute.xlu0 0
        %4923 = vperm.xlu0 %4922, %v4741
        %v4924 = vpop.permute.xlu0 %4923
        %4927 = vset.pattern.permute.xlu0 0
        %4928 = vperm.xlu0 %4927, %v4742
        %v4929 = vpop.permute.xlu0 %4928
        %4932 = vset.pattern.permute.xlu0 0
        %4933 = vperm.xlu0 %4932, %v4743
        %v4934 = vpop.permute.xlu0 %4933
        %v4936 = vmul.f32 %v4744, %v4779
        %v4937 = vmul.f32 %v4745, %v4784
        %v4938 = vmul.f32 %v4746, %v4789
        %v4939 = vmul.f32 %v4747, %v4794
        %v4940 = vmul.f32 %v4748, %v4799
        %v4941 = vmul.f32 %v4749, %v4804
        %v4942 = vmul.f32 %v4750, %v4809
        %v4943 = vmul.f32 %v4751, %v4814
        %v4944 = vmul.f32 %v4752, %v4819
        %v4945 = vmul.f32 %v4753, %v4824
        %v4946 = vmul.f32 %v4754, %v4829
        %v4947 = vmul.f32 %v4755, %v4834
        %v4948 = vmul.f32 %v4756, %v4839
        %v4949 = vmul.f32 %v4757, %v4844
        %v4950 = vmul.f32 %v4758, %v4849
        %v4951 = vmul.f32 %v4759, %v4854
        %v4952 = vmul.f32 %v4760, %v4859
        %v4953 = vmul.f32 %v4761, %v4864
        %v4954 = vmul.f32 %v4762, %v4869
        %v4955 = vmul.f32 %v4763, %v4874
        %v4956 = vmul.f32 %v4764, %v4879
        %v4957 = vmul.f32 %v4765, %v4884
        %v4958 = vmul.f32 %v4766, %v4889
        %v4959 = vmul.f32 %v4767, %v4894
        %v4960 = vmul.f32 %v4768, %v4899
        %v4961 = vmul.f32 %v4769, %v4904
        %v4962 = vmul.f32 %v4770, %v4909
        %v4963 = vmul.f32 %v4771, %v4914
        %v4964 = vmul.f32 %v4772, %v4919
        %v4965 = vmul.f32 %v4773, %v4924
        %v4966 = vmul.f32 %v4774, %v4929
        %v4967 = vmul.f32 %v4775, %v4934
        %v4968 = vpack.c.bf16 %v4937, %v4936
        %v4969 = vpack.c.bf16 %v4939, %v4938
        %v4970 = vpack.c.bf16 %v4941, %v4940
        %v4971 = vpack.c.bf16 %v4943, %v4942
        %v4972 = vpack.c.bf16 %v4945, %v4944
        %v4973 = vpack.c.bf16 %v4947, %v4946
        %v4974 = vpack.c.bf16 %v4949, %v4948
        %v4975 = vpack.c.bf16 %v4951, %v4950
        %v4976 = vpack.c.bf16 %v4953, %v4952
        %v4977 = vpack.c.bf16 %v4955, %v4954
        %v4978 = vpack.c.bf16 %v4957, %v4956
        %v4979 = vpack.c.bf16 %v4959, %v4958
        %v4980 = vpack.c.bf16 %v4961, %v4960
        %v4981 = vpack.c.bf16 %v4963, %v4962
        %v4982 = vpack.c.bf16 %v4965, %v4964
        %v4983 = vpack.c.bf16 %v4967, %v4966
        %v5000 = vunpack.c.l.b16 %v4968
        %v5001 = vunpack.c.h.b16 %v4968
        %v5002 = vunpack.c.l.b16 %v4969
        %v5003 = vunpack.c.h.b16 %v4969
        %v5004 = vunpack.c.l.b16 %v4970
        %v5005 = vunpack.c.h.b16 %v4970
        %v5006 = vunpack.c.l.b16 %v4971
        %v5007 = vunpack.c.h.b16 %v4971
        %v5008 = vunpack.c.l.b16 %v4972
        %v5009 = vunpack.c.h.b16 %v4972
        %v5010 = vunpack.c.l.b16 %v4973
        %v5011 = vunpack.c.h.b16 %v4973
        %v5012 = vunpack.c.l.b16 %v4974
        %v5013 = vunpack.c.h.b16 %v4974
        %v5014 = vunpack.c.l.b16 %v4975
        %v5015 = vunpack.c.h.b16 %v4975
        %v5016 = vunpack.c.l.b16 %v4976
        %v5017 = vunpack.c.h.b16 %v4976
        %v5018 = vunpack.c.l.b16 %v4977
        %v5019 = vunpack.c.h.b16 %v4977
        %v5020 = vunpack.c.l.b16 %v4978
        %v5021 = vunpack.c.h.b16 %v4978
        %v5022 = vunpack.c.l.b16 %v4979
        %v5023 = vunpack.c.h.b16 %v4979
        %v5024 = vunpack.c.l.b16 %v4980
        %v5025 = vunpack.c.h.b16 %v4980
        %v5026 = vunpack.c.l.b16 %v4981
        %v5027 = vunpack.c.h.b16 %v4981
        %v5028 = vunpack.c.l.b16 %v4982
        %v5029 = vunpack.c.h.b16 %v4982
        %v5030 = vunpack.c.l.b16 %v4983
        %v5031 = vunpack.c.h.b16 %v4983
        %v5032 = vpack.c.b16 %v5000, %v5000
        %v5033 = vpack.c.b16 %v5001, %v5001
        %v5034 = vpack.c.b16 %v5002, %v5002
        %v5035 = vpack.c.b16 %v5003, %v5003
        %v5036 = vpack.c.b16 %v5004, %v5004
        %v5037 = vpack.c.b16 %v5005, %v5005
        %v5038 = vpack.c.b16 %v5006, %v5006
        %v5039 = vpack.c.b16 %v5007, %v5007
        %v5040 = vpack.c.b16 %v5008, %v5008
        %v5041 = vpack.c.b16 %v5009, %v5009
        %v5042 = vpack.c.b16 %v5010, %v5010
        %v5043 = vpack.c.b16 %v5011, %v5011
        %v5044 = vpack.c.b16 %v5012, %v5012
        %v5045 = vpack.c.b16 %v5013, %v5013
        %v5046 = vpack.c.b16 %v5014, %v5014
        %v5047 = vpack.c.b16 %v5015, %v5015
        %v5048 = vpack.c.b16 %v5016, %v5016
        %v5049 = vpack.c.b16 %v5017, %v5017
        %v5050 = vpack.c.b16 %v5018, %v5018
        %v5051 = vpack.c.b16 %v5019, %v5019
        %v5052 = vpack.c.b16 %v5020, %v5020
        %v5053 = vpack.c.b16 %v5021, %v5021
        %v5054 = vpack.c.b16 %v5022, %v5022
        %v5055 = vpack.c.b16 %v5023, %v5023
        %v5056 = vpack.c.b16 %v5024, %v5024
        %v5057 = vpack.c.b16 %v5025, %v5025
        %v5058 = vpack.c.b16 %v5026, %v5026
        %v5059 = vpack.c.b16 %v5027, %v5027
        %v5060 = vpack.c.b16 %v5028, %v5028
        %v5061 = vpack.c.b16 %v5029, %v5029
        %v5062 = vpack.c.b16 %v5030, %v5030
        %v5063 = vpack.c.b16 %v5031, %v5031
        %vm5096 = vcmask 519168
        %5097 = vst.msk [vmem:[%s317] sm:$0xf] %vm5096, %v5032
        %5098 = vst.msk [vmem:[%s317 + $0x4] sm:$0xf] %vm5096, %v5033
        %5099 = vst.msk [vmem:[%s317 + $0x8] sm:$0xf] %vm5096, %v5034
        %5100 = vst.msk [vmem:[%s317 + $0xc] sm:$0xf] %vm5096, %v5035
        %5101 = vst.msk [vmem:[%s317 + $0x10] sm:$0xf] %vm5096, %v5036
        %5102 = vst.msk [vmem:[%s317 + $0x14] sm:$0xf] %vm5096, %v5037
        %5103 = vst.msk [vmem:[%s317 + $0x18] sm:$0xf] %vm5096, %v5038
        %5104 = vst.msk [vmem:[%s317 + $0x1c] sm:$0xf] %vm5096, %v5039
        %5105 = vst.msk [vmem:[%s317 + $0x20] sm:$0xf] %vm5096, %v5040
        %5106 = vst.msk [vmem:[%s317 + $0x24] sm:$0xf] %vm5096, %v5041
        %5107 = vst.msk [vmem:[%s317 + $0x28] sm:$0xf] %vm5096, %v5042
        %5108 = vst.msk [vmem:[%s317 + $0x2c] sm:$0xf] %vm5096, %v5043
        %5109 = vst.msk [vmem:[%s317 + $0x30] sm:$0xf] %vm5096, %v5044
        %5110 = vst.msk [vmem:[%s317 + $0x34] sm:$0xf] %vm5096, %v5045
        %5111 = vst.msk [vmem:[%s317 + $0x38] sm:$0xf] %vm5096, %v5046
        %5112 = vst.msk [vmem:[%s317 + $0x3c] sm:$0xf] %vm5096, %v5047
        %5113 = vst.msk [vmem:[%s317 + $0x40] sm:$0xf] %vm5096, %v5048
        %5114 = vst.msk [vmem:[%s317 + $0x44] sm:$0xf] %vm5096, %v5049
        %5115 = vst.msk [vmem:[%s317 + $0x48] sm:$0xf] %vm5096, %v5050
        %5116 = vst.msk [vmem:[%s317 + $0x4c] sm:$0xf] %vm5096, %v5051
        %5117 = vst.msk [vmem:[%s317 + $0x50] sm:$0xf] %vm5096, %v5052
        %5118 = vst.msk [vmem:[%s317 + $0x54] sm:$0xf] %vm5096, %v5053
        %5119 = vst.msk [vmem:[%s317 + $0x58] sm:$0xf] %vm5096, %v5054
        %5120 = vst.msk [vmem:[%s317 + $0x5c] sm:$0xf] %vm5096, %v5055
        %5121 = vst.msk [vmem:[%s317 + $0x60] sm:$0xf] %vm5096, %v5056
        %5122 = vst.msk [vmem:[%s317 + $0x64] sm:$0xf] %vm5096, %v5057
        %5123 = vst.msk [vmem:[%s317 + $0x68] sm:$0xf] %vm5096, %v5058
        %5124 = vst.msk [vmem:[%s317 + $0x6c] sm:$0xf] %vm5096, %v5059
        %5125 = vst.msk [vmem:[%s317 + $0x70] sm:$0xf] %vm5096, %v5060
        %5126 = vst.msk [vmem:[%s317 + $0x74] sm:$0xf] %vm5096, %v5061
        %5127 = vst.msk [vmem:[%s317 + $0x78] sm:$0xf] %vm5096, %v5062
        %5128 = vst.msk [vmem:[%s317 + $0x7c] sm:$0xf] %vm5096, %v5063
      $region48: #{tpu_custom_call.1} parent=31 // pred_fallthru
        _
      %s5129 = sld [smem:[#allocation6 + %s31]]
      %s5130 = smul.u32 32, %s5129
      %p5131 = scmp.lt.s32.totalorder %s30, 7
      %s5132 = scalar_select %p5131, %s30, 7
      %p5133 = scmp.lt.s32.totalorder %s5130, 63
      %s5134 = scalar_select %p5133, %s5130, 63
      %s5135 = smul.addr %s5132, 64
      %s5136 = sadd.s32 %s5134, %s5135
      %s5137 = smul.addr %s5136, 4
      %s5138 = scalar_lea.vmem %s5, %s5137
      // Predicated region
      $region49: #{tpu_custom_call.1} parent=31 // pred_check
        %p5139 = pneg %p150
      $region50: #{tpu_custom_call.1} parent=31 // pred_check_branch
        %5141 = sbr.rel (%p5139) target = $region52
      $region51: #{tpu_custom_call.1} parent=31 // pred_region
        %s5142 = sld [smem:[#allocation6 + %s31]]
        %s5143 = smul.u32 32, %s5142
      $region52: #{tpu_custom_call.1} parent=31 // pred_fallthru
        _
    $region32: #{tpu_custom_call.1} parent=5 // pred_fallthru
      _
    %p5144 = scmp.le.s32.totalorder 2, %s21
    // Predicated region
    $region53: #{tpu_custom_call.1} parent=5 // pred_check
      %p5145 = pneg %p5144
    $region54: #{tpu_custom_call.1} parent=5 // pred_check_branch
      %5147 = sbr.rel (%p5145) target = $region56
    $region55: #{tpu_custom_call.1} parent=5 // pred_region
      %s5148 = ssub.s32 %s21, 2
      // Predicated region
      $region57: #{tpu_custom_call.1} parent=55 // pred_check
        %p5149 = pneg %p156
      $region58: #{tpu_custom_call.1} parent=55 // pred_check_branch
        %5151 = sbr.rel (%p5149) target = $region60
      $region59: #{tpu_custom_call.1} parent=55 // pred_region
        %s5152 = sld [smem:[#allocation6 + %s33]]
        %s5153 = smul.u32 32, %s5152
        %p5154 = scmp.lt.s32.totalorder %s32, 7
        %s5155 = scalar_select %p5154, %s32, 7
        %p5156 = scmp.lt.s32.totalorder %s5153, 63
        %s5157 = scalar_select %p5156, %s5153, 63
        %s5158 = smul.addr %s5155, 64
        %s5159 = sadd.s32 %s5157, %s5158
        %s5160 = smul.addr %s5159, 4
        %s5161 = scalar_lea.vmem %s5, %s5160
      $region60: #{tpu_custom_call.1} parent=55 // pred_fallthru
        _
    $region56: #{tpu_custom_call.1} parent=5 // pred_fallthru
      _
  $region6: #{tpu_custom_call.1} parent=0 // loop_footer
    %s25 = sadd.s32 1, %s21
  $region7: #{tpu_custom_call.1} parent=0 // loop_footer_branch
    %20 = sbr.rel target = $region3
  $region8: #{tpu_custom_call.1} parent=0 // loop_exit
    _

</llo_original>
